<compile_context>
chip_gen: v7x
topology: tpu7x:2x2x1
jax: 0.10.0
libtpu: 0.0.40
codegen_flags: <defaults>
</compile_context>

<pallas_src>
import numpy as np
import jax
import jax.numpy as jnp
from jax.experimental import pallas as pl
from jax.experimental.pallas import tpu as pltpu

B = 8      # images per grid step (batch tile)
C1P = 16   # lane slots per output pixel for conv1 channels (10 valid)
C2P = 32   # lane slots per output pixel for conv2 channels (20 valid)
M2 = B * 12 - 4   # conv2 image-flat output rows per step
MF = B * 4 - 3    # fc1 banded output rows per step (valid rows at 4*b)


# ------------------------------ fused kernel ------------------------------- #

def _net_kernel(xs_ref, k1s_ref, b1_ref, s1_ref, c1_ref,
                k2_ref, b2_ref, s2_ref, c2_ref,
                wf1_ref, bf1_ref, sout_ref, wf2_ref, bf2_ref, o_ref):
    f32 = jnp.float32
    bf16 = jnp.bfloat16

    # conv1 (5x5, 1->10): ONE MXU matmul over the host-stacked 5-tap operand.
    # rows = b*28 + ho (ho<24 valid), lanes = wo*C1P + c.
    y1 = jnp.dot(xs_ref[...], k1s_ref[...], preferred_element_type=f32)        # [B*28, 384]
    y1 = jnp.maximum(y1 + b1_ref[...], 0.0)      # bias + ReLU (ReLU commutes with max-pool)

    # max_pool2d(2) -- rows: shifted-slice pair max + one block-diag one-hot compaction matmul.
    rm1 = jnp.maximum(y1[:-1, :], y1[1:, :]).astype(bf16)                      # [B*28-1, 384]
    r1 = jnp.dot(s1_ref[...], rm1, preferred_element_type=f32).astype(bf16)    # [B*12, 384]
    # lanes (width pairs): exact even/odd one-hot gathers + max.
    h1 = jnp.maximum(jnp.dot(r1, c1_ref[0], preferred_element_type=f32),
                     jnp.dot(r1, c1_ref[1], preferred_element_type=f32))       # [B*12, 192]
    # h1 rows = b*12 + he, lanes = we*C1P + c.

    # conv2 (5x5, 10->20): 5 banded matmuls over the image-flat rows (junk rows discarded later).
    y2 = jnp.dot(h1[0:M2, :].astype(bf16), k2_ref[0], preferred_element_type=f32)
    for di in range(1, 5):
        y2 = y2 + jnp.dot(h1[di:di + M2, :].astype(bf16), k2_ref[di],
                          preferred_element_type=f32)                          # [B*12-4, 256]
    y2 = jnp.maximum(y2 + b2_ref[...], 0.0)
    # TODO(synk): Dropout2d is a stochastic training-mode op; eval-mode (identity) semantics here.

    # max_pool2d(2) on conv2 output.
    rm2 = jnp.maximum(y2[:-1, :], y2[1:, :]).astype(bf16)                      # [B*12-5, 256]
    r2 = jnp.dot(s2_ref[...], rm2, preferred_element_type=f32).astype(bf16)    # [B*4, 256]
    h2 = jnp.maximum(jnp.dot(r2, c2_ref[0], preferred_element_type=f32),
                     jnp.dot(r2, c2_ref[1], preferred_element_type=f32))       # [B*4, 128]
    # h2 rows = b*4 + h, lanes = w*C2P + c2; PyTorch's x.view(-1, 320) order folded into wf1.

    # fc1 (320 -> 50): banded contraction over the 4 pooled rows per image; valid rows at 4*b.
    a1 = jnp.dot(h2[0:MF, :].astype(bf16), wf1_ref[0], preferred_element_type=f32)
    for h in range(1, 4):
        a1 = a1 + jnp.dot(h2[h:h + MF, :].astype(bf16), wf1_ref[h],
                          preferred_element_type=f32)                          # [B*4-3, 64]
    a1 = jnp.maximum(a1 + bf1_ref[...], 0.0)
    # TODO(synk): F.dropout is a stochastic training-mode op; eval-mode (identity) semantics here.

    # Compact to one row per image, then fc2 (50->10) + ReLU (as in the reference) + log_softmax.
    a1c = jnp.dot(sout_ref[...], a1.astype(bf16), preferred_element_type=f32)  # [B, 64]
    z = jnp.dot(a1c.astype(bf16), wf2_ref[...], preferred_element_type=f32) + bf2_ref[...]
    z = jnp.maximum(z, 0.0)                                                    # [B, 128]
    lane = jax.lax.broadcasted_iota(jnp.int32, (B, 128), 1)
    zm = jnp.where(lane < 10, z, -1e30)
    m = jnp.max(zm, axis=-1, keepdims=True)
    lse = jnp.log(jnp.sum(jnp.exp(zm - m), axis=-1, keepdims=True))
    o_ref[...] = zm - m - lse           # lane-dense (B, 128) store; sliced to 10 logits outside


# ------------------- one-time host-side parameter re-layout ----------------- #

def prepare_constants(params):
    """Re-layout PyTorch-style params into padded, lane-dense bf16/f32 operands for the kernel."""
    w1, b1, w2, b2, wf1, bf1, wf2, bf2 = [np.asarray(p, dtype=np.float32) for p in params]

    # conv1 band matrix with all 5 height taps K-stacked: k1s[di*28 + j, wo*C1P + c] = w1[c,0,di,j-wo]
    k1s = np.zeros((5 * 28, 24 * C1P), np.float32)
    for di in range(5):
        for wo in range(24):
            for dj in range(5):
                k1s[di * 28 + wo + dj, wo * C1P:wo * C1P + 10] = w1[:, 0, di, dj]
    b1l = np.zeros((1, 24 * C1P), np.float32)
    for wo in range(24):
        b1l[0, wo * C1P:wo * C1P + 10] = b1

    # pool1 row compaction (block-diagonal over the B images of a tile): picks row b*28 + 2*he
    s1 = np.zeros((B * 12, B * 28 - 1), np.float32)
    for b in range(B):
        for he in range(12):
            s1[b * 12 + he, b * 28 + 2 * he] = 1.0
    # pool1 lane gathers (even / odd width of each pair)
    col1 = np.zeros((2, 24 * C1P, 12 * C1P), np.float32)
    for we in range(12):
        for c in range(C1P):
            col1[0, (2 * we) * C1P + c, we * C1P + c] = 1.0
            col1[1, (2 * we + 1) * C1P + c, we * C1P + c] = 1.0

    # conv2 band matrices: k2[di][we*C1P + c1, wo2*C2P + c2] = w2[c2, c1, di, we - wo2]
    k2 = np.zeros((5, 12 * C1P, 8 * C2P), np.float32)
    for di in range(5):
        for wo2 in range(8):
            for dj in range(5):
                we = wo2 + dj
                for c1 in range(10):
                    k2[di, we * C1P + c1, wo2 * C2P:wo2 * C2P + 20] = w2[:, c1, di, dj]
    b2l = np.zeros((1, 8 * C2P), np.float32)
    for wo2 in range(8):
        b2l[0, wo2 * C2P:wo2 * C2P + 20] = b2

    # pool2 row compaction: picks row b*12 + 2*he
    s2 = np.zeros((B * 4, B * 12 - 5), np.float32)
    for b in range(B):
        for he in range(4):
            s2[b * 4 + he, b * 12 + 2 * he] = 1.0
    col2 = np.zeros((2, 8 * C2P, 4 * C2P), np.float32)
    for w in range(4):
        for c in range(C2P):
            col2[0, (2 * w) * C2P + c, w * C2P + c] = 1.0
            col2[1, (2 * w + 1) * C2P + c, w * C2P + c] = 1.0

    # fc1 with PyTorch NCHW flatten order (c2*16 + h*4 + w) folded in:
    # wf1h[h][w*C2P + c2, j] = wf1[j, c2*16 + h*4 + w]
    wf1h = np.zeros((4, 4 * C2P, 64), np.float32)
    for h in range(4):
        for w in range(4):
            for c2 in range(20):
                wf1h[h, w * C2P + c2, :50] = wf1[:, c2 * 16 + h * 4 + w]
    bf1l = np.zeros((1, 64), np.float32)
    bf1l[0, :50] = bf1

    # one-row-per-image compaction after the banded fc1 (valid rows sit at 4*b)
    sout = np.zeros((B, B * 4 - 3), np.float32)
    for b in range(B):
        sout[b, 4 * b] = 1.0

    wf2p = np.zeros((64, 128), np.float32)
    wf2p[:50, :10] = wf2.T
    bf2l = np.zeros((1, 128), np.float32)
    bf2l[0, :10] = bf2

    bf = jnp.bfloat16
    return (
        jnp.asarray(k1s, bf), jnp.asarray(b1l, jnp.float32),
        jnp.asarray(s1, bf), jnp.asarray(col1, bf),
        jnp.asarray(k2, bf), jnp.asarray(b2l, jnp.float32),
        jnp.asarray(s2, bf), jnp.asarray(col2, bf),
        jnp.asarray(wf1h, bf), jnp.asarray(bf1l, jnp.float32),
        jnp.asarray(sout, bf),
        jnp.asarray(wf2p, bf), jnp.asarray(bf2l, jnp.float32),
    )


# ------------------------------ forward wrapper ----------------------------- #

@jax.jit
def net_forward(x_nchw, consts):
    N = x_nchw.shape[0]
    npad = ((N + B - 1) // B) * B
    x2 = x_nchw.reshape(N, 28, 28).astype(jnp.float32)
    if npad != N:
        x2 = jnp.pad(x2, ((0, npad - N), (0, 0), (0, 0)))
    # Host-side (pure layout plumbing): flatten images along rows and K-stack the 5 conv1 height
    # taps on lanes, so the kernel's conv1 is one aligned bf16 matmul.  xs[r, di*28+j] = x_flat[r+di, j]
    xf = jnp.pad(x2.reshape(npad * 28, 28), ((0, 4), (0, 0)))
    rows = npad * 28
    xs = jnp.concatenate([xf[d:d + rows, :] for d in range(5)], axis=1).astype(jnp.bfloat16)

    out = pl.pallas_call(
        _net_kernel,
        out_shape=jax.ShapeDtypeStruct((npad, 128), jnp.float32),
        grid=(npad // B,),
        in_specs=[
            pl.BlockSpec((B * 28, 5 * 28), lambda b: (b, 0)),             # stacked conv1 operand
            pl.BlockSpec((5 * 28, 24 * C1P), lambda b: (0, 0)),           # conv1 band matrix (K-stacked)
            pl.BlockSpec((1, 24 * C1P), lambda b: (0, 0)),                # conv1 bias (lane layout)
            pl.BlockSpec((B * 12, B * 28 - 1), lambda b: (0, 0)),         # pool1 row compaction
            pl.BlockSpec((2, 24 * C1P, 12 * C1P), lambda b: (0, 0, 0)),   # pool1 lane gathers
            pl.BlockSpec((5, 12 * C1P, 8 * C2P), lambda b: (0, 0, 0)),    # conv2 band matrices
            pl.BlockSpec((1, 8 * C2P), lambda b: (0, 0)),                 # conv2 bias (lane layout)
            pl.BlockSpec((B * 4, B * 12 - 5), lambda b: (0, 0)),          # pool2 row compaction
            pl.BlockSpec((2, 8 * C2P, 4 * C2P), lambda b: (0, 0, 0)),     # pool2 lane gathers
            pl.BlockSpec((4, 4 * C2P, 64), lambda b: (0, 0, 0)),          # fc1 weights (re-laid-out)
            pl.BlockSpec((1, 64), lambda b: (0, 0)),                      # fc1 bias
            pl.BlockSpec((B, B * 4 - 3), lambda b: (0, 0)),               # per-image row compaction
            pl.BlockSpec((64, 128), lambda b: (0, 0)),                    # fc2 weights (padded)
            pl.BlockSpec((1, 128), lambda b: (0, 0)),                     # fc2 bias
        ],
        out_specs=pl.BlockSpec((B, 128), lambda b: (b, 0)),
        compiler_params=pltpu.CompilerParams(
            dimension_semantics=("parallel",),
            vmem_limit_bytes=32 * 1024 * 1024,
        ),
    )(xs, *consts)
    return out[:N, :10]


# ------------------------- pure-JAX reference (check) ----------------------- #

def net_reference(x_nchw, params):
    """Pure-JAX reference of the PyTorch forward (eval-mode dropout = identity)."""
    w1, b1, w2, b2, wf1, bf1, wf2, bf2 = params
    dn = ("NCHW", "OIHW", "NCHW")
    neg_inf = jnp.array(-jnp.inf, dtype=jnp.float32)
    y = jax.lax.conv_general_dilated(x_nchw, w1, (1, 1), "VALID", dimension_numbers=dn)
    y = y + b1[None, :, None, None]
    y = jax.lax.reduce_window(y, neg_inf, jax.lax.max, (1, 1, 2, 2), (1, 1, 2, 2), "VALID")
    y = jnp.maximum(y, 0.0)
    y = jax.lax.conv_general_dilated(y, w2, (1, 1), "VALID", dimension_numbers=dn)
    y = y + b2[None, :, None, None]
    y = jax.lax.reduce_window(y, neg_inf, jax.lax.max, (1, 1, 2, 2), (1, 1, 2, 2), "VALID")
    y = jnp.maximum(y, 0.0)
    y = y.reshape(y.shape[0], 320)
    y = jnp.maximum(y @ wf1.T + bf1, 0.0)
    y = jnp.maximum(y @ wf2.T + bf2, 0.0)           # reference applies ReLU to fc2 output
    return jax.nn.log_softmax(y, axis=-1)


def init_params(key):
    # Deterministic PyTorch-style uniform(-1/sqrt(fan_in), 1/sqrt(fan_in)) init.
    ks = jax.random.split(key, 8)

    def u(k, shape, fan_in):
        bound = 1.0 / (fan_in ** 0.5)
        return jax.random.uniform(k, shape, jnp.float32, -bound, bound)

    w1 = u(ks[0], (10, 1, 5, 5), 25)      # conv1.weight
    b1 = u(ks[1], (10,), 25)              # conv1.bias
    w2 = u(ks[2], (20, 10, 5, 5), 250)    # conv2.weight
    b2 = u(ks[3], (20,), 250)             # conv2.bias
    wf1 = u(ks[4], (50, 320), 320)        # fc1.weight
    bf1 = u(ks[5], (50,), 320)            # fc1.bias
    wf2 = u(ks[6], (10, 50), 50)          # fc2.weight
    bf2 = u(ks[7], (10,), 50)             # fc2.bias
    return (w1, b1, w2, b2, wf1, bf1, wf2, bf2)


if __name__ == "__main__":
    key = jax.random.PRNGKey(0)
    kx, kp = jax.random.split(key)
    # 28x28 spatial size is dictated by the 320-feature flatten in the reference module.
    N = 16                                 # 2 grid steps of B=8 -> keeps both v7x TCs busy
    x = jax.random.normal(kx, (N, 1, 28, 28), jnp.float32)
    params = init_params(kp)
    consts = prepare_constants(params)

    out = jax.block_until_ready(net_forward(x, consts))
    assert out.shape == (N, 10)
    assert bool(jnp.all(jnp.isfinite(out)))

    # Sanity check vs. the pure-JAX f32 reference.  MXU operands are bf16, so expected max
    # log-prob deviation is ~1e-2; 1e-1 is a comfortable bound.
    ref = net_reference(x, params)
    err = float(jnp.max(jnp.abs(out - ref)))
    assert err < 1e-1, err

    print("KERNEL_OK")
</pallas_src>

<mosaic_0001>
module attributes {stable_mosaic.version = 11 : i64} {
  func.func @_net_kernel(%arg0: i32, %arg1: memref<224x140xbf16, #tpu.memory_space<vmem>>, %arg2: memref<140x384xbf16, #tpu.memory_space<vmem>>, %arg3: memref<1x384xf32, #tpu.memory_space<vmem>>, %arg4: memref<96x223xbf16, #tpu.memory_space<vmem>>, %arg5: memref<2x384x192xbf16, #tpu.memory_space<vmem>>, %arg6: memref<5x192x256xbf16, #tpu.memory_space<vmem>>, %arg7: memref<1x256xf32, #tpu.memory_space<vmem>>, %arg8: memref<32x91xbf16, #tpu.memory_space<vmem>>, %arg9: memref<2x256x128xbf16, #tpu.memory_space<vmem>>, %arg10: memref<4x128x64xbf16, #tpu.memory_space<vmem>>, %arg11: memref<1x64xf32, #tpu.memory_space<vmem>>, %arg12: memref<8x29xbf16, #tpu.memory_space<vmem>>, %arg13: memref<64x128xbf16, #tpu.memory_space<vmem>>, %arg14: memref<1x128xf32, #tpu.memory_space<vmem>>, %arg15: memref<8x128xf32, #tpu.memory_space<vmem>>) attributes {dimension_semantics = [#tpu.dimension_semantics<parallel>], iteration_bounds = array<i64: 2>, scalar_prefetch = 0 : i64, scratch_operands = 0 : i64, tpu.core_type = #tpu.core_type<tc>, window_params = [{transform_indices = @transform_0, window_bounds = array<i64: 224, 140>}, {pipeline_mode = #tpu.pipeline_mode<synchronous>, transform_indices = @transform_1, window_bounds = array<i64: 140, 384>}, {pipeline_mode = #tpu.pipeline_mode<synchronous>, transform_indices = @transform_2, window_bounds = array<i64: 1, 384>}, {pipeline_mode = #tpu.pipeline_mode<synchronous>, transform_indices = @transform_3, window_bounds = array<i64: 96, 223>}, {pipeline_mode = #tpu.pipeline_mode<synchronous>, transform_indices = @transform_4, window_bounds = array<i64: 2, 384, 192>}, {pipeline_mode = #tpu.pipeline_mode<synchronous>, transform_indices = @transform_5, window_bounds = array<i64: 5, 192, 256>}, {pipeline_mode = #tpu.pipeline_mode<synchronous>, transform_indices = @transform_6, window_bounds = array<i64: 1, 256>}, {pipeline_mode = #tpu.pipeline_mode<synchronous>, transform_indices = @transform_7, window_bounds = array<i64: 32, 91>}, {pipeline_mode = #tpu.pipeline_mode<synchronous>, transform_indices = @transform_8, window_bounds = array<i64: 2, 256, 128>}, {pipeline_mode = #tpu.pipeline_mode<synchronous>, transform_indices = @transform_9, window_bounds = array<i64: 4, 128, 64>}, {pipeline_mode = #tpu.pipeline_mode<synchronous>, transform_indices = @transform_10, window_bounds = array<i64: 1, 64>}, {pipeline_mode = #tpu.pipeline_mode<synchronous>, transform_indices = @transform_11, window_bounds = array<i64: 8, 29>}, {pipeline_mode = #tpu.pipeline_mode<synchronous>, transform_indices = @transform_12, window_bounds = array<i64: 64, 128>}, {pipeline_mode = #tpu.pipeline_mode<synchronous>, transform_indices = @transform_13, window_bounds = array<i64: 1, 128>}, {transform_indices = @transform_14, window_bounds = array<i64: 8, 128>}]} {
    %c0 = arith.constant 0 : index
    %c0_0 = arith.constant 0 : index
    %0 = vector.load %arg1[%c0, %c0_0] : memref<224x140xbf16, #tpu.memory_space<vmem>>, vector<224x140xbf16>
    %c0_1 = arith.constant 0 : index
    %c0_2 = arith.constant 0 : index
    %1 = vector.load %arg2[%c0_1, %c0_2] : memref<140x384xbf16, #tpu.memory_space<vmem>>, vector<140x384xbf16>
    %cst = arith.constant dense<0.000000e+00> : vector<224x384xf32>
    %2 = tpu.matmul %0, %1, %cst {dimension_numbers = #tpu.dot_dimension_numbers<[1], [0], [0], [1], [0, 0, 1, 1], [], []>} : vector<224x140xbf16>, vector<140x384xbf16>, vector<224x384xf32> -> vector<224x384xf32>
    %c0_3 = arith.constant 0 : index
    %c0_4 = arith.constant 0 : index
    %3 = vector.load %arg3[%c0_3, %c0_4] : memref<1x384xf32, #tpu.memory_space<vmem>>, vector<1x384xf32>
    %4 = vector.broadcast %3 : vector<1x384xf32> to vector<224x384xf32>
    %5 = arith.addf %2, %4 : vector<224x384xf32>
    %cst_5 = arith.constant 0.000000e+00 : f32
    %6 = vector.broadcast %cst_5 : f32 to vector<224x384xf32>
    %7 = arith.maximumf %5, %6 : vector<224x384xf32>
    %8 = vector.extract_strided_slice %7 {offsets = [0, 0], sizes = [223, 384], strides = [1, 1]} : vector<224x384xf32> to vector<223x384xf32>
    %9 = vector.extract_strided_slice %7 {offsets = [1, 0], sizes = [223, 384], strides = [1, 1]} : vector<224x384xf32> to vector<223x384xf32>
    %10 = arith.maximumf %8, %9 : vector<223x384xf32>
    %11 = arith.truncf %10 : vector<223x384xf32> to vector<223x384xbf16>
    %c0_6 = arith.constant 0 : index
    %c0_7 = arith.constant 0 : index
    %12 = vector.load %arg4[%c0_6, %c0_7] : memref<96x223xbf16, #tpu.memory_space<vmem>>, vector<96x223xbf16>
    %cst_8 = arith.constant dense<0.000000e+00> : vector<96x384xf32>
    %13 = tpu.matmul %12, %11, %cst_8 {dimension_numbers = #tpu.dot_dimension_numbers<[1], [0], [0], [1], [0, 0, 1, 1], [], []>} : vector<96x223xbf16>, vector<223x384xbf16>, vector<96x384xf32> -> vector<96x384xf32>
    %14 = arith.truncf %13 : vector<96x384xf32> to vector<96x384xbf16>
    %c0_9 = arith.constant 0 : index
    %c0_10 = arith.constant 0 : index
    %c0_11 = arith.constant 0 : index
    %15 = vector.load %arg5[%c0_9, %c0_10, %c0_11] : memref<2x384x192xbf16, #tpu.memory_space<vmem>>, vector<1x384x192xbf16>
    %16 = vector.shape_cast %15 : vector<1x384x192xbf16> to vector<384x192xbf16>
    %cst_12 = arith.constant dense<0.000000e+00> : vector<96x192xf32>
    %17 = tpu.matmul %14, %16, %cst_12 {dimension_numbers = #tpu.dot_dimension_numbers<[1], [0], [0], [1], [0, 0, 1, 1], [], []>} : vector<96x384xbf16>, vector<384x192xbf16>, vector<96x192xf32> -> vector<96x192xf32>
    %c1 = arith.constant 1 : index
    %c0_13 = arith.constant 0 : index
    %c0_14 = arith.constant 0 : index
    %18 = vector.load %arg5[%c1, %c0_13, %c0_14] : memref<2x384x192xbf16, #tpu.memory_space<vmem>>, vector<1x384x192xbf16>
    %19 = vector.shape_cast %18 : vector<1x384x192xbf16> to vector<384x192xbf16>
    %cst_15 = arith.constant dense<0.000000e+00> : vector<96x192xf32>
    %20 = tpu.matmul %14, %19, %cst_15 {dimension_numbers = #tpu.dot_dimension_numbers<[1], [0], [0], [1], [0, 0, 1, 1], [], []>} : vector<96x384xbf16>, vector<384x192xbf16>, vector<96x192xf32> -> vector<96x192xf32>
    %21 = arith.maximumf %17, %20 : vector<96x192xf32>
    %22 = vector.extract_strided_slice %21 {offsets = [0, 0], sizes = [92, 192], strides = [1, 1]} : vector<96x192xf32> to vector<92x192xf32>
    %23 = arith.truncf %22 : vector<92x192xf32> to vector<92x192xbf16>
    %c0_16 = arith.constant 0 : index
    %c0_17 = arith.constant 0 : index
    %c0_18 = arith.constant 0 : index
    %24 = vector.load %arg6[%c0_16, %c0_17, %c0_18] : memref<5x192x256xbf16, #tpu.memory_space<vmem>>, vector<1x192x256xbf16>
    %25 = vector.shape_cast %24 : vector<1x192x256xbf16> to vector<192x256xbf16>
    %cst_19 = arith.constant dense<0.000000e+00> : vector<92x256xf32>
    %26 = tpu.matmul %23, %25, %cst_19 {dimension_numbers = #tpu.dot_dimension_numbers<[1], [0], [0], [1], [0, 0, 1, 1], [], []>} : vector<92x192xbf16>, vector<192x256xbf16>, vector<92x256xf32> -> vector<92x256xf32>
    %27 = vector.extract_strided_slice %21 {offsets = [1, 0], sizes = [92, 192], strides = [1, 1]} : vector<96x192xf32> to vector<92x192xf32>
    %28 = arith.truncf %27 : vector<92x192xf32> to vector<92x192xbf16>
    %c1_20 = arith.constant 1 : index
    %c0_21 = arith.constant 0 : index
    %c0_22 = arith.constant 0 : index
    %29 = vector.load %arg6[%c1_20, %c0_21, %c0_22] : memref<5x192x256xbf16, #tpu.memory_space<vmem>>, vector<1x192x256xbf16>
    %30 = vector.shape_cast %29 : vector<1x192x256xbf16> to vector<192x256xbf16>
    %cst_23 = arith.constant dense<0.000000e+00> : vector<92x256xf32>
    %31 = tpu.matmul %28, %30, %cst_23 {dimension_numbers = #tpu.dot_dimension_numbers<[1], [0], [0], [1], [0, 0, 1, 1], [], []>} : vector<92x192xbf16>, vector<192x256xbf16>, vector<92x256xf32> -> vector<92x256xf32>
    %32 = arith.addf %26, %31 : vector<92x256xf32>
    %33 = vector.extract_strided_slice %21 {offsets = [2, 0], sizes = [92, 192], strides = [1, 1]} : vector<96x192xf32> to vector<92x192xf32>
    %34 = arith.truncf %33 : vector<92x192xf32> to vector<92x192xbf16>
    %c2 = arith.constant 2 : index
    %c0_24 = arith.constant 0 : index
    %c0_25 = arith.constant 0 : index
    %35 = vector.load %arg6[%c2, %c0_24, %c0_25] : memref<5x192x256xbf16, #tpu.memory_space<vmem>>, vector<1x192x256xbf16>
    %36 = vector.shape_cast %35 : vector<1x192x256xbf16> to vector<192x256xbf16>
    %cst_26 = arith.constant dense<0.000000e+00> : vector<92x256xf32>
    %37 = tpu.matmul %34, %36, %cst_26 {dimension_numbers = #tpu.dot_dimension_numbers<[1], [0], [0], [1], [0, 0, 1, 1], [], []>} : vector<92x192xbf16>, vector<192x256xbf16>, vector<92x256xf32> -> vector<92x256xf32>
    %38 = arith.addf %32, %37 : vector<92x256xf32>
    %39 = vector.extract_strided_slice %21 {offsets = [3, 0], sizes = [92, 192], strides = [1, 1]} : vector<96x192xf32> to vector<92x192xf32>
    %40 = arith.truncf %39 : vector<92x192xf32> to vector<92x192xbf16>
    %c3 = arith.constant 3 : index
    %c0_27 = arith.constant 0 : index
    %c0_28 = arith.constant 0 : index
    %41 = vector.load %arg6[%c3, %c0_27, %c0_28] : memref<5x192x256xbf16, #tpu.memory_space<vmem>>, vector<1x192x256xbf16>
    %42 = vector.shape_cast %41 : vector<1x192x256xbf16> to vector<192x256xbf16>
    %cst_29 = arith.constant dense<0.000000e+00> : vector<92x256xf32>
    %43 = tpu.matmul %40, %42, %cst_29 {dimension_numbers = #tpu.dot_dimension_numbers<[1], [0], [0], [1], [0, 0, 1, 1], [], []>} : vector<92x192xbf16>, vector<192x256xbf16>, vector<92x256xf32> -> vector<92x256xf32>
    %44 = arith.addf %38, %43 : vector<92x256xf32>
    %45 = vector.extract_strided_slice %21 {offsets = [4, 0], sizes = [92, 192], strides = [1, 1]} : vector<96x192xf32> to vector<92x192xf32>
    %46 = arith.truncf %45 : vector<92x192xf32> to vector<92x192xbf16>
    %c4 = arith.constant 4 : index
    %c0_30 = arith.constant 0 : index
    %c0_31 = arith.constant 0 : index
    %47 = vector.load %arg6[%c4, %c0_30, %c0_31] : memref<5x192x256xbf16, #tpu.memory_space<vmem>>, vector<1x192x256xbf16>
    %48 = vector.shape_cast %47 : vector<1x192x256xbf16> to vector<192x256xbf16>
    %cst_32 = arith.constant dense<0.000000e+00> : vector<92x256xf32>
    %49 = tpu.matmul %46, %48, %cst_32 {dimension_numbers = #tpu.dot_dimension_numbers<[1], [0], [0], [1], [0, 0, 1, 1], [], []>} : vector<92x192xbf16>, vector<192x256xbf16>, vector<92x256xf32> -> vector<92x256xf32>
    %50 = arith.addf %44, %49 : vector<92x256xf32>
    %c0_33 = arith.constant 0 : index
    %c0_34 = arith.constant 0 : index
    %51 = vector.load %arg7[%c0_33, %c0_34] : memref<1x256xf32, #tpu.memory_space<vmem>>, vector<1x256xf32>
    %52 = vector.broadcast %51 : vector<1x256xf32> to vector<92x256xf32>
    %53 = arith.addf %50, %52 : vector<92x256xf32>
    %cst_35 = arith.constant 0.000000e+00 : f32
    %54 = vector.broadcast %cst_35 : f32 to vector<92x256xf32>
    %55 = arith.maximumf %53, %54 : vector<92x256xf32>
    %56 = vector.extract_strided_slice %55 {offsets = [0, 0], sizes = [91, 256], strides = [1, 1]} : vector<92x256xf32> to vector<91x256xf32>
    %57 = vector.extract_strided_slice %55 {offsets = [1, 0], sizes = [91, 256], strides = [1, 1]} : vector<92x256xf32> to vector<91x256xf32>
    %58 = arith.maximumf %56, %57 : vector<91x256xf32>
    %59 = arith.truncf %58 : vector<91x256xf32> to vector<91x256xbf16>
    %c0_36 = arith.constant 0 : index
    %c0_37 = arith.constant 0 : index
    %60 = vector.load %arg8[%c0_36, %c0_37] : memref<32x91xbf16, #tpu.memory_space<vmem>>, vector<32x91xbf16>
    %cst_38 = arith.constant dense<0.000000e+00> : vector<32x256xf32>
    %61 = tpu.matmul %60, %59, %cst_38 {dimension_numbers = #tpu.dot_dimension_numbers<[1], [0], [0], [1], [0, 0, 1, 1], [], []>} : vector<32x91xbf16>, vector<91x256xbf16>, vector<32x256xf32> -> vector<32x256xf32>
    %62 = arith.truncf %61 : vector<32x256xf32> to vector<32x256xbf16>
    %c0_39 = arith.constant 0 : index
    %c0_40 = arith.constant 0 : index
    %c0_41 = arith.constant 0 : index
    %63 = vector.load %arg9[%c0_39, %c0_40, %c0_41] : memref<2x256x128xbf16, #tpu.memory_space<vmem>>, vector<1x256x128xbf16>
    %64 = vector.shape_cast %63 : vector<1x256x128xbf16> to vector<256x128xbf16>
    %cst_42 = arith.constant dense<0.000000e+00> : vector<32x128xf32>
    %65 = tpu.matmul %62, %64, %cst_42 {dimension_numbers = #tpu.dot_dimension_numbers<[1], [0], [0], [1], [0, 0, 1, 1], [], []>} : vector<32x256xbf16>, vector<256x128xbf16>, vector<32x128xf32> -> vector<32x128xf32>
    %c1_43 = arith.constant 1 : index
    %c0_44 = arith.constant 0 : index
    %c0_45 = arith.constant 0 : index
    %66 = vector.load %arg9[%c1_43, %c0_44, %c0_45] : memref<2x256x128xbf16, #tpu.memory_space<vmem>>, vector<1x256x128xbf16>
    %67 = vector.shape_cast %66 : vector<1x256x128xbf16> to vector<256x128xbf16>
    %cst_46 = arith.constant dense<0.000000e+00> : vector<32x128xf32>
    %68 = tpu.matmul %62, %67, %cst_46 {dimension_numbers = #tpu.dot_dimension_numbers<[1], [0], [0], [1], [0, 0, 1, 1], [], []>} : vector<32x256xbf16>, vector<256x128xbf16>, vector<32x128xf32> -> vector<32x128xf32>
    %69 = arith.maximumf %65, %68 : vector<32x128xf32>
    %70 = vector.extract_strided_slice %69 {offsets = [0, 0], sizes = [29, 128], strides = [1, 1]} : vector<32x128xf32> to vector<29x128xf32>
    %71 = arith.truncf %70 : vector<29x128xf32> to vector<29x128xbf16>
    %c0_47 = arith.constant 0 : index
    %c0_48 = arith.constant 0 : index
    %c0_49 = arith.constant 0 : index
    %72 = vector.load %arg10[%c0_47, %c0_48, %c0_49] : memref<4x128x64xbf16, #tpu.memory_space<vmem>>, vector<1x128x64xbf16>
    %73 = vector.shape_cast %72 : vector<1x128x64xbf16> to vector<128x64xbf16>
    %cst_50 = arith.constant dense<0.000000e+00> : vector<29x64xf32>
    %74 = tpu.matmul %71, %73, %cst_50 {dimension_numbers = #tpu.dot_dimension_numbers<[1], [0], [0], [1], [0, 0, 1, 1], [], []>} : vector<29x128xbf16>, vector<128x64xbf16>, vector<29x64xf32> -> vector<29x64xf32>
    %75 = vector.extract_strided_slice %69 {offsets = [1, 0], sizes = [29, 128], strides = [1, 1]} : vector<32x128xf32> to vector<29x128xf32>
    %76 = arith.truncf %75 : vector<29x128xf32> to vector<29x128xbf16>
    %c1_51 = arith.constant 1 : index
    %c0_52 = arith.constant 0 : index
    %c0_53 = arith.constant 0 : index
    %77 = vector.load %arg10[%c1_51, %c0_52, %c0_53] : memref<4x128x64xbf16, #tpu.memory_space<vmem>>, vector<1x128x64xbf16>
    %78 = vector.shape_cast %77 : vector<1x128x64xbf16> to vector<128x64xbf16>
    %cst_54 = arith.constant dense<0.000000e+00> : vector<29x64xf32>
    %79 = tpu.matmul %76, %78, %cst_54 {dimension_numbers = #tpu.dot_dimension_numbers<[1], [0], [0], [1], [0, 0, 1, 1], [], []>} : vector<29x128xbf16>, vector<128x64xbf16>, vector<29x64xf32> -> vector<29x64xf32>
    %80 = arith.addf %74, %79 : vector<29x64xf32>
    %81 = vector.extract_strided_slice %69 {offsets = [2, 0], sizes = [29, 128], strides = [1, 1]} : vector<32x128xf32> to vector<29x128xf32>
    %82 = arith.truncf %81 : vector<29x128xf32> to vector<29x128xbf16>
    %c2_55 = arith.constant 2 : index
    %c0_56 = arith.constant 0 : index
    %c0_57 = arith.constant 0 : index
    %83 = vector.load %arg10[%c2_55, %c0_56, %c0_57] : memref<4x128x64xbf16, #tpu.memory_space<vmem>>, vector<1x128x64xbf16>
    %84 = vector.shape_cast %83 : vector<1x128x64xbf16> to vector<128x64xbf16>
    %cst_58 = arith.constant dense<0.000000e+00> : vector<29x64xf32>
    %85 = tpu.matmul %82, %84, %cst_58 {dimension_numbers = #tpu.dot_dimension_numbers<[1], [0], [0], [1], [0, 0, 1, 1], [], []>} : vector<29x128xbf16>, vector<128x64xbf16>, vector<29x64xf32> -> vector<29x64xf32>
    %86 = arith.addf %80, %85 : vector<29x64xf32>
    %87 = vector.extract_strided_slice %69 {offsets = [3, 0], sizes = [29, 128], strides = [1, 1]} : vector<32x128xf32> to vector<29x128xf32>
    %88 = arith.truncf %87 : vector<29x128xf32> to vector<29x128xbf16>
    %c3_59 = arith.constant 3 : index
    %c0_60 = arith.constant 0 : index
    %c0_61 = arith.constant 0 : index
    %89 = vector.load %arg10[%c3_59, %c0_60, %c0_61] : memref<4x128x64xbf16, #tpu.memory_space<vmem>>, vector<1x128x64xbf16>
    %90 = vector.shape_cast %89 : vector<1x128x64xbf16> to vector<128x64xbf16>
    %cst_62 = arith.constant dense<0.000000e+00> : vector<29x64xf32>
    %91 = tpu.matmul %88, %90, %cst_62 {dimension_numbers = #tpu.dot_dimension_numbers<[1], [0], [0], [1], [0, 0, 1, 1], [], []>} : vector<29x128xbf16>, vector<128x64xbf16>, vector<29x64xf32> -> vector<29x64xf32>
    %92 = arith.addf %86, %91 : vector<29x64xf32>
    %c0_63 = arith.constant 0 : index
    %c0_64 = arith.constant 0 : index
    %93 = vector.load %arg11[%c0_63, %c0_64] : memref<1x64xf32, #tpu.memory_space<vmem>>, vector<1x64xf32>
    %94 = vector.broadcast %93 : vector<1x64xf32> to vector<29x64xf32>
    %95 = arith.addf %92, %94 : vector<29x64xf32>
    %cst_65 = arith.constant 0.000000e+00 : f32
    %96 = vector.broadcast %cst_65 : f32 to vector<29x64xf32>
    %97 = arith.maximumf %95, %96 : vector<29x64xf32>
    %c0_66 = arith.constant 0 : index
    %c0_67 = arith.constant 0 : index
    %98 = vector.load %arg12[%c0_66, %c0_67] : memref<8x29xbf16, #tpu.memory_space<vmem>>, vector<8x29xbf16>
    %99 = arith.truncf %97 : vector<29x64xf32> to vector<29x64xbf16>
    %cst_68 = arith.constant dense<0.000000e+00> : vector<8x64xf32>
    %100 = tpu.matmul %98, %99, %cst_68 {dimension_numbers = #tpu.dot_dimension_numbers<[1], [0], [0], [1], [0, 0, 1, 1], [], []>} : vector<8x29xbf16>, vector<29x64xbf16>, vector<8x64xf32> -> vector<8x64xf32>
    %101 = arith.truncf %100 : vector<8x64xf32> to vector<8x64xbf16>
    %c0_69 = arith.constant 0 : index
    %c0_70 = arith.constant 0 : index
    %102 = vector.load %arg13[%c0_69, %c0_70] : memref<64x128xbf16, #tpu.memory_space<vmem>>, vector<64x128xbf16>
    %cst_71 = arith.constant dense<0.000000e+00> : vector<8x128xf32>
    %103 = tpu.matmul %101, %102, %cst_71 {dimension_numbers = #tpu.dot_dimension_numbers<[1], [0], [0], [1], [0, 0, 1, 1], [], []>} : vector<8x64xbf16>, vector<64x128xbf16>, vector<8x128xf32> -> vector<8x128xf32>
    %c0_72 = arith.constant 0 : index
    %c0_73 = arith.constant 0 : index
    %104 = vector.load %arg14[%c0_72, %c0_73] : memref<1x128xf32, #tpu.memory_space<vmem>>, vector<1x128xf32>
    %105 = vector.broadcast %104 : vector<1x128xf32> to vector<8x128xf32>
    %106 = arith.addf %103, %105 : vector<8x128xf32>
    %cst_74 = arith.constant 0.000000e+00 : f32
    %107 = vector.broadcast %cst_74 : f32 to vector<8x128xf32>
    %108 = arith.maximumf %106, %107 : vector<8x128xf32>
    %109 = tpu.iota {dimensions = array<i32: 1>} : vector<8x128xi32>
    %c10_i32 = arith.constant 10 : i32
    %110 = vector.broadcast %c10_i32 : i32 to vector<8x128xi32>
    %111 = arith.cmpi slt, %109, %110 : vector<8x128xi32>
    %cst_75 = arith.constant -1.000000e+30 : f32
    %112 = vector.broadcast %cst_75 : f32 to vector<8x128xf32>
    %113 = arith.select %111, %108, %112 : vector<8x128xi1>, vector<8x128xf32>
    %cst_76 = arith.constant dense<0xFF800000> : vector<8xf32>
    %114 = vector.multi_reduction <maximumf>, %113, %cst_76 [1] : vector<8x128xf32> to vector<8xf32>
    %115 = vector.shape_cast %114 : vector<8xf32> to vector<8x1xf32>
    %116 = vector.broadcast %115 : vector<8x1xf32> to vector<8x128xf32>
    %117 = arith.subf %113, %116 : vector<8x128xf32>
    %118 = math.exp %117 : vector<8x128xf32>
    %cst_77 = arith.constant dense<0.000000e+00> : vector<8xf32>
    %119 = vector.multi_reduction <add>, %118, %cst_77 [1] : vector<8x128xf32> to vector<8xf32>
    %120 = vector.shape_cast %119 : vector<8xf32> to vector<8x1xf32>
    %121 = math.log %120 : vector<8x1xf32>
    %122 = vector.broadcast %115 : vector<8x1xf32> to vector<8x128xf32>
    %123 = arith.subf %113, %122 : vector<8x128xf32>
    %124 = vector.broadcast %121 : vector<8x1xf32> to vector<8x128xf32>
    %125 = arith.subf %123, %124 : vector<8x128xf32>
    %c0_78 = arith.constant 0 : index
    %c0_79 = arith.constant 0 : index
    %126 = vector.load %arg15[%c0_78, %c0_79] : memref<8x128xf32, #tpu.memory_space<vmem>>, vector<8x128xf32>
    tpu.vector_store %arg15[%c0_78, %c0_79], %125 {strides = array<i32>} : memref<8x128xf32, #tpu.memory_space<vmem>>, vector<8x128xf32>,
    return
  }
  func.func @transform_0(%arg0: i32) -> (i32, i32) {
    %c0_i32 = arith.constant 0 : i32
    %c0_i32_0 = arith.constant 0 : i32
    return %arg0, %c0_i32 : i32, i32
  }
  func.func @transform_1(%arg0: i32) -> (i32, i32) {
    %c0_i32 = arith.constant 0 : i32
    %c0_i32_0 = arith.constant 0 : i32
    %c0_i32_1 = arith.constant 0 : i32
    return %c0_i32, %c0_i32_0 : i32, i32
  }
  func.func @transform_2(%arg0: i32) -> (i32, i32) {
    %c0_i32 = arith.constant 0 : i32
    %c0_i32_0 = arith.constant 0 : i32
    %c0_i32_1 = arith.constant 0 : i32
    return %c0_i32, %c0_i32_0 : i32, i32
  }
  func.func @transform_3(%arg0: i32) -> (i32, i32) {
    %c0_i32 = arith.constant 0 : i32
    %c0_i32_0 = arith.constant 0 : i32
    %c0_i32_1 = arith.constant 0 : i32
    return %c0_i32, %c0_i32_0 : i32, i32
  }
  func.func @transform_4(%arg0: i32) -> (i32, i32, i32) {
    %c0_i32 = arith.constant 0 : i32
    %c0_i32_0 = arith.constant 0 : i32
    %c0_i32_1 = arith.constant 0 : i32
    %c0_i32_2 = arith.constant 0 : i32
    return %c0_i32, %c0_i32_0, %c0_i32_1 : i32, i32, i32
  }
  func.func @transform_5(%arg0: i32) -> (i32, i32, i32) {
    %c0_i32 = arith.constant 0 : i32
    %c0_i32_0 = arith.constant 0 : i32
    %c0_i32_1 = arith.constant 0 : i32
    %c0_i32_2 = arith.constant 0 : i32
    return %c0_i32, %c0_i32_0, %c0_i32_1 : i32, i32, i32
  }
  func.func @transform_6(%arg0: i32) -> (i32, i32) {
    %c0_i32 = arith.constant 0 : i32
    %c0_i32_0 = arith.constant 0 : i32
    %c0_i32_1 = arith.constant 0 : i32
    return %c0_i32, %c0_i32_0 : i32, i32
  }
  func.func @transform_7(%arg0: i32) -> (i32, i32) {
    %c0_i32 = arith.constant 0 : i32
    %c0_i32_0 = arith.constant 0 : i32
    %c0_i32_1 = arith.constant 0 : i32
    return %c0_i32, %c0_i32_0 : i32, i32
  }
  func.func @transform_8(%arg0: i32) -> (i32, i32, i32) {
    %c0_i32 = arith.constant 0 : i32
    %c0_i32_0 = arith.constant 0 : i32
    %c0_i32_1 = arith.constant 0 : i32
    %c0_i32_2 = arith.constant 0 : i32
    return %c0_i32, %c0_i32_0, %c0_i32_1 : i32, i32, i32
  }
  func.func @transform_9(%arg0: i32) -> (i32, i32, i32) {
    %c0_i32 = arith.constant 0 : i32
    %c0_i32_0 = arith.constant 0 : i32
    %c0_i32_1 = arith.constant 0 : i32
    %c0_i32_2 = arith.constant 0 : i32
    return %c0_i32, %c0_i32_0, %c0_i32_1 : i32, i32, i32
  }
  func.func @transform_10(%arg0: i32) -> (i32, i32) {
    %c0_i32 = arith.constant 0 : i32
    %c0_i32_0 = arith.constant 0 : i32
    %c0_i32_1 = arith.constant 0 : i32
    return %c0_i32, %c0_i32_0 : i32, i32
  }
  func.func @transform_11(%arg0: i32) -> (i32, i32) {
    %c0_i32 = arith.constant 0 : i32
    %c0_i32_0 = arith.constant 0 : i32
    %c0_i32_1 = arith.constant 0 : i32
    return %c0_i32, %c0_i32_0 : i32, i32
  }
  func.func @transform_12(%arg0: i32) -> (i32, i32) {
    %c0_i32 = arith.constant 0 : i32
    %c0_i32_0 = arith.constant 0 : i32
    %c0_i32_1 = arith.constant 0 : i32
    return %c0_i32, %c0_i32_0 : i32, i32
  }
  func.func @transform_13(%arg0: i32) -> (i32, i32) {
    %c0_i32 = arith.constant 0 : i32
    %c0_i32_0 = arith.constant 0 : i32
    %c0_i32_1 = arith.constant 0 : i32
    return %c0_i32, %c0_i32_0 : i32, i32
  }
  func.func @transform_14(%arg0: i32) -> (i32, i32) {
    %c0_i32 = arith.constant 0 : i32
    %c0_i32_0 = arith.constant 0 : i32
    return %arg0, %c0_i32 : i32, i32
  }
}

</mosaic_0001>

<llo_original>
// kernel: net_forward.1
$region0: #{net_forward.1}
  #allocation0 [shape = 'u32[]', space=smem, size = 0x4, offset = 0x4, fixed_abs, tag = 'smem constant byte address 0x4 - core index']
  #allocation1 [shape = 'u32[144,128]{1,0:T(1,128)}', space=vmem, size = 0x12000, scoped, tag = 'internal scratch']
  %s0 = inlined_call_operand.vmem [shape: bf16[448,140], index: 0, kind: input, shape index: {}]
  %s1 = inlined_call_operand.vmem [shape: bf16[140,384], index: 1, kind: input, shape index: {}]
  %s2 = inlined_call_operand.vmem [shape: f32[1,384], index: 2, kind: input, shape index: {}]
  %s3 = inlined_call_operand.vmem [shape: bf16[96,223], index: 3, kind: input, shape index: {}]
  %s4 = inlined_call_operand.vmem [shape: bf16[2,384,192], index: 4, kind: input, shape index: {}]
  %s5 = inlined_call_operand.vmem [shape: bf16[5,192,256], index: 5, kind: input, shape index: {}]
  %s6 = inlined_call_operand.vmem [shape: f32[1,256], index: 6, kind: input, shape index: {}]
  %s7 = inlined_call_operand.vmem [shape: bf16[32,91], index: 7, kind: input, shape index: {}]
  %s8 = inlined_call_operand.vmem [shape: bf16[2,256,128], index: 8, kind: input, shape index: {}]
  %s9 = inlined_call_operand.vmem [shape: bf16[4,128,64], index: 9, kind: input, shape index: {}]
  %s10 = inlined_call_operand.vmem [shape: f32[1,64], index: 10, kind: input, shape index: {}]
  %s11 = inlined_call_operand.vmem [shape: bf16[8,29], index: 11, kind: input, shape index: {}]
  %s12 = inlined_call_operand.vmem [shape: bf16[64,128], index: 12, kind: input, shape index: {}]
  %s13 = inlined_call_operand.vmem [shape: f32[1,128], index: 13, kind: input, shape index: {}]
  %s14 = inlined_call_operand.hbm [shape: f32[16,128], index: 14, kind: output, shape index: {}]
  %s15 = sld [smem:[#allocation0]]
  $region89: #{net_forward.1} parent=0
    _
  %s17 = ssub.s32 1, %s15
  %s18 = scalar_select 0, %s17, %s15
  $region1: #{net_forward.1} parent=0
    #allocation2 [shape = 'u8[8192]{0}', space=vmem, size = 0x2000, scoped, tag = 'output window, operand 0']
    #allocation3 [shape = 's32[2]{0}', space=sflag, size = 0x8, scoped, tag = 'scoped memory for net_forward.1']
    %19 = vsyncpa [#allocation3], 0
    %s20 = scalar_lea.sflag [#allocation3], 1
    %21 = vsyncpa %s20, 0
    loop: start=0, step=1, limit=4
    $region2: #{net_forward.1} parent=1 // loop_pre_header
      _
    $region3: #{net_forward.1} parent=1 // loop_header
      %s23 = sphi 0, %s27
      %p24 = scmp.ge.s32.totalorder %s23, 4
      %s33 = sphi 0, %s35
      %s36 = sphi 0, %s33
      %s37 = sphi 0, %s36
      %s53 = sphi 0, %s37
      %s57 = sphi 0, %s57
      %s59 = sphi 0, %s57
      %s60 = sphi 0, %s59
      %s74 = sphi 0, %s60
      %s78 = sphi 0, %s78
      %s80 = sphi 0, %s78
      %s81 = sphi 0, %s80
      %s95 = sphi 0, %s81
      %s99 = sphi 0, %s99
      %s101 = sphi 0, %s99
      %s102 = sphi 0, %s101
      %s116 = sphi 0, %s102
      %s120 = sphi 0, %s120
      %s122 = sphi 0, %s120
      %s123 = sphi 0, %s122
      %s137 = sphi 0, %s123
      %s141 = sphi 0, %s141
      %s143 = sphi 0, %s141
      %s144 = sphi 0, %s143
      %s158 = sphi 0, %s144
      %s162 = sphi 0, %s162
      %s164 = sphi 0, %s162
      %s165 = sphi 0, %s164
      %s179 = sphi 0, %s165
      %s183 = sphi 0, %s183
      %s185 = sphi 0, %s183
      %s186 = sphi 0, %s185
      %s200 = sphi 0, %s186
      %s204 = sphi 0, %s204
      %s206 = sphi 0, %s204
      %s207 = sphi 0, %s206
      %s221 = sphi 0, %s207
      %s225 = sphi 0, %s225
      %s227 = sphi 0, %s225
      %s228 = sphi 0, %s227
      %s242 = sphi 0, %s228
      %s246 = sphi 0, %s246
      %s248 = sphi 0, %s246
      %s249 = sphi 0, %s248
      %s263 = sphi 0, %s249
      %s267 = sphi 0, %s267
      %s269 = sphi 0, %s267
      %s270 = sphi 0, %s269
      %s284 = sphi 0, %s270
      %s288 = sphi 0, %s288
      %s290 = sphi 0, %s288
      %s291 = sphi 0, %s290
      %s305 = sphi 0, %s291
      %s309 = sphi 0, %s309
      %s311 = sphi 0, %s309
      %s312 = sphi 0, %s311
      %s326 = sphi 0, %s312
      %s332 = sphi 0, %s334
      %s335 = sphi 0, %s332
      %s336 = sphi 0, %s335
      %s352 = sphi 0, %s336
    $region4: #{net_forward.1} parent=1 // loop_header_branch
      %26 = sbr.rel (%p24) target = $region8
    $region5: #{net_forward.1} parent=1 // loop_body
      %s28 = ssub.s32 %s23, 1
      %s29 = ssub.s32 %s23, 2
      %s30 = sadd.s32 %s23, 1
      %s31 = ssub.s32 %s23, %s30
      %p32 = scmp.eq.s32.totalorder %s31, 0
      %s34 = sadd.s32 %s33, 1
      %s35 = scalar_select %p32, %s33, %s34
      %p38 = pneg %p32
      %p39 = scmp.eq.s32.totalorder %s23, 1
      %p40 = por %p38, %p39
      %p41 = scmp.ne.s32.totalorder %s33, %s36
      %p42 = scmp.eq.s32.totalorder %s23, 0
      %p43 = por %p41, %p42
      %p44 = scmp.ne.s32.totalorder %s33, %s36
      %p45 = scmp.eq.s32.totalorder %s28, 1
      %p46 = por %p44, %p45
      %p47 = scmp.ne.s32.totalorder %s36, %s37
      %p48 = scmp.eq.s32.totalorder %s28, 0
      %p49 = por %p47, %p48
      %p50 = scmp.ne.s32.totalorder %s36, %s37
      %p51 = scmp.eq.s32.totalorder %s29, 1
      %p52 = por %p50, %p51
      %p54 = scmp.ne.s32.totalorder %s37, %s53
      %p55 = scmp.eq.s32.totalorder %s29, 0
      %p56 = por %p54, %p55
      %s58 = sadd.s32 %s57, 1
      %p61 = scmp.eq.s32.totalorder %s23, 1
      %p62 = scmp.ne.s32.totalorder %s57, %s59
      %p63 = scmp.eq.s32.totalorder %s23, 0
      %p64 = por %p62, %p63
      %p65 = scmp.ne.s32.totalorder %s57, %s59
      %p66 = scmp.eq.s32.totalorder %s28, 1
      %p67 = por %p65, %p66
      %p68 = scmp.ne.s32.totalorder %s59, %s60
      %p69 = scmp.eq.s32.totalorder %s28, 0
      %p70 = por %p68, %p69
      %p71 = scmp.ne.s32.totalorder %s59, %s60
      %p72 = scmp.eq.s32.totalorder %s29, 1
      %p73 = por %p71, %p72
      %p75 = scmp.ne.s32.totalorder %s60, %s74
      %p76 = scmp.eq.s32.totalorder %s29, 0
      %p77 = por %p75, %p76
      %s79 = sadd.s32 %s78, 1
      %p82 = scmp.eq.s32.totalorder %s23, 1
      %p83 = scmp.ne.s32.totalorder %s78, %s80
      %p84 = scmp.eq.s32.totalorder %s23, 0
      %p85 = por %p83, %p84
      %p86 = scmp.ne.s32.totalorder %s78, %s80
      %p87 = scmp.eq.s32.totalorder %s28, 1
      %p88 = por %p86, %p87
      %p89 = scmp.ne.s32.totalorder %s80, %s81
      %p90 = scmp.eq.s32.totalorder %s28, 0
      %p91 = por %p89, %p90
      %p92 = scmp.ne.s32.totalorder %s80, %s81
      %p93 = scmp.eq.s32.totalorder %s29, 1
      %p94 = por %p92, %p93
      %p96 = scmp.ne.s32.totalorder %s81, %s95
      %p97 = scmp.eq.s32.totalorder %s29, 0
      %p98 = por %p96, %p97
      %s100 = sadd.s32 %s99, 1
      %p103 = scmp.eq.s32.totalorder %s23, 1
      %p104 = scmp.ne.s32.totalorder %s99, %s101
      %p105 = scmp.eq.s32.totalorder %s23, 0
      %p106 = por %p104, %p105
      %p107 = scmp.ne.s32.totalorder %s99, %s101
      %p108 = scmp.eq.s32.totalorder %s28, 1
      %p109 = por %p107, %p108
      %p110 = scmp.ne.s32.totalorder %s101, %s102
      %p111 = scmp.eq.s32.totalorder %s28, 0
      %p112 = por %p110, %p111
      %p113 = scmp.ne.s32.totalorder %s101, %s102
      %p114 = scmp.eq.s32.totalorder %s29, 1
      %p115 = por %p113, %p114
      %p117 = scmp.ne.s32.totalorder %s102, %s116
      %p118 = scmp.eq.s32.totalorder %s29, 0
      %p119 = por %p117, %p118
      %s121 = sadd.s32 %s120, 1
      %p124 = scmp.eq.s32.totalorder %s23, 1
      %p125 = scmp.ne.s32.totalorder %s120, %s122
      %p126 = scmp.eq.s32.totalorder %s23, 0
      %p127 = por %p125, %p126
      %p128 = scmp.ne.s32.totalorder %s120, %s122
      %p129 = scmp.eq.s32.totalorder %s28, 1
      %p130 = por %p128, %p129
      %p131 = scmp.ne.s32.totalorder %s122, %s123
      %p132 = scmp.eq.s32.totalorder %s28, 0
      %p133 = por %p131, %p132
      %p134 = scmp.ne.s32.totalorder %s122, %s123
      %p135 = scmp.eq.s32.totalorder %s29, 1
      %p136 = por %p134, %p135
      %p138 = scmp.ne.s32.totalorder %s123, %s137
      %p139 = scmp.eq.s32.totalorder %s29, 0
      %p140 = por %p138, %p139
      %s142 = sadd.s32 %s141, 1
      %p145 = scmp.eq.s32.totalorder %s23, 1
      %p146 = scmp.ne.s32.totalorder %s141, %s143
      %p147 = scmp.eq.s32.totalorder %s23, 0
      %p148 = por %p146, %p147
      %p149 = scmp.ne.s32.totalorder %s141, %s143
      %p150 = scmp.eq.s32.totalorder %s28, 1
      %p151 = por %p149, %p150
      %p152 = scmp.ne.s32.totalorder %s143, %s144
      %p153 = scmp.eq.s32.totalorder %s28, 0
      %p154 = por %p152, %p153
      %p155 = scmp.ne.s32.totalorder %s143, %s144
      %p156 = scmp.eq.s32.totalorder %s29, 1
      %p157 = por %p155, %p156
      %p159 = scmp.ne.s32.totalorder %s144, %s158
      %p160 = scmp.eq.s32.totalorder %s29, 0
      %p161 = por %p159, %p160
      %s163 = sadd.s32 %s162, 1
      %p166 = scmp.eq.s32.totalorder %s23, 1
      %p167 = scmp.ne.s32.totalorder %s162, %s164
      %p168 = scmp.eq.s32.totalorder %s23, 0
      %p169 = por %p167, %p168
      %p170 = scmp.ne.s32.totalorder %s162, %s164
      %p171 = scmp.eq.s32.totalorder %s28, 1
      %p172 = por %p170, %p171
      %p173 = scmp.ne.s32.totalorder %s164, %s165
      %p174 = scmp.eq.s32.totalorder %s28, 0
      %p175 = por %p173, %p174
      %p176 = scmp.ne.s32.totalorder %s164, %s165
      %p177 = scmp.eq.s32.totalorder %s29, 1
      %p178 = por %p176, %p177
      %p180 = scmp.ne.s32.totalorder %s165, %s179
      %p181 = scmp.eq.s32.totalorder %s29, 0
      %p182 = por %p180, %p181
      %s184 = sadd.s32 %s183, 1
      %p187 = scmp.eq.s32.totalorder %s23, 1
      %p188 = scmp.ne.s32.totalorder %s183, %s185
      %p189 = scmp.eq.s32.totalorder %s23, 0
      %p190 = por %p188, %p189
      %p191 = scmp.ne.s32.totalorder %s183, %s185
      %p192 = scmp.eq.s32.totalorder %s28, 1
      %p193 = por %p191, %p192
      %p194 = scmp.ne.s32.totalorder %s185, %s186
      %p195 = scmp.eq.s32.totalorder %s28, 0
      %p196 = por %p194, %p195
      %p197 = scmp.ne.s32.totalorder %s185, %s186
      %p198 = scmp.eq.s32.totalorder %s29, 1
      %p199 = por %p197, %p198
      %p201 = scmp.ne.s32.totalorder %s186, %s200
      %p202 = scmp.eq.s32.totalorder %s29, 0
      %p203 = por %p201, %p202
      %s205 = sadd.s32 %s204, 1
      %p208 = scmp.eq.s32.totalorder %s23, 1
      %p209 = scmp.ne.s32.totalorder %s204, %s206
      %p210 = scmp.eq.s32.totalorder %s23, 0
      %p211 = por %p209, %p210
      %p212 = scmp.ne.s32.totalorder %s204, %s206
      %p213 = scmp.eq.s32.totalorder %s28, 1
      %p214 = por %p212, %p213
      %p215 = scmp.ne.s32.totalorder %s206, %s207
      %p216 = scmp.eq.s32.totalorder %s28, 0
      %p217 = por %p215, %p216
      %p218 = scmp.ne.s32.totalorder %s206, %s207
      %p219 = scmp.eq.s32.totalorder %s29, 1
      %p220 = por %p218, %p219
      %p222 = scmp.ne.s32.totalorder %s207, %s221
      %p223 = scmp.eq.s32.totalorder %s29, 0
      %p224 = por %p222, %p223
      %s226 = sadd.s32 %s225, 1
      %p229 = scmp.eq.s32.totalorder %s23, 1
      %p230 = scmp.ne.s32.totalorder %s225, %s227
      %p231 = scmp.eq.s32.totalorder %s23, 0
      %p232 = por %p230, %p231
      %p233 = scmp.ne.s32.totalorder %s225, %s227
      %p234 = scmp.eq.s32.totalorder %s28, 1
      %p235 = por %p233, %p234
      %p236 = scmp.ne.s32.totalorder %s227, %s228
      %p237 = scmp.eq.s32.totalorder %s28, 0
      %p238 = por %p236, %p237
      %p239 = scmp.ne.s32.totalorder %s227, %s228
      %p240 = scmp.eq.s32.totalorder %s29, 1
      %p241 = por %p239, %p240
      %p243 = scmp.ne.s32.totalorder %s228, %s242
      %p244 = scmp.eq.s32.totalorder %s29, 0
      %p245 = por %p243, %p244
      %s247 = sadd.s32 %s246, 1
      %p250 = scmp.eq.s32.totalorder %s23, 1
      %p251 = scmp.ne.s32.totalorder %s246, %s248
      %p252 = scmp.eq.s32.totalorder %s23, 0
      %p253 = por %p251, %p252
      %p254 = scmp.ne.s32.totalorder %s246, %s248
      %p255 = scmp.eq.s32.totalorder %s28, 1
      %p256 = por %p254, %p255
      %p257 = scmp.ne.s32.totalorder %s248, %s249
      %p258 = scmp.eq.s32.totalorder %s28, 0
      %p259 = por %p257, %p258
      %p260 = scmp.ne.s32.totalorder %s248, %s249
      %p261 = scmp.eq.s32.totalorder %s29, 1
      %p262 = por %p260, %p261
      %p264 = scmp.ne.s32.totalorder %s249, %s263
      %p265 = scmp.eq.s32.totalorder %s29, 0
      %p266 = por %p264, %p265
      %s268 = sadd.s32 %s267, 1
      %p271 = scmp.eq.s32.totalorder %s23, 1
      %p272 = scmp.ne.s32.totalorder %s267, %s269
      %p273 = scmp.eq.s32.totalorder %s23, 0
      %p274 = por %p272, %p273
      %p275 = scmp.ne.s32.totalorder %s267, %s269
      %p276 = scmp.eq.s32.totalorder %s28, 1
      %p277 = por %p275, %p276
      %p278 = scmp.ne.s32.totalorder %s269, %s270
      %p279 = scmp.eq.s32.totalorder %s28, 0
      %p280 = por %p278, %p279
      %p281 = scmp.ne.s32.totalorder %s269, %s270
      %p282 = scmp.eq.s32.totalorder %s29, 1
      %p283 = por %p281, %p282
      %p285 = scmp.ne.s32.totalorder %s270, %s284
      %p286 = scmp.eq.s32.totalorder %s29, 0
      %p287 = por %p285, %p286
      %s289 = sadd.s32 %s288, 1
      %p292 = scmp.eq.s32.totalorder %s23, 1
      %p293 = scmp.ne.s32.totalorder %s288, %s290
      %p294 = scmp.eq.s32.totalorder %s23, 0
      %p295 = por %p293, %p294
      %p296 = scmp.ne.s32.totalorder %s288, %s290
      %p297 = scmp.eq.s32.totalorder %s28, 1
      %p298 = por %p296, %p297
      %p299 = scmp.ne.s32.totalorder %s290, %s291
      %p300 = scmp.eq.s32.totalorder %s28, 0
      %p301 = por %p299, %p300
      %p302 = scmp.ne.s32.totalorder %s290, %s291
      %p303 = scmp.eq.s32.totalorder %s29, 1
      %p304 = por %p302, %p303
      %p306 = scmp.ne.s32.totalorder %s291, %s305
      %p307 = scmp.eq.s32.totalorder %s29, 0
      %p308 = por %p306, %p307
      %s310 = sadd.s32 %s309, 1
      %p313 = scmp.eq.s32.totalorder %s23, 1
      %p314 = scmp.ne.s32.totalorder %s309, %s311
      %p315 = scmp.eq.s32.totalorder %s23, 0
      %p316 = por %p314, %p315
      %p317 = scmp.ne.s32.totalorder %s309, %s311
      %p318 = scmp.eq.s32.totalorder %s28, 1
      %p319 = por %p317, %p318
      %p320 = scmp.ne.s32.totalorder %s311, %s312
      %p321 = scmp.eq.s32.totalorder %s28, 0
      %p322 = por %p320, %p321
      %p323 = scmp.ne.s32.totalorder %s311, %s312
      %p324 = scmp.eq.s32.totalorder %s29, 1
      %p325 = por %p323, %p324
      %p327 = scmp.ne.s32.totalorder %s312, %s326
      %p328 = scmp.eq.s32.totalorder %s29, 0
      %p329 = por %p327, %p328
      %s330 = ssub.s32 %s23, %s30
      %p331 = scmp.eq.s32.totalorder %s330, 0
      %s333 = sadd.s32 %s332, 1
      %s334 = scalar_select %p331, %s332, %s333
      %p337 = pneg %p331
      %p338 = scmp.eq.s32.totalorder %s23, 1
      %p339 = por %p337, %p338
      %p340 = scmp.ne.s32.totalorder %s332, %s335
      %p341 = scmp.eq.s32.totalorder %s23, 0
      %p342 = por %p340, %p341
      %p343 = scmp.ne.s32.totalorder %s332, %s335
      %p344 = scmp.eq.s32.totalorder %s28, 1
      %p345 = por %p343, %p344
      %p346 = scmp.ne.s32.totalorder %s335, %s336
      %p347 = scmp.eq.s32.totalorder %s28, 0
      %p348 = por %p346, %p347
      %p349 = scmp.ne.s32.totalorder %s335, %s336
      %p350 = scmp.eq.s32.totalorder %s29, 1
      %p351 = por %p349, %p350
      %p353 = scmp.ne.s32.totalorder %s336, %s352
      %p354 = scmp.eq.s32.totalorder %s29, 0
      %p355 = por %p353, %p354
      %p356 = scmp.le.s32.totalorder 1, %s23
      %p357 = scmp.lt.s32.totalorder %s23, 3
      %p358 = pnand %p356, %p357
      %p359 = pneg %p358
      // Predicated region
      $region9: #{net_forward.1} parent=5 // pred_check
        _
      $region10: #{net_forward.1} parent=5 // pred_check_branch
        %361 = sbr.rel (%p358) target = $region12
      $region11: #{net_forward.1} parent=5 // pred_region
        %s362 = ssub.s32 %s23, 1
        // Predicated region
        $region13: #{net_forward.1} parent=11 // pred_check
          %p363 = pneg %p70
        $region14: #{net_forward.1} parent=11 // pred_check_branch
          %365 = sbr.rel (%p363) target = $region16
        $region15: #{net_forward.1} parent=11 // pred_region
          _
        $region16: #{net_forward.1} parent=11 // pred_fallthru
          _
        // Predicated region
        $region17: #{net_forward.1} parent=11 // pred_check
          %p366 = pneg %p91
        $region18: #{net_forward.1} parent=11 // pred_check_branch
          %368 = sbr.rel (%p366) target = $region20
        $region19: #{net_forward.1} parent=11 // pred_region
          _
        $region20: #{net_forward.1} parent=11 // pred_fallthru
          _
        // Predicated region
        $region21: #{net_forward.1} parent=11 // pred_check
          %p369 = pneg %p112
        $region22: #{net_forward.1} parent=11 // pred_check_branch
          %371 = sbr.rel (%p369) target = $region24
        $region23: #{net_forward.1} parent=11 // pred_region
          _
        $region24: #{net_forward.1} parent=11 // pred_fallthru
          _
        // Predicated region
        $region25: #{net_forward.1} parent=11 // pred_check
          %p372 = pneg %p133
        $region26: #{net_forward.1} parent=11 // pred_check_branch
          %374 = sbr.rel (%p372) target = $region28
        $region27: #{net_forward.1} parent=11 // pred_region
          _
        $region28: #{net_forward.1} parent=11 // pred_fallthru
          _
        // Predicated region
        $region29: #{net_forward.1} parent=11 // pred_check
          %p375 = pneg %p154
        $region30: #{net_forward.1} parent=11 // pred_check_branch
          %377 = sbr.rel (%p375) target = $region32
        $region31: #{net_forward.1} parent=11 // pred_region
          _
        $region32: #{net_forward.1} parent=11 // pred_fallthru
          _
        // Predicated region
        $region33: #{net_forward.1} parent=11 // pred_check
          %p378 = pneg %p175
        $region34: #{net_forward.1} parent=11 // pred_check_branch
          %380 = sbr.rel (%p378) target = $region36
        $region35: #{net_forward.1} parent=11 // pred_region
          _
        $region36: #{net_forward.1} parent=11 // pred_fallthru
          _
        // Predicated region
        $region37: #{net_forward.1} parent=11 // pred_check
          %p381 = pneg %p196
        $region38: #{net_forward.1} parent=11 // pred_check_branch
          %383 = sbr.rel (%p381) target = $region40
        $region39: #{net_forward.1} parent=11 // pred_region
          _
        $region40: #{net_forward.1} parent=11 // pred_fallthru
          _
        // Predicated region
        $region41: #{net_forward.1} parent=11 // pred_check
          %p384 = pneg %p217
        $region42: #{net_forward.1} parent=11 // pred_check_branch
          %386 = sbr.rel (%p384) target = $region44
        $region43: #{net_forward.1} parent=11 // pred_region
          _
        $region44: #{net_forward.1} parent=11 // pred_fallthru
          _
        // Predicated region
        $region45: #{net_forward.1} parent=11 // pred_check
          %p387 = pneg %p238
        $region46: #{net_forward.1} parent=11 // pred_check_branch
          %389 = sbr.rel (%p387) target = $region48
        $region47: #{net_forward.1} parent=11 // pred_region
          _
        $region48: #{net_forward.1} parent=11 // pred_fallthru
          _
        // Predicated region
        $region49: #{net_forward.1} parent=11 // pred_check
          %p390 = pneg %p259
        $region50: #{net_forward.1} parent=11 // pred_check_branch
          %392 = sbr.rel (%p390) target = $region52
        $region51: #{net_forward.1} parent=11 // pred_region
          _
        $region52: #{net_forward.1} parent=11 // pred_fallthru
          _
        // Predicated region
        $region53: #{net_forward.1} parent=11 // pred_check
          %p393 = pneg %p280
        $region54: #{net_forward.1} parent=11 // pred_check_branch
          %395 = sbr.rel (%p393) target = $region56
        $region55: #{net_forward.1} parent=11 // pred_region
          _
        $region56: #{net_forward.1} parent=11 // pred_fallthru
          _
        // Predicated region
        $region57: #{net_forward.1} parent=11 // pred_check
          %p396 = pneg %p301
        $region58: #{net_forward.1} parent=11 // pred_check_branch
          %398 = sbr.rel (%p396) target = $region60
        $region59: #{net_forward.1} parent=11 // pred_region
          _
        $region60: #{net_forward.1} parent=11 // pred_fallthru
          _
        // Predicated region
        $region61: #{net_forward.1} parent=11 // pred_check
          %p399 = pneg %p322
        $region62: #{net_forward.1} parent=11 // pred_check_branch
          %401 = sbr.rel (%p399) target = $region64
        $region63: #{net_forward.1} parent=11 // pred_region
          _
        $region64: #{net_forward.1} parent=11 // pred_fallthru
          _
      $region12: #{net_forward.1} parent=5 // pred_fallthru
        _
      %p402 = scmp.lt.s32.totalorder %s23, 2
      // Predicated region
      $region65: #{net_forward.1} parent=5 // pred_check
        %p403 = pneg %p402
      $region66: #{net_forward.1} parent=5 // pred_check_branch
        %405 = sbr.rel (%p403) target = $region68
      $region67: #{net_forward.1} parent=5 // pred_region
        // Predicated region
        $region69: #{net_forward.1} parent=67 // pred_check
          %p406 = pneg %p43
        $region70: #{net_forward.1} parent=67 // pred_check_branch
          %408 = sbr.rel (%p406) target = $region72
        $region71: #{net_forward.1} parent=67 // pred_region
          %s409 = smul.u32 28, %s23
          %p410 = scmp.lt.s32.totalorder %s409, 55
          %s411 = scalar_select %p410, %s409, 55
          %s412 = smul.addr %s411, 2
          %s413 = smul.addr %s412, 4
          %s414 = scalar_lea.vmem %s0, %s413
          %s415 = smul.u32 28, %s23
        $region72: #{net_forward.1} parent=67 // pred_fallthru
          _
      $region68: #{net_forward.1} parent=5 // pred_fallthru
        _
      %p416 = scmp.le.s32.totalorder 1, %s23
      %p417 = scmp.lt.s32.totalorder %s23, 3
      %p418 = pnand %p416, %p417
      %p419 = pneg %p418
      // Predicated region
      $region73: #{net_forward.1} parent=5 // pred_check
        _
      $region74: #{net_forward.1} parent=5 // pred_check_branch
        %421 = sbr.rel (%p418) target = $region76
      $region75: #{net_forward.1} parent=5 // pred_region
        %s422 = ssub.s32 %s23, 1
        %s423 = smul.u32 28, %s28
        %p424 = scmp.lt.s32.totalorder %s423, 55
        %s425 = scalar_select %p424, %s423, 55
        %s426 = smul.addr %s425, 2
        %s427 = smul.addr %s426, 4
        %s428 = scalar_lea.vmem %s0, %s427
        %p429 = pneg %p49
        %p430 = pneg %p46
        %p431 = pneg %p70
        %p432 = pneg %p67
        %p433 = pneg %p91
        %p434 = pneg %p88
        %p435 = pneg %p112
        %p436 = pneg %p109
        %p437 = pneg %p133
        %p438 = pneg %p130
        %p439 = pneg %p154
        %p440 = pneg %p151
        %p441 = pneg %p175
        %p442 = pneg %p172
        %p443 = pneg %p196
        %p444 = pneg %p193
        %p445 = pneg %p217
        %p446 = pneg %p214
        %p447 = pneg %p238
        %p448 = pneg %p235
        %p449 = pneg %p259
        %p450 = pneg %p256
        %p451 = pneg %p280
        %p452 = pneg %p277
        %p453 = pneg %p301
        %p454 = pneg %p298
        %p455 = pneg %p322
        %p456 = pneg %p319
        %p457 = pneg %p348
        %p458 = pneg %p345
        %s459 = sand.u32 %s335, 1
        %s460 = scalar_lea.sflag [#allocation3], %s459
        %s461 = sand.u32 %s335, 1
        %s462 = smul.addr %s461, 8
        %s463 = scalar_lea.vmem [#allocation2], %s462
        %s464 = smul.u32 28, %s28
        %p465 = scmp.lt.s32.totalorder %s464, 55
        %s466 = scalar_select %p465, %s464, 55
        %s467 = smul.addr %s466, 2
        %s468 = smul.addr %s467, 4
        %s469 = scalar_lea.vmem %s0, %s468
        %s470 = smul.u32 28, %s28
        %v472 = vld [vmem:[%s469] sm:$0xff]
        %v473 = vld [vmem:[%s469 + $0x8] sm:$0xff]
        %v474 = vld [vmem:[%s469 + $0x10] sm:$0xff]
        %v475 = vld [vmem:[%s469 + $0x18] sm:$0xff]
        %v476 = vld [vmem:[%s469 + $0x20] sm:$0xff]
        %v477 = vld [vmem:[%s469 + $0x28] sm:$0xff]
        %v478 = vld [vmem:[%s469 + $0x30] sm:$0xff]
        %v479 = vld [vmem:[%s469 + $0x38] sm:$0xff]
        %v480 = vld [vmem:[%s469 + $0x40] sm:$0xff]
        %v481 = vld [vmem:[%s469 + $0x48] sm:$0xff]
        %v482 = vld [vmem:[%s469 + $0x50] sm:$0xff]
        %v483 = vld [vmem:[%s469 + $0x58] sm:$0xff]
        %v484 = vld [vmem:[%s469 + $0x60] sm:$0xff]
        %v485 = vld [vmem:[%s469 + $0x68] sm:$0xff]
        %v486 = vld [vmem:[%s469 + $0x70] sm:$0xff]
        %v487 = vld [vmem:[%s469 + $0x78] sm:$0xff]
        %v488 = vld [vmem:[%s469 + $0x80] sm:$0xff]
        %v489 = vld [vmem:[%s469 + $0x88] sm:$0xff]
        %v490 = vld [vmem:[%s469 + $0x90] sm:$0xff]
        %v491 = vld [vmem:[%s469 + $0x98] sm:$0xff]
        %v492 = vld [vmem:[%s469 + $0xa0] sm:$0xff]
        %v493 = vld [vmem:[%s469 + $0xa8] sm:$0xff]
        %v494 = vld [vmem:[%s469 + $0xb0] sm:$0xff]
        %v495 = vld [vmem:[%s469 + $0xb8] sm:$0xff]
        %v496 = vld [vmem:[%s469 + $0xc0] sm:$0xff]
        %v497 = vld [vmem:[%s469 + $0xc8] sm:$0xff]
        %v498 = vld [vmem:[%s469 + $0xd0] sm:$0xff]
        %v499 = vld [vmem:[%s469 + $0xd8] sm:$0xff]
        %v500 = vld [vmem:[%s1] sm:$0xff]
        %v501 = vld [vmem:[%s1 + $0x8] sm:$0xf]
        %v502 = vld [vmem:[%s1 + $0xc] sm:$0xff]
        %v503 = vld [vmem:[%s1 + $0x14] sm:$0xf]
        %v504 = vld [vmem:[%s1 + $0x18] sm:$0xff]
        %v505 = vld [vmem:[%s1 + $0x20] sm:$0xf]
        %v506 = vld [vmem:[%s1 + $0x24] sm:$0xff]
        %v507 = vld [vmem:[%s1 + $0x2c] sm:$0xf]
        %v508 = vld [vmem:[%s1 + $0x30] sm:$0xff]
        %v509 = vld [vmem:[%s1 + $0x38] sm:$0xf]
        %v510 = vld [vmem:[%s1 + $0x3c] sm:$0xff]
        %v511 = vld [vmem:[%s1 + $0x44] sm:$0xf]
        %v512 = vld [vmem:[%s1 + $0x48] sm:$0xff]
        %v513 = vld [vmem:[%s1 + $0x50] sm:$0xf]
        %v514 = vld [vmem:[%s1 + $0x54] sm:$0xff]
        %v515 = vld [vmem:[%s1 + $0x5c] sm:$0xf]
        %v516 = vld [vmem:[%s1 + $0x60] sm:$0xff]
        %v517 = vld [vmem:[%s1 + $0x68] sm:$0xf]
        %v518 = vld [vmem:[%s1 + $0x6c] sm:$0xff]
        %v519 = vld [vmem:[%s1 + $0x74] sm:$0xf]
        %v520 = vld [vmem:[%s1 + $0x78] sm:$0xff]
        %v521 = vld [vmem:[%s1 + $0x80] sm:$0xf]
        %v522 = vld [vmem:[%s1 + $0x84] sm:$0xff]
        %v523 = vld [vmem:[%s1 + $0x8c] sm:$0xf]
        %v524 = vld [vmem:[%s1 + $0x90] sm:$0xff]
        %v525 = vld [vmem:[%s1 + $0x98] sm:$0xf]
        %v526 = vld [vmem:[%s1 + $0x9c] sm:$0xff]
        %v527 = vld [vmem:[%s1 + $0xa4] sm:$0xf]
        %v528 = vld [vmem:[%s1 + $0xa8] sm:$0xff]
        %v529 = vld [vmem:[%s1 + $0xb0] sm:$0xf]
        %v530 = vld [vmem:[%s1 + $0xb4] sm:$0xff]
        %v531 = vld [vmem:[%s1 + $0xbc] sm:$0xf]
        %v532 = vld [vmem:[%s1 + $0xc0] sm:$0xff]
        %v533 = vld [vmem:[%s1 + $0xc8] sm:$0xf]
        %v534 = vld [vmem:[%s1 + $0xcc] sm:$0x33]
        %v535 = vld [vmem:[%s1 + $0xd4] sm:$0x3]
        %v536 = vld [vmem:[%s2] sm:$0x7]
        %v538 = vlaneseq
        %v539 = vshrl.u32 %v538, 7
        %v540 = vsub.s32 0, %v539
        %v541 = vrot.slane %v536, %v540
        %v542 = vlaneseq
        %v543 = vshrl.u32 %v542, 7
        %v544 = vsub.s32 1, %v543
        %v545 = vrot.slane %v536, %v544
        %v546 = vlaneseq
        %v547 = vshrl.u32 %v546, 7
        %v548 = vsub.s32 2, %v547
        %v549 = vrot.slane %v536, %v548
        %v581 = vunpack.c.l.b16 %v472
        %v582 = vunpack.c.h.b16 %v472
        %v583 = vunpack.c.l.b16 %v473
        %v584 = vunpack.c.h.b16 %v473
        %v585 = vunpack.c.l.b16 %v474
        %v586 = vunpack.c.h.b16 %v474
        %v587 = vunpack.c.l.b16 %v475
        %v588 = vunpack.c.h.b16 %v475
        %v589 = vunpack.c.l.b16 %v476
        %v590 = vunpack.c.h.b16 %v476
        %v591 = vunpack.c.l.b16 %v477
        %v592 = vunpack.c.h.b16 %v477
        %v593 = vunpack.c.l.b16 %v478
        %v594 = vunpack.c.h.b16 %v478
        %v595 = vunpack.c.l.b16 %v479
        %v596 = vunpack.c.h.b16 %v479
        %v597 = vunpack.c.l.b16 %v480
        %v598 = vunpack.c.h.b16 %v480
        %v599 = vunpack.c.l.b16 %v481
        %v600 = vunpack.c.h.b16 %v481
        %v601 = vunpack.c.l.b16 %v482
        %v602 = vunpack.c.h.b16 %v482
        %v603 = vunpack.c.l.b16 %v483
        %v604 = vunpack.c.h.b16 %v483
        %v605 = vunpack.c.l.b16 %v484
        %v606 = vunpack.c.h.b16 %v484
        %v607 = vunpack.c.l.b16 %v485
        %v608 = vunpack.c.h.b16 %v485
        %v609 = vunpack.c.l.b16 %v486
        %v610 = vunpack.c.h.b16 %v486
        %v611 = vunpack.c.l.b16 %v487
        %v612 = vunpack.c.h.b16 %v487
        %v613 = vunpack.c.l.b16 %v488
        %v614 = vunpack.c.h.b16 %v488
        %v615 = vunpack.c.l.b16 %v489
        %v616 = vunpack.c.h.b16 %v489
        %v617 = vunpack.c.l.b16 %v490
        %v618 = vunpack.c.h.b16 %v490
        %v619 = vunpack.c.l.b16 %v491
        %v620 = vunpack.c.h.b16 %v491
        %v621 = vunpack.c.l.b16 %v492
        %v622 = vunpack.c.h.b16 %v492
        %v623 = vunpack.c.l.b16 %v493
        %v624 = vunpack.c.h.b16 %v493
        %v625 = vunpack.c.l.b16 %v494
        %v626 = vunpack.c.h.b16 %v494
        %v627 = vunpack.c.l.b16 %v495
        %v628 = vunpack.c.h.b16 %v495
        %v629 = vunpack.c.l.b16 %v496
        %v630 = vunpack.c.h.b16 %v496
        %v631 = vunpack.c.l.b16 %v497
        %v632 = vunpack.c.h.b16 %v497
        %v633 = vunpack.c.l.b16 %v498
        %v634 = vunpack.c.h.b16 %v498
        %v635 = vunpack.c.l.b16 %v499
        %v636 = vunpack.c.h.b16 %v499
        %v637 = vpack.c.b16 %v583, %v581
        %v638 = vpack.c.b16 %v584, %v582
        %v639 = vpack.c.b16 %v587, %v585
        %v640 = vpack.c.b16 %v588, %v586
        %v641 = vpack.c.b16 %v591, %v589
        %v642 = vpack.c.b16 %v592, %v590
        %v643 = vpack.c.b16 %v595, %v593
        %v644 = vpack.c.b16 %v596, %v594
        %v645 = vpack.c.b16 %v599, %v597
        %v646 = vpack.c.b16 %v600, %v598
        %v647 = vpack.c.b16 %v603, %v601
        %v648 = vpack.c.b16 %v604, %v602
        %v649 = vpack.c.b16 %v607, %v605
        %v650 = vpack.c.b16 %v608, %v606
        %v651 = vpack.c.b16 %v611, %v609
        %v652 = vpack.c.b16 %v612, %v610
        %v653 = vpack.c.b16 %v615, %v613
        %v654 = vpack.c.b16 %v616, %v614
        %v655 = vpack.c.b16 %v619, %v617
        %v656 = vpack.c.b16 %v620, %v618
        %v657 = vpack.c.b16 %v623, %v621
        %v658 = vpack.c.b16 %v624, %v622
        %v659 = vpack.c.b16 %v627, %v625
        %v660 = vpack.c.b16 %v628, %v626
        %v661 = vpack.c.b16 %v631, %v629
        %v662 = vpack.c.b16 %v632, %v630
        %v663 = vpack.c.b16 %v635, %v633
        %v664 = vpack.c.b16 %v636, %v634
        %v715 = vunpack.c.l.b16 %v500
        %v716 = vunpack.c.h.b16 %v500
        %v717 = vunpack.c.l.b16 %v501
        %v718 = vunpack.c.l.b16 %v502
        %v719 = vunpack.c.h.b16 %v502
        %v720 = vunpack.c.l.b16 %v503
        %v721 = vunpack.c.l.b16 %v504
        %v722 = vunpack.c.h.b16 %v504
        %v723 = vunpack.c.l.b16 %v505
        %v724 = vunpack.c.l.b16 %v506
        %v725 = vunpack.c.h.b16 %v506
        %v726 = vunpack.c.l.b16 %v507
        %v727 = vunpack.c.l.b16 %v508
        %v728 = vunpack.c.h.b16 %v508
        %v729 = vunpack.c.l.b16 %v509
        %v730 = vunpack.c.l.b16 %v510
        %v731 = vunpack.c.h.b16 %v510
        %v732 = vunpack.c.l.b16 %v511
        %v733 = vunpack.c.l.b16 %v512
        %v734 = vunpack.c.h.b16 %v512
        %v735 = vunpack.c.l.b16 %v513
        %v736 = vunpack.c.l.b16 %v514
        %v737 = vunpack.c.h.b16 %v514
        %v738 = vunpack.c.l.b16 %v515
        %v739 = vunpack.c.l.b16 %v516
        %v740 = vunpack.c.h.b16 %v516
        %v741 = vunpack.c.l.b16 %v517
        %v742 = vunpack.c.l.b16 %v518
        %v743 = vunpack.c.h.b16 %v518
        %v744 = vunpack.c.l.b16 %v519
        %v745 = vunpack.c.l.b16 %v520
        %v746 = vunpack.c.h.b16 %v520
        %v747 = vunpack.c.l.b16 %v521
        %v748 = vunpack.c.l.b16 %v522
        %v749 = vunpack.c.h.b16 %v522
        %v750 = vunpack.c.l.b16 %v523
        %v751 = vunpack.c.l.b16 %v524
        %v752 = vunpack.c.h.b16 %v524
        %v753 = vunpack.c.l.b16 %v525
        %v754 = vunpack.c.l.b16 %v526
        %v755 = vunpack.c.h.b16 %v526
        %v756 = vunpack.c.l.b16 %v527
        %v757 = vunpack.c.l.b16 %v528
        %v758 = vunpack.c.h.b16 %v528
        %v759 = vunpack.c.l.b16 %v529
        %v760 = vunpack.c.l.b16 %v530
        %v761 = vunpack.c.h.b16 %v530
        %v762 = vunpack.c.l.b16 %v531
        %v763 = vunpack.c.l.b16 %v532
        %v764 = vunpack.c.h.b16 %v532
        %v765 = vunpack.c.l.b16 %v533
        %v766 = vunpack.c.l.b16 %v534
        %v767 = vunpack.c.h.b16 %v534
        %v768 = vunpack.c.l.b16 %v535
        %v769 = vpack.c.b16 %v718, %v715
        %v770 = vpack.c.b16 %v719, %v716
        %v771 = vpack.c.b16 %v720, %v717
        %v772 = vpack.c.b16 %v724, %v721
        %v773 = vpack.c.b16 %v725, %v722
        %v774 = vpack.c.b16 %v726, %v723
        %v775 = vpack.c.b16 %v730, %v727
        %v776 = vpack.c.b16 %v731, %v728
        %v777 = vpack.c.b16 %v732, %v729
        %v778 = vpack.c.b16 %v736, %v733
        %v779 = vpack.c.b16 %v737, %v734
        %v780 = vpack.c.b16 %v738, %v735
        %v781 = vpack.c.b16 %v742, %v739
        %v782 = vpack.c.b16 %v743, %v740
        %v783 = vpack.c.b16 %v744, %v741
        %v784 = vpack.c.b16 %v748, %v745
        %v785 = vpack.c.b16 %v749, %v746
        %v786 = vpack.c.b16 %v750, %v747
        %v787 = vpack.c.b16 %v754, %v751
        %v788 = vpack.c.b16 %v755, %v752
        %v789 = vpack.c.b16 %v756, %v753
        %v790 = vpack.c.b16 %v760, %v757
        %v791 = vpack.c.b16 %v761, %v758
        %v792 = vpack.c.b16 %v762, %v759
        %v793 = vpack.c.b16 %v766, %v763
        %v794 = vpack.c.b16 %v767, %v764
        %v795 = vpack.c.b16 %v768, %v765
        %vm820 = vcmask 97280
        %v822 = vsel %vm820, %v638, 0
        %v825 = vsel %vm820, %v640, 0
        %v828 = vsel %vm820, %v642, 0
        %v831 = vsel %vm820, %v644, 0
        %v834 = vsel %vm820, %v646, 0
        %v837 = vsel %vm820, %v648, 0
        %v840 = vsel %vm820, %v650, 0
        %v843 = vsel %vm820, %v652, 0
        %v846 = vsel %vm820, %v654, 0
        %v849 = vsel %vm820, %v656, 0
        %v852 = vsel %vm820, %v658, 0
        %v855 = vsel %vm820, %v660, 0
        %v858 = vsel %vm820, %v662, 0
        %v861 = vsel %vm820, %v664, 0
        %vm863 = vcmask 1045504
        %v865 = vsel %vm863, %v793, 0
        %v868 = vsel %vm863, %v794, 0
        %v871 = vsel %vm863, %v795, 0
        %873 = vmatprep.subr.bf16.mxu0 %v770
        %874 = vmatpush1.bf16.msra.mxu0 %v769
        %875 = vmatprep.subr.bf16.mxu0 %v773
        %876 = vmatpush1.bf16.msra.mxu0 %v772
        %877 = vmatprep.subr.bf16.mxu0 %v776
        %878 = vmatpush1.bf16.msra.mxu0 %v775
        %879 = vmatprep.subr.bf16.mxu0 %v779
        %880 = vmatpush1.bf16.msra.mxu0 %v778
        %881 = vmatprep.subr.bf16.mxu0 %v782
        %882 = vmatpush1.bf16.msra.mxu0 %v781
        %883 = vmatprep.subr.bf16.mxu0 %v785
        %884 = vmatpush1.bf16.msra.mxu0 %v784
        %885 = vmatprep.subr.bf16.mxu0 %v788
        %886 = vmatpush1.bf16.msra.mxu0 %v787
        %887 = vmatprep.subr.bf16.mxu0 %v791
        %888 = vmatpush1.bf16.msra.mxu0 %v790
        %889 = vmatprep.subr.bf16.mxu0 %v868
        %890 = vmatpush1.bf16.msra.mxu0 %v865
        %891 = vmatprep.subr.bf16.mxu0 0
        %892 = vmatpush1.bf16.msra.mxu0 0
        %893 = vmatprep.subr.bf16.mxu0 0
        %894 = vmatpush1.bf16.msra.mxu0 0
        %895 = vmatprep.subr.bf16.mxu0 0
        %896 = vmatpush1.bf16.msra.mxu0 0
        %897 = vmatprep.subr.bf16.mxu0 0
        %898 = vmatpush1.bf16.msra.mxu0 0
        %899 = vmatprep.subr.bf16.mxu0 0
        %900 = vmatpush1.bf16.msra.mxu0 0
        %901 = vmatprep.subr.bf16.mxu0 0
        %902 = vmatpush1.bf16.msra.mxu0 0
        %903 = vmatprep.subr.bf16.mxu0 0
        %904 = vmatpush1.bf16.msra.mxu0 0
        %905 = vmatprep.mubr.bf16.mxu0 %v822
        %906 = vmatmul.mubr.bf16.gmra.mrb[0].mxu0 %v637
        %v907 = vpop.f32.mrb[0].mxu0
        %v908 = vadd.f32 %v541, %v907
        %v909 = vpop.f32.mrb[0].mxu0
        %v910 = vadd.f32 %v545, %v909
        %v911 = vpop.f32.mrb[0].mxu0
        %v912 = vadd.f32 %v541, %v911
        %v913 = vpop.f32.mrb[0].mxu0
        %v914 = vadd.f32 %v545, %v913
        %915 = vmatprep.mubr.bf16.mxu0 %v825
        %916 = vmatmul.mubr.bf16.gmra.mrb[0].mxu0 %v639
        %v917 = vpop.f32.mrb[0].mxu0
        %v918 = vadd.f32 %v541, %v917
        %v919 = vpop.f32.mrb[0].mxu0
        %v920 = vadd.f32 %v545, %v919
        %v921 = vpop.f32.mrb[0].mxu0
        %v922 = vadd.f32 %v541, %v921
        %v923 = vpop.f32.mrb[0].mxu0
        %v924 = vadd.f32 %v545, %v923
        %925 = vmatprep.mubr.bf16.mxu0 %v828
        %926 = vmatmul.mubr.bf16.gmra.mrb[0].mxu0 %v641
        %v927 = vpop.f32.mrb[0].mxu0
        %v928 = vadd.f32 %v541, %v927
        %v929 = vpop.f32.mrb[0].mxu0
        %v930 = vadd.f32 %v545, %v929
        %v931 = vpop.f32.mrb[0].mxu0
        %v932 = vadd.f32 %v541, %v931
        %v933 = vpop.f32.mrb[0].mxu0
        %v934 = vadd.f32 %v545, %v933
        %935 = vmatprep.mubr.bf16.mxu0 %v831
        %936 = vmatmul.mubr.bf16.gmra.mrb[0].mxu0 %v643
        %v937 = vpop.f32.mrb[0].mxu0
        %v938 = vadd.f32 %v541, %v937
        %v939 = vpop.f32.mrb[0].mxu0
        %v940 = vadd.f32 %v545, %v939
        %v941 = vpop.f32.mrb[0].mxu0
        %v942 = vadd.f32 %v541, %v941
        %v943 = vpop.f32.mrb[0].mxu0
        %v944 = vadd.f32 %v545, %v943
        %945 = vmatprep.mubr.bf16.mxu0 %v834
        %946 = vmatmul.mubr.bf16.gmra.mrb[0].mxu0 %v645
        %v947 = vpop.f32.mrb[0].mxu0
        %v948 = vadd.f32 %v541, %v947
        %v949 = vpop.f32.mrb[0].mxu0
        %v950 = vadd.f32 %v545, %v949
        %v951 = vpop.f32.mrb[0].mxu0
        %v952 = vadd.f32 %v541, %v951
        %v953 = vpop.f32.mrb[0].mxu0
        %v954 = vadd.f32 %v545, %v953
        %955 = vmatprep.mubr.bf16.mxu0 %v837
        %956 = vmatmul.mubr.bf16.gmra.mrb[0].mxu0 %v647
        %v957 = vpop.f32.mrb[0].mxu0
        %v958 = vadd.f32 %v541, %v957
        %v959 = vpop.f32.mrb[0].mxu0
        %v960 = vadd.f32 %v545, %v959
        %v961 = vpop.f32.mrb[0].mxu0
        %v962 = vadd.f32 %v541, %v961
        %v963 = vpop.f32.mrb[0].mxu0
        %v964 = vadd.f32 %v545, %v963
        %965 = vmatprep.mubr.bf16.mxu0 %v840
        %966 = vmatmul.mubr.bf16.gmra.mrb[0].mxu0 %v649
        %v967 = vpop.f32.mrb[0].mxu0
        %v968 = vadd.f32 %v541, %v967
        %v969 = vpop.f32.mrb[0].mxu0
        %v970 = vadd.f32 %v545, %v969
        %v971 = vpop.f32.mrb[0].mxu0
        %v972 = vadd.f32 %v541, %v971
        %v973 = vpop.f32.mrb[0].mxu0
        %v974 = vadd.f32 %v545, %v973
        %975 = vmatprep.mubr.bf16.mxu0 %v843
        %976 = vmatmul.mubr.bf16.gmra.mrb[0].mxu0 %v651
        %v977 = vpop.f32.mrb[0].mxu0
        %v978 = vadd.f32 %v541, %v977
        %v979 = vpop.f32.mrb[0].mxu0
        %v980 = vadd.f32 %v545, %v979
        %v981 = vpop.f32.mrb[0].mxu0
        %v982 = vadd.f32 %v541, %v981
        %v983 = vpop.f32.mrb[0].mxu0
        %v984 = vadd.f32 %v545, %v983
        %985 = vmatprep.mubr.bf16.mxu0 %v846
        %986 = vmatmul.mubr.bf16.gmra.mrb[0].mxu0 %v653
        %v987 = vpop.f32.mrb[0].mxu0
        %v988 = vadd.f32 %v541, %v987
        %v989 = vpop.f32.mrb[0].mxu0
        %v990 = vadd.f32 %v545, %v989
        %v991 = vpop.f32.mrb[0].mxu0
        %v992 = vadd.f32 %v541, %v991
        %v993 = vpop.f32.mrb[0].mxu0
        %v994 = vadd.f32 %v545, %v993
        %995 = vmatprep.mubr.bf16.mxu0 %v849
        %996 = vmatmul.mubr.bf16.gmra.mrb[0].mxu0 %v655
        %v997 = vpop.f32.mrb[0].mxu0
        %v998 = vadd.f32 %v541, %v997
        %v999 = vpop.f32.mrb[0].mxu0
        %v1000 = vadd.f32 %v545, %v999
        %v1001 = vpop.f32.mrb[0].mxu0
        %v1002 = vadd.f32 %v541, %v1001
        %v1003 = vpop.f32.mrb[0].mxu0
        %v1004 = vadd.f32 %v545, %v1003
        %1005 = vmatprep.mubr.bf16.mxu0 %v852
        %1006 = vmatmul.mubr.bf16.gmra.mrb[0].mxu0 %v657
        %v1007 = vpop.f32.mrb[0].mxu0
        %v1008 = vadd.f32 %v541, %v1007
        %v1009 = vpop.f32.mrb[0].mxu0
        %v1010 = vadd.f32 %v545, %v1009
        %v1011 = vpop.f32.mrb[0].mxu0
        %v1012 = vadd.f32 %v541, %v1011
        %v1013 = vpop.f32.mrb[0].mxu0
        %v1014 = vadd.f32 %v545, %v1013
        %1015 = vmatprep.mubr.bf16.mxu0 %v855
        %1016 = vmatmul.mubr.bf16.gmra.mrb[0].mxu0 %v659
        %v1017 = vpop.f32.mrb[0].mxu0
        %v1018 = vadd.f32 %v541, %v1017
        %v1019 = vpop.f32.mrb[0].mxu0
        %v1020 = vadd.f32 %v545, %v1019
        %v1021 = vpop.f32.mrb[0].mxu0
        %v1022 = vadd.f32 %v541, %v1021
        %v1023 = vpop.f32.mrb[0].mxu0
        %v1024 = vadd.f32 %v545, %v1023
        %1025 = vmatprep.mubr.bf16.mxu0 %v858
        %1026 = vmatmul.mubr.bf16.gmra.mrb[0].mxu0 %v661
        %v1027 = vpop.f32.mrb[0].mxu0
        %v1028 = vadd.f32 %v541, %v1027
        %v1029 = vpop.f32.mrb[0].mxu0
        %v1030 = vadd.f32 %v545, %v1029
        %v1031 = vpop.f32.mrb[0].mxu0
        %v1032 = vadd.f32 %v541, %v1031
        %v1033 = vpop.f32.mrb[0].mxu0
        %v1034 = vadd.f32 %v545, %v1033
        %1035 = vmatprep.mubr.bf16.mxu0 %v861
        %1036 = vmatmul.mubr.bf16.gmra.mrb[0].mxu0 %v663
        %v1037 = vpop.f32.mrb[0].mxu0
        %v1038 = vadd.f32 %v541, %v1037
        %v1039 = vpop.f32.mrb[0].mxu0
        %v1040 = vadd.f32 %v545, %v1039
        %v1041 = vpop.f32.mrb[0].mxu0
        %v1042 = vadd.f32 %v541, %v1041
        %v1043 = vpop.f32.mrb[0].mxu0
        %v1044 = vadd.f32 %v545, %v1043
        %1045 = vdwg.mxu0
        %1046 = vmatprep.subr.bf16.mxu0 0
        %1047 = vmatpush1.bf16.msra.mxu0 %v771
        %1048 = vmatprep.subr.bf16.mxu0 0
        %1049 = vmatpush1.bf16.msra.mxu0 %v774
        %1050 = vmatprep.subr.bf16.mxu0 0
        %1051 = vmatpush1.bf16.msra.mxu0 %v777
        %1052 = vmatprep.subr.bf16.mxu0 0
        %1053 = vmatpush1.bf16.msra.mxu0 %v780
        %1054 = vmatprep.subr.bf16.mxu0 0
        %1055 = vmatpush1.bf16.msra.mxu0 %v783
        %1056 = vmatprep.subr.bf16.mxu0 0
        %1057 = vmatpush1.bf16.msra.mxu0 %v786
        %1058 = vmatprep.subr.bf16.mxu0 0
        %1059 = vmatpush1.bf16.msra.mxu0 %v789
        %1060 = vmatprep.subr.bf16.mxu0 0
        %1061 = vmatpush1.bf16.msra.mxu0 %v792
        %1062 = vmatprep.subr.bf16.mxu0 0
        %1063 = vmatpush1.bf16.msra.mxu0 %v871
        %1064 = vmatprep.subr.bf16.mxu0 0
        %1065 = vmatpush1.bf16.msra.mxu0 0
        %1066 = vmatprep.subr.bf16.mxu0 0
        %1067 = vmatpush1.bf16.msra.mxu0 0
        %1068 = vmatprep.subr.bf16.mxu0 0
        %1069 = vmatpush1.bf16.msra.mxu0 0
        %1070 = vmatprep.subr.bf16.mxu0 0
        %1071 = vmatpush1.bf16.msra.mxu0 0
        %1072 = vmatprep.subr.bf16.mxu0 0
        %1073 = vmatpush1.bf16.msra.mxu0 0
        %1074 = vmatprep.subr.bf16.mxu0 0
        %1075 = vmatpush1.bf16.msra.mxu0 0
        %1076 = vmatprep.subr.bf16.mxu0 0
        %1077 = vmatpush1.bf16.msra.mxu0 0
        %1078 = vmatprep.mubr.bf16.mxu0 %v822
        %1079 = vmatmul.mubr.bf16.gmra.mrb[0].mxu0 %v637
        %v1080 = vpop.f32.mrb[0].mxu0
        %v1081 = vadd.f32 %v549, %v1080
        %v1082 = vpop.f32.mrb[0].mxu0
        %v1083 = vpop.f32.mrb[0].mxu0
        %v1084 = vadd.f32 %v549, %v1083
        %v1085 = vpop.f32.mrb[0].mxu0
        %1086 = vmatprep.mubr.bf16.mxu0 %v825
        %1087 = vmatmul.mubr.bf16.gmra.mrb[0].mxu0 %v639
        %v1088 = vpop.f32.mrb[0].mxu0
        %v1089 = vadd.f32 %v549, %v1088
        %v1090 = vpop.f32.mrb[0].mxu0
        %v1091 = vpop.f32.mrb[0].mxu0
        %v1092 = vadd.f32 %v549, %v1091
        %v1093 = vpop.f32.mrb[0].mxu0
        %1094 = vmatprep.mubr.bf16.mxu0 %v828
        %1095 = vmatmul.mubr.bf16.gmra.mrb[0].mxu0 %v641
        %v1096 = vpop.f32.mrb[0].mxu0
        %v1097 = vadd.f32 %v549, %v1096
        %v1098 = vpop.f32.mrb[0].mxu0
        %v1099 = vpop.f32.mrb[0].mxu0
        %v1100 = vadd.f32 %v549, %v1099
        %v1101 = vpop.f32.mrb[0].mxu0
        %1102 = vmatprep.mubr.bf16.mxu0 %v831
        %1103 = vmatmul.mubr.bf16.gmra.mrb[0].mxu0 %v643
        %v1104 = vpop.f32.mrb[0].mxu0
        %v1105 = vadd.f32 %v549, %v1104
        %v1106 = vpop.f32.mrb[0].mxu0
        %v1107 = vpop.f32.mrb[0].mxu0
        %v1108 = vadd.f32 %v549, %v1107
        %v1109 = vpop.f32.mrb[0].mxu0
        %1110 = vmatprep.mubr.bf16.mxu0 %v834
        %1111 = vmatmul.mubr.bf16.gmra.mrb[0].mxu0 %v645
        %v1112 = vpop.f32.mrb[0].mxu0
        %v1113 = vadd.f32 %v549, %v1112
        %v1114 = vpop.f32.mrb[0].mxu0
        %v1115 = vpop.f32.mrb[0].mxu0
        %v1116 = vadd.f32 %v549, %v1115
        %v1117 = vpop.f32.mrb[0].mxu0
        %1118 = vmatprep.mubr.bf16.mxu0 %v837
        %1119 = vmatmul.mubr.bf16.gmra.mrb[0].mxu0 %v647
        %v1120 = vpop.f32.mrb[0].mxu0
        %v1121 = vadd.f32 %v549, %v1120
        %v1122 = vpop.f32.mrb[0].mxu0
        %v1123 = vpop.f32.mrb[0].mxu0
        %v1124 = vadd.f32 %v549, %v1123
        %v1125 = vpop.f32.mrb[0].mxu0
        %1126 = vmatprep.mubr.bf16.mxu0 %v840
        %1127 = vmatmul.mubr.bf16.gmra.mrb[0].mxu0 %v649
        %v1128 = vpop.f32.mrb[0].mxu0
        %v1129 = vadd.f32 %v549, %v1128
        %v1130 = vpop.f32.mrb[0].mxu0
        %v1131 = vpop.f32.mrb[0].mxu0
        %v1132 = vadd.f32 %v549, %v1131
        %v1133 = vpop.f32.mrb[0].mxu0
        %1134 = vmatprep.mubr.bf16.mxu0 %v843
        %1135 = vmatmul.mubr.bf16.gmra.mrb[0].mxu0 %v651
        %v1136 = vpop.f32.mrb[0].mxu0
        %v1137 = vadd.f32 %v549, %v1136
        %v1138 = vpop.f32.mrb[0].mxu0
        %v1139 = vpop.f32.mrb[0].mxu0
        %v1140 = vadd.f32 %v549, %v1139
        %v1141 = vpop.f32.mrb[0].mxu0
        %1142 = vmatprep.mubr.bf16.mxu0 %v846
        %1143 = vmatmul.mubr.bf16.gmra.mrb[0].mxu0 %v653
        %v1144 = vpop.f32.mrb[0].mxu0
        %v1145 = vadd.f32 %v549, %v1144
        %v1146 = vpop.f32.mrb[0].mxu0
        %v1147 = vpop.f32.mrb[0].mxu0
        %v1148 = vadd.f32 %v549, %v1147
        %v1149 = vpop.f32.mrb[0].mxu0
        %1150 = vmatprep.mubr.bf16.mxu0 %v849
        %1151 = vmatmul.mubr.bf16.gmra.mrb[0].mxu0 %v655
        %v1152 = vpop.f32.mrb[0].mxu0
        %v1153 = vadd.f32 %v549, %v1152
        %v1154 = vpop.f32.mrb[0].mxu0
        %v1155 = vpop.f32.mrb[0].mxu0
        %v1156 = vadd.f32 %v549, %v1155
        %v1157 = vpop.f32.mrb[0].mxu0
        %1158 = vmatprep.mubr.bf16.mxu0 %v852
        %1159 = vmatmul.mubr.bf16.gmra.mrb[0].mxu0 %v657
        %v1160 = vpop.f32.mrb[0].mxu0
        %v1161 = vadd.f32 %v549, %v1160
        %v1162 = vpop.f32.mrb[0].mxu0
        %v1163 = vpop.f32.mrb[0].mxu0
        %v1164 = vadd.f32 %v549, %v1163
        %v1165 = vpop.f32.mrb[0].mxu0
        %1166 = vmatprep.mubr.bf16.mxu0 %v855
        %1167 = vmatmul.mubr.bf16.gmra.mrb[0].mxu0 %v659
        %v1168 = vpop.f32.mrb[0].mxu0
        %v1169 = vadd.f32 %v549, %v1168
        %v1170 = vpop.f32.mrb[0].mxu0
        %v1171 = vpop.f32.mrb[0].mxu0
        %v1172 = vadd.f32 %v549, %v1171
        %v1173 = vpop.f32.mrb[0].mxu0
        %1174 = vmatprep.mubr.bf16.mxu0 %v858
        %1175 = vmatmul.mubr.bf16.gmra.mrb[0].mxu0 %v661
        %v1176 = vpop.f32.mrb[0].mxu0
        %v1177 = vadd.f32 %v549, %v1176
        %v1178 = vpop.f32.mrb[0].mxu0
        %v1179 = vpop.f32.mrb[0].mxu0
        %v1180 = vadd.f32 %v549, %v1179
        %v1181 = vpop.f32.mrb[0].mxu0
        %1182 = vmatprep.mubr.bf16.mxu0 %v861
        %1183 = vmatmul.mubr.bf16.gmra.mrb[0].mxu0 %v663
        %v1184 = vpop.f32.mrb[0].mxu0
        %v1185 = vadd.f32 %v549, %v1184
        %v1186 = vpop.f32.mrb[0].mxu0
        %v1187 = vpop.f32.mrb[0].mxu0
        %v1188 = vadd.f32 %v549, %v1187
        %v1189 = vpop.f32.mrb[0].mxu0
        %1190 = vdwg.mxu0
        %v1191 = vmax.f32 %v908, 0.0
        %v1192 = vmax.f32 %v910, 0.0
        %v1193 = vmax.f32 %v1081, 0.0
        %v1194 = vmax.f32 %v912, 0.0
        %v1195 = vmax.f32 %v914, 0.0
        %v1196 = vmax.f32 %v1084, 0.0
        %v1197 = vmax.f32 %v918, 0.0
        %v1198 = vmax.f32 %v920, 0.0
        %v1199 = vmax.f32 %v1089, 0.0
        %v1200 = vmax.f32 %v922, 0.0
        %v1201 = vmax.f32 %v924, 0.0
        %v1202 = vmax.f32 %v1092, 0.0
        %v1203 = vmax.f32 %v928, 0.0
        %v1204 = vmax.f32 %v930, 0.0
        %v1205 = vmax.f32 %v1097, 0.0
        %v1206 = vmax.f32 %v932, 0.0
        %v1207 = vmax.f32 %v934, 0.0
        %v1208 = vmax.f32 %v1100, 0.0
        %v1209 = vmax.f32 %v938, 0.0
        %v1210 = vmax.f32 %v940, 0.0
        %v1211 = vmax.f32 %v1105, 0.0
        %v1212 = vmax.f32 %v942, 0.0
        %v1213 = vmax.f32 %v944, 0.0
        %v1214 = vmax.f32 %v1108, 0.0
        %v1215 = vmax.f32 %v948, 0.0
        %v1216 = vmax.f32 %v950, 0.0
        %v1217 = vmax.f32 %v1113, 0.0
        %v1218 = vmax.f32 %v952, 0.0
        %v1219 = vmax.f32 %v954, 0.0
        %v1220 = vmax.f32 %v1116, 0.0
        %v1221 = vmax.f32 %v958, 0.0
        %v1222 = vmax.f32 %v960, 0.0
        %v1223 = vmax.f32 %v1121, 0.0
        %v1224 = vmax.f32 %v962, 0.0
        %v1225 = vmax.f32 %v964, 0.0
        %v1226 = vmax.f32 %v1124, 0.0
        %v1227 = vmax.f32 %v968, 0.0
        %v1228 = vmax.f32 %v970, 0.0
        %v1229 = vmax.f32 %v1129, 0.0
        %v1230 = vmax.f32 %v972, 0.0
        %v1231 = vmax.f32 %v974, 0.0
        %v1232 = vmax.f32 %v1132, 0.0
        %v1233 = vmax.f32 %v978, 0.0
        %v1234 = vmax.f32 %v980, 0.0
        %v1235 = vmax.f32 %v1137, 0.0
        %v1236 = vmax.f32 %v982, 0.0
        %v1237 = vmax.f32 %v984, 0.0
        %v1238 = vmax.f32 %v1140, 0.0
        %v1239 = vmax.f32 %v988, 0.0
        %v1240 = vmax.f32 %v990, 0.0
        %v1241 = vmax.f32 %v1145, 0.0
        %v1242 = vmax.f32 %v992, 0.0
        %v1243 = vmax.f32 %v994, 0.0
        %v1244 = vmax.f32 %v1148, 0.0
        %v1245 = vmax.f32 %v998, 0.0
        %v1246 = vmax.f32 %v1000, 0.0
        %v1247 = vmax.f32 %v1153, 0.0
        %v1248 = vmax.f32 %v1002, 0.0
        %v1249 = vmax.f32 %v1004, 0.0
        %v1250 = vmax.f32 %v1156, 0.0
        %v1251 = vmax.f32 %v1008, 0.0
        %v1252 = vmax.f32 %v1010, 0.0
        %v1253 = vmax.f32 %v1161, 0.0
        %v1254 = vmax.f32 %v1012, 0.0
        %v1255 = vmax.f32 %v1014, 0.0
        %v1256 = vmax.f32 %v1164, 0.0
        %v1257 = vmax.f32 %v1018, 0.0
        %v1258 = vmax.f32 %v1020, 0.0
        %v1259 = vmax.f32 %v1169, 0.0
        %v1260 = vmax.f32 %v1022, 0.0
        %v1261 = vmax.f32 %v1024, 0.0
        %v1262 = vmax.f32 %v1172, 0.0
        %v1263 = vmax.f32 %v1028, 0.0
        %v1264 = vmax.f32 %v1030, 0.0
        %v1265 = vmax.f32 %v1177, 0.0
        %v1266 = vmax.f32 %v1032, 0.0
        %v1267 = vmax.f32 %v1034, 0.0
        %v1268 = vmax.f32 %v1180, 0.0
        %v1269 = vmax.f32 %v1038, 0.0
        %v1270 = vmax.f32 %v1040, 0.0
        %v1271 = vmax.f32 %v1185, 0.0
        %v1272 = vmax.f32 %v1042, 0.0
        %v1273 = vmax.f32 %v1044, 0.0
        %v1274 = vmax.f32 %v1188, 0.0
        %vm1359 = vcmask 1046528
        %v1360 = vrot.slane %v1191, 1
        %v1361 = vrot.slane %v1194, 1
        %v1362 = vsel %vm1359, %v1360, %v1361
        %v1363 = vrot.slane %v1192, 1
        %v1364 = vrot.slane %v1195, 1
        %v1365 = vsel %vm1359, %v1363, %v1364
        %v1366 = vrot.slane %v1193, 1
        %v1367 = vrot.slane %v1196, 1
        %v1368 = vsel %vm1359, %v1366, %v1367
        %v1369 = vrot.slane %v1197, 1
        %v1370 = vsel %vm1359, %v1361, %v1369
        %v1371 = vrot.slane %v1198, 1
        %v1372 = vsel %vm1359, %v1364, %v1371
        %v1373 = vrot.slane %v1199, 1
        %v1374 = vsel %vm1359, %v1367, %v1373
        %v1375 = vrot.slane %v1200, 1
        %v1376 = vsel %vm1359, %v1369, %v1375
        %v1377 = vrot.slane %v1201, 1
        %v1378 = vsel %vm1359, %v1371, %v1377
        %v1379 = vrot.slane %v1202, 1
        %v1380 = vsel %vm1359, %v1373, %v1379
        %v1381 = vrot.slane %v1203, 1
        %v1382 = vsel %vm1359, %v1375, %v1381
        %v1383 = vrot.slane %v1204, 1
        %v1384 = vsel %vm1359, %v1377, %v1383
        %v1385 = vrot.slane %v1205, 1
        %v1386 = vsel %vm1359, %v1379, %v1385
        %v1387 = vrot.slane %v1206, 1
        %v1388 = vsel %vm1359, %v1381, %v1387
        %v1389 = vrot.slane %v1207, 1
        %v1390 = vsel %vm1359, %v1383, %v1389
        %v1391 = vrot.slane %v1208, 1
        %v1392 = vsel %vm1359, %v1385, %v1391
        %v1393 = vrot.slane %v1209, 1
        %v1394 = vsel %vm1359, %v1387, %v1393
        %v1395 = vrot.slane %v1210, 1
        %v1396 = vsel %vm1359, %v1389, %v1395
        %v1397 = vrot.slane %v1211, 1
        %v1398 = vsel %vm1359, %v1391, %v1397
        %v1399 = vrot.slane %v1212, 1
        %v1400 = vsel %vm1359, %v1393, %v1399
        %v1401 = vrot.slane %v1213, 1
        %v1402 = vsel %vm1359, %v1395, %v1401
        %v1403 = vrot.slane %v1214, 1
        %v1404 = vsel %vm1359, %v1397, %v1403
        %v1405 = vrot.slane %v1215, 1
        %v1406 = vsel %vm1359, %v1399, %v1405
        %v1407 = vrot.slane %v1216, 1
        %v1408 = vsel %vm1359, %v1401, %v1407
        %v1409 = vrot.slane %v1217, 1
        %v1410 = vsel %vm1359, %v1403, %v1409
        %v1411 = vrot.slane %v1218, 1
        %v1412 = vsel %vm1359, %v1405, %v1411
        %v1413 = vrot.slane %v1219, 1
        %v1414 = vsel %vm1359, %v1407, %v1413
        %v1415 = vrot.slane %v1220, 1
        %v1416 = vsel %vm1359, %v1409, %v1415
        %v1417 = vrot.slane %v1221, 1
        %v1418 = vsel %vm1359, %v1411, %v1417
        %v1419 = vrot.slane %v1222, 1
        %v1420 = vsel %vm1359, %v1413, %v1419
        %v1421 = vrot.slane %v1223, 1
        %v1422 = vsel %vm1359, %v1415, %v1421
        %v1423 = vrot.slane %v1224, 1
        %v1424 = vsel %vm1359, %v1417, %v1423
        %v1425 = vrot.slane %v1225, 1
        %v1426 = vsel %vm1359, %v1419, %v1425
        %v1427 = vrot.slane %v1226, 1
        %v1428 = vsel %vm1359, %v1421, %v1427
        %v1429 = vrot.slane %v1227, 1
        %v1430 = vsel %vm1359, %v1423, %v1429
        %v1431 = vrot.slane %v1228, 1
        %v1432 = vsel %vm1359, %v1425, %v1431
        %v1433 = vrot.slane %v1229, 1
        %v1434 = vsel %vm1359, %v1427, %v1433
        %v1435 = vrot.slane %v1230, 1
        %v1436 = vsel %vm1359, %v1429, %v1435
        %v1437 = vrot.slane %v1231, 1
        %v1438 = vsel %vm1359, %v1431, %v1437
        %v1439 = vrot.slane %v1232, 1
        %v1440 = vsel %vm1359, %v1433, %v1439
        %v1441 = vrot.slane %v1233, 1
        %v1442 = vsel %vm1359, %v1435, %v1441
        %v1443 = vrot.slane %v1234, 1
        %v1444 = vsel %vm1359, %v1437, %v1443
        %v1445 = vrot.slane %v1235, 1
        %v1446 = vsel %vm1359, %v1439, %v1445
        %v1447 = vrot.slane %v1236, 1
        %v1448 = vsel %vm1359, %v1441, %v1447
        %v1449 = vrot.slane %v1237, 1
        %v1450 = vsel %vm1359, %v1443, %v1449
        %v1451 = vrot.slane %v1238, 1
        %v1452 = vsel %vm1359, %v1445, %v1451
        %v1453 = vrot.slane %v1239, 1
        %v1454 = vsel %vm1359, %v1447, %v1453
        %v1455 = vrot.slane %v1240, 1
        %v1456 = vsel %vm1359, %v1449, %v1455
        %v1457 = vrot.slane %v1241, 1
        %v1458 = vsel %vm1359, %v1451, %v1457
        %v1459 = vrot.slane %v1242, 1
        %v1460 = vsel %vm1359, %v1453, %v1459
        %v1461 = vrot.slane %v1243, 1
        %v1462 = vsel %vm1359, %v1455, %v1461
        %v1463 = vrot.slane %v1244, 1
        %v1464 = vsel %vm1359, %v1457, %v1463
        %v1465 = vrot.slane %v1245, 1
        %v1466 = vsel %vm1359, %v1459, %v1465
        %v1467 = vrot.slane %v1246, 1
        %v1468 = vsel %vm1359, %v1461, %v1467
        %v1469 = vrot.slane %v1247, 1
        %v1470 = vsel %vm1359, %v1463, %v1469
        %v1471 = vrot.slane %v1248, 1
        %v1472 = vsel %vm1359, %v1465, %v1471
        %v1473 = vrot.slane %v1249, 1
        %v1474 = vsel %vm1359, %v1467, %v1473
        %v1475 = vrot.slane %v1250, 1
        %v1476 = vsel %vm1359, %v1469, %v1475
        %v1477 = vrot.slane %v1251, 1
        %v1478 = vsel %vm1359, %v1471, %v1477
        %v1479 = vrot.slane %v1252, 1
        %v1480 = vsel %vm1359, %v1473, %v1479
        %v1481 = vrot.slane %v1253, 1
        %v1482 = vsel %vm1359, %v1475, %v1481
        %v1483 = vrot.slane %v1254, 1
        %v1484 = vsel %vm1359, %v1477, %v1483
        %v1485 = vrot.slane %v1255, 1
        %v1486 = vsel %vm1359, %v1479, %v1485
        %v1487 = vrot.slane %v1256, 1
        %v1488 = vsel %vm1359, %v1481, %v1487
        %v1489 = vrot.slane %v1257, 1
        %v1490 = vsel %vm1359, %v1483, %v1489
        %v1491 = vrot.slane %v1258, 1
        %v1492 = vsel %vm1359, %v1485, %v1491
        %v1493 = vrot.slane %v1259, 1
        %v1494 = vsel %vm1359, %v1487, %v1493
        %v1495 = vrot.slane %v1260, 1
        %v1496 = vsel %vm1359, %v1489, %v1495
        %v1497 = vrot.slane %v1261, 1
        %v1498 = vsel %vm1359, %v1491, %v1497
        %v1499 = vrot.slane %v1262, 1
        %v1500 = vsel %vm1359, %v1493, %v1499
        %v1501 = vrot.slane %v1263, 1
        %v1502 = vsel %vm1359, %v1495, %v1501
        %v1503 = vrot.slane %v1264, 1
        %v1504 = vsel %vm1359, %v1497, %v1503
        %v1505 = vrot.slane %v1265, 1
        %v1506 = vsel %vm1359, %v1499, %v1505
        %v1507 = vrot.slane %v1266, 1
        %v1508 = vsel %vm1359, %v1501, %v1507
        %v1509 = vrot.slane %v1267, 1
        %v1510 = vsel %vm1359, %v1503, %v1509
        %v1511 = vrot.slane %v1268, 1
        %v1512 = vsel %vm1359, %v1505, %v1511
        %v1513 = vrot.slane %v1269, 1
        %v1514 = vsel %vm1359, %v1507, %v1513
        %v1515 = vrot.slane %v1270, 1
        %v1516 = vsel %vm1359, %v1509, %v1515
        %v1517 = vrot.slane %v1271, 1
        %v1518 = vsel %vm1359, %v1511, %v1517
        %v1519 = vrot.slane %v1272, 1
        %v1520 = vsel %vm1359, %v1513, %v1519
        %v1521 = vrot.slane %v1273, 1
        %v1522 = vsel %vm1359, %v1515, %v1521
        %v1523 = vrot.slane %v1274, 1
        %v1524 = vsel %vm1359, %v1517, %v1523
        %v1609 = vmax.f32 %v1191, %v1362
        %v1610 = vmax.f32 %v1192, %v1365
        %v1611 = vmax.f32 %v1193, %v1368
        %v1612 = vmax.f32 %v1194, %v1370
        %v1613 = vmax.f32 %v1195, %v1372
        %v1614 = vmax.f32 %v1196, %v1374
        %v1615 = vmax.f32 %v1197, %v1376
        %v1616 = vmax.f32 %v1198, %v1378
        %v1617 = vmax.f32 %v1199, %v1380
        %v1618 = vmax.f32 %v1200, %v1382
        %v1619 = vmax.f32 %v1201, %v1384
        %v1620 = vmax.f32 %v1202, %v1386
        %v1621 = vmax.f32 %v1203, %v1388
        %v1622 = vmax.f32 %v1204, %v1390
        %v1623 = vmax.f32 %v1205, %v1392
        %v1624 = vmax.f32 %v1206, %v1394
        %v1625 = vmax.f32 %v1207, %v1396
        %v1626 = vmax.f32 %v1208, %v1398
        %v1627 = vmax.f32 %v1209, %v1400
        %v1628 = vmax.f32 %v1210, %v1402
        %v1629 = vmax.f32 %v1211, %v1404
        %v1630 = vmax.f32 %v1212, %v1406
        %v1631 = vmax.f32 %v1213, %v1408
        %v1632 = vmax.f32 %v1214, %v1410
        %v1633 = vmax.f32 %v1215, %v1412
        %v1634 = vmax.f32 %v1216, %v1414
        %v1635 = vmax.f32 %v1217, %v1416
        %v1636 = vmax.f32 %v1218, %v1418
        %v1637 = vmax.f32 %v1219, %v1420
        %v1638 = vmax.f32 %v1220, %v1422
        %v1639 = vmax.f32 %v1221, %v1424
        %v1640 = vmax.f32 %v1222, %v1426
        %v1641 = vmax.f32 %v1223, %v1428
        %v1642 = vmax.f32 %v1224, %v1430
        %v1643 = vmax.f32 %v1225, %v1432
        %v1644 = vmax.f32 %v1226, %v1434
        %v1645 = vmax.f32 %v1227, %v1436
        %v1646 = vmax.f32 %v1228, %v1438
        %v1647 = vmax.f32 %v1229, %v1440
        %v1648 = vmax.f32 %v1230, %v1442
        %v1649 = vmax.f32 %v1231, %v1444
        %v1650 = vmax.f32 %v1232, %v1446
        %v1651 = vmax.f32 %v1233, %v1448
        %v1652 = vmax.f32 %v1234, %v1450
        %v1653 = vmax.f32 %v1235, %v1452
        %v1654 = vmax.f32 %v1236, %v1454
        %v1655 = vmax.f32 %v1237, %v1456
        %v1656 = vmax.f32 %v1238, %v1458
        %v1657 = vmax.f32 %v1239, %v1460
        %v1658 = vmax.f32 %v1240, %v1462
        %v1659 = vmax.f32 %v1241, %v1464
        %v1660 = vmax.f32 %v1242, %v1466
        %v1661 = vmax.f32 %v1243, %v1468
        %v1662 = vmax.f32 %v1244, %v1470
        %v1663 = vmax.f32 %v1245, %v1472
        %v1664 = vmax.f32 %v1246, %v1474
        %v1665 = vmax.f32 %v1247, %v1476
        %v1666 = vmax.f32 %v1248, %v1478
        %v1667 = vmax.f32 %v1249, %v1480
        %v1668 = vmax.f32 %v1250, %v1482
        %v1669 = vmax.f32 %v1251, %v1484
        %v1670 = vmax.f32 %v1252, %v1486
        %v1671 = vmax.f32 %v1253, %v1488
        %v1672 = vmax.f32 %v1254, %v1490
        %v1673 = vmax.f32 %v1255, %v1492
        %v1674 = vmax.f32 %v1256, %v1494
        %v1675 = vmax.f32 %v1257, %v1496
        %v1676 = vmax.f32 %v1258, %v1498
        %v1677 = vmax.f32 %v1259, %v1500
        %v1678 = vmax.f32 %v1260, %v1502
        %v1679 = vmax.f32 %v1261, %v1504
        %v1680 = vmax.f32 %v1262, %v1506
        %v1681 = vmax.f32 %v1263, %v1508
        %v1682 = vmax.f32 %v1264, %v1510
        %v1683 = vmax.f32 %v1265, %v1512
        %v1684 = vmax.f32 %v1266, %v1514
        %v1685 = vmax.f32 %v1267, %v1516
        %v1686 = vmax.f32 %v1268, %v1518
        %v1687 = vmax.f32 %v1269, %v1520
        %v1688 = vmax.f32 %v1270, %v1522
        %v1689 = vmax.f32 %v1271, %v1524
        %v1690 = vmax.f32 %v1272, %v1519
        %v1691 = vmax.f32 %v1273, %v1521
        %v1692 = vmax.f32 %v1274, %v1523
        %v1693 = vpack.c.bf16 %v1612, %v1609
        %v1694 = vpack.c.bf16 %v1613, %v1610
        %v1695 = vpack.c.bf16 %v1614, %v1611
        %v1696 = vpack.c.bf16 %v1618, %v1615
        %v1697 = vpack.c.bf16 %v1619, %v1616
        %v1698 = vpack.c.bf16 %v1620, %v1617
        %v1699 = vpack.c.bf16 %v1624, %v1621
        %v1700 = vpack.c.bf16 %v1625, %v1622
        %v1701 = vpack.c.bf16 %v1626, %v1623
        %v1702 = vpack.c.bf16 %v1630, %v1627
        %v1703 = vpack.c.bf16 %v1631, %v1628
        %v1704 = vpack.c.bf16 %v1632, %v1629
        %v1705 = vpack.c.bf16 %v1636, %v1633
        %v1706 = vpack.c.bf16 %v1637, %v1634
        %v1707 = vpack.c.bf16 %v1638, %v1635
        %v1708 = vpack.c.bf16 %v1642, %v1639
        %v1709 = vpack.c.bf16 %v1643, %v1640
        %v1710 = vpack.c.bf16 %v1644, %v1641
        %v1711 = vpack.c.bf16 %v1648, %v1645
        %v1712 = vpack.c.bf16 %v1649, %v1646
        %v1713 = vpack.c.bf16 %v1650, %v1647
        %v1714 = vpack.c.bf16 %v1654, %v1651
        %v1715 = vpack.c.bf16 %v1655, %v1652
        %v1716 = vpack.c.bf16 %v1656, %v1653
        %v1717 = vpack.c.bf16 %v1660, %v1657
        %v1718 = vpack.c.bf16 %v1661, %v1658
        %v1719 = vpack.c.bf16 %v1662, %v1659
        %v1720 = vpack.c.bf16 %v1666, %v1663
        %v1721 = vpack.c.bf16 %v1667, %v1664
        %v1722 = vpack.c.bf16 %v1668, %v1665
        %v1723 = vpack.c.bf16 %v1672, %v1669
        %v1724 = vpack.c.bf16 %v1673, %v1670
        %v1725 = vpack.c.bf16 %v1674, %v1671
        %v1726 = vpack.c.bf16 %v1678, %v1675
        %v1727 = vpack.c.bf16 %v1679, %v1676
        %v1728 = vpack.c.bf16 %v1680, %v1677
        %v1729 = vpack.c.bf16 %v1684, %v1681
        %v1730 = vpack.c.bf16 %v1685, %v1682
        %v1731 = vpack.c.bf16 %v1686, %v1683
        %v1732 = vpack.c.bf16 %v1690, %v1687
        %v1733 = vpack.c.bf16 %v1691, %v1688
        %v1734 = vpack.c.bf16 %v1692, %v1689
        %v1735 = vld [vmem:[%s3] sm:$0xff]
        %v1736 = vld [vmem:[%s3 + $0x8] sm:$0xff]
        %v1737 = vld [vmem:[%s3 + $0x10] sm:$0xff]
        %v1738 = vld [vmem:[%s3 + $0x18] sm:$0xff]
        %v1739 = vld [vmem:[%s3 + $0x20] sm:$0xff]
        %v1740 = vld [vmem:[%s3 + $0x28] sm:$0xff]
        %v1741 = vld [vmem:[%s3 + $0x30] sm:$0xff]
        %v1742 = vld [vmem:[%s3 + $0x38] sm:$0xff]
        %v1743 = vld [vmem:[%s3 + $0x40] sm:$0xff]
        %v1744 = vld [vmem:[%s3 + $0x48] sm:$0xff]
        %v1745 = vld [vmem:[%s3 + $0x50] sm:$0xff]
        %v1746 = vld [vmem:[%s3 + $0x58] sm:$0xff]
        %v1759 = vunpack.c.l.b16 %v1735
        %v1760 = vunpack.c.h.b16 %v1735
        %v1761 = vunpack.c.l.b16 %v1736
        %v1762 = vunpack.c.h.b16 %v1736
        %v1763 = vunpack.c.l.b16 %v1737
        %v1764 = vunpack.c.h.b16 %v1737
        %v1765 = vunpack.c.l.b16 %v1738
        %v1766 = vunpack.c.h.b16 %v1738
        %v1767 = vunpack.c.l.b16 %v1739
        %v1768 = vunpack.c.h.b16 %v1739
        %v1769 = vunpack.c.l.b16 %v1740
        %v1770 = vunpack.c.h.b16 %v1740
        %v1771 = vunpack.c.l.b16 %v1741
        %v1772 = vunpack.c.h.b16 %v1741
        %v1773 = vunpack.c.l.b16 %v1742
        %v1774 = vunpack.c.h.b16 %v1742
        %v1775 = vunpack.c.l.b16 %v1743
        %v1776 = vunpack.c.h.b16 %v1743
        %v1777 = vunpack.c.l.b16 %v1744
        %v1778 = vunpack.c.h.b16 %v1744
        %v1779 = vunpack.c.l.b16 %v1745
        %v1780 = vunpack.c.h.b16 %v1745
        %v1781 = vunpack.c.l.b16 %v1746
        %v1782 = vunpack.c.h.b16 %v1746
        %v1783 = vpack.c.b16 %v1761, %v1759
        %v1784 = vpack.c.b16 %v1762, %v1760
        %v1785 = vpack.c.b16 %v1765, %v1763
        %v1786 = vpack.c.b16 %v1766, %v1764
        %v1787 = vpack.c.b16 %v1769, %v1767
        %v1788 = vpack.c.b16 %v1770, %v1768
        %v1789 = vpack.c.b16 %v1773, %v1771
        %v1790 = vpack.c.b16 %v1774, %v1772
        %v1791 = vpack.c.b16 %v1777, %v1775
        %v1792 = vpack.c.b16 %v1778, %v1776
        %v1793 = vpack.c.b16 %v1781, %v1779
        %v1794 = vpack.c.b16 %v1782, %v1780
        %vm1801 = vcmask 777216
        %v1803 = vsel %vm1801, %v1784, 0
        %v1806 = vsel %vm1801, %v1786, 0
        %v1809 = vsel %vm1801, %v1788, 0
        %v1812 = vsel %vm1801, %v1790, 0
        %v1815 = vsel %vm1801, %v1792, 0
        %v1818 = vsel %vm1801, %v1794, 0
        %vm1820 = vcmask 1047552
        %v1821 = vsel %vm1359, 4294967295, 65535
        %v1822 = vsel %vm1820, %v1821, 0
        %v1824 = vand.u32 %v1732, %v1822
        %v1827 = vand.u32 %v1733, %v1822
        %v1830 = vand.u32 %v1734, %v1822
        %1832 = vmatprep.subr.bf16.mxu0 %v1694
        %1833 = vmatpush1.bf16.msra.mxu0 %v1693
        %1834 = vmatprep.subr.bf16.mxu0 %v1697
        %1835 = vmatpush1.bf16.msra.mxu0 %v1696
        %1836 = vmatprep.subr.bf16.mxu0 %v1700
        %1837 = vmatpush1.bf16.msra.mxu0 %v1699
        %1838 = vmatprep.subr.bf16.mxu0 %v1703
        %1839 = vmatpush1.bf16.msra.mxu0 %v1702
        %1840 = vmatprep.subr.bf16.mxu0 %v1706
        %1841 = vmatpush1.bf16.msra.mxu0 %v1705
        %1842 = vmatprep.subr.bf16.mxu0 %v1709
        %1843 = vmatpush1.bf16.msra.mxu0 %v1708
        %1844 = vmatprep.subr.bf16.mxu0 %v1712
        %1845 = vmatpush1.bf16.msra.mxu0 %v1711
        %1846 = vmatprep.subr.bf16.mxu0 %v1715
        %1847 = vmatpush1.bf16.msra.mxu0 %v1714
        %1848 = vmatprep.subr.bf16.mxu0 %v1718
        %1849 = vmatpush1.bf16.msra.mxu0 %v1717
        %1850 = vmatprep.subr.bf16.mxu0 %v1721
        %1851 = vmatpush1.bf16.msra.mxu0 %v1720
        %1852 = vmatprep.subr.bf16.mxu0 %v1724
        %1853 = vmatpush1.bf16.msra.mxu0 %v1723
        %1854 = vmatprep.subr.bf16.mxu0 %v1727
        %1855 = vmatpush1.bf16.msra.mxu0 %v1726
        %1856 = vmatprep.subr.bf16.mxu0 %v1730
        %1857 = vmatpush1.bf16.msra.mxu0 %v1729
        %1858 = vmatprep.subr.bf16.mxu0 %v1827
        %1859 = vmatpush1.bf16.msra.mxu0 %v1824
        %1860 = vmatprep.subr.bf16.mxu0 0
        %1861 = vmatpush1.bf16.msra.mxu0 0
        %1862 = vmatprep.subr.bf16.mxu0 0
        %1863 = vmatpush1.bf16.msra.mxu0 0
        %1864 = vmatprep.mubr.bf16.mxu0 %v1803
        %1865 = vmatmul.mubr.bf16.gmra.mrb[0].mxu0 %v1783
        %v1866 = vpop.f32.mrb[0].mxu0
        %v1867 = vadd.f32 0.0, %v1866
        %v1868 = vpop.f32.mrb[0].mxu0
        %v1869 = vadd.f32 0.0, %v1868
        %v1870 = vpop.f32.mrb[0].mxu0
        %v1871 = vadd.f32 0.0, %v1870
        %v1872 = vpop.f32.mrb[0].mxu0
        %v1873 = vadd.f32 0.0, %v1872
        %1874 = vmatprep.mubr.bf16.mxu0 %v1806
        %1875 = vmatmul.mubr.bf16.gmra.mrb[0].mxu0 %v1785
        %v1876 = vpop.f32.mrb[0].mxu0
        %v1877 = vadd.f32 0.0, %v1876
        %v1878 = vpop.f32.mrb[0].mxu0
        %v1879 = vadd.f32 0.0, %v1878
        %v1880 = vpop.f32.mrb[0].mxu0
        %v1881 = vadd.f32 0.0, %v1880
        %v1882 = vpop.f32.mrb[0].mxu0
        %v1883 = vadd.f32 0.0, %v1882
        %1884 = vmatprep.mubr.bf16.mxu0 %v1809
        %1885 = vmatmul.mubr.bf16.gmra.mrb[0].mxu0 %v1787
        %v1886 = vpop.f32.mrb[0].mxu0
        %v1887 = vadd.f32 0.0, %v1886
        %v1888 = vpop.f32.mrb[0].mxu0
        %v1889 = vadd.f32 0.0, %v1888
        %v1890 = vpop.f32.mrb[0].mxu0
        %v1891 = vadd.f32 0.0, %v1890
        %v1892 = vpop.f32.mrb[0].mxu0
        %v1893 = vadd.f32 0.0, %v1892
        %1894 = vmatprep.mubr.bf16.mxu0 %v1812
        %1895 = vmatmul.mubr.bf16.gmra.mrb[0].mxu0 %v1789
        %v1896 = vpop.f32.mrb[0].mxu0
        %v1897 = vadd.f32 0.0, %v1896
        %v1898 = vpop.f32.mrb[0].mxu0
        %v1899 = vadd.f32 0.0, %v1898
        %v1900 = vpop.f32.mrb[0].mxu0
        %v1901 = vadd.f32 0.0, %v1900
        %v1902 = vpop.f32.mrb[0].mxu0
        %v1903 = vadd.f32 0.0, %v1902
        %1904 = vmatprep.mubr.bf16.mxu0 %v1815
        %1905 = vmatmul.mubr.bf16.gmra.mrb[0].mxu0 %v1791
        %v1906 = vpop.f32.mrb[0].mxu0
        %v1907 = vadd.f32 0.0, %v1906
        %v1908 = vpop.f32.mrb[0].mxu0
        %v1909 = vadd.f32 0.0, %v1908
        %v1910 = vpop.f32.mrb[0].mxu0
        %v1911 = vadd.f32 0.0, %v1910
        %v1912 = vpop.f32.mrb[0].mxu0
        %v1913 = vadd.f32 0.0, %v1912
        %1914 = vmatprep.mubr.bf16.mxu0 %v1818
        %1915 = vmatmul.mubr.bf16.gmra.mrb[0].mxu0 %v1793
        %v1916 = vpop.f32.mrb[0].mxu0
        %v1917 = vadd.f32 0.0, %v1916
        %v1918 = vpop.f32.mrb[0].mxu0
        %v1919 = vadd.f32 0.0, %v1918
        %v1920 = vpop.f32.mrb[0].mxu0
        %v1921 = vadd.f32 0.0, %v1920
        %v1922 = vpop.f32.mrb[0].mxu0
        %v1923 = vadd.f32 0.0, %v1922
        %1924 = vdwg.mxu0
        %1925 = vmatprep.subr.bf16.mxu0 0
        %1926 = vmatpush1.bf16.msra.mxu0 %v1695
        %1927 = vmatprep.subr.bf16.mxu0 0
        %1928 = vmatpush1.bf16.msra.mxu0 %v1698
        %1929 = vmatprep.subr.bf16.mxu0 0
        %1930 = vmatpush1.bf16.msra.mxu0 %v1701
        %1931 = vmatprep.subr.bf16.mxu0 0
        %1932 = vmatpush1.bf16.msra.mxu0 %v1704
        %1933 = vmatprep.subr.bf16.mxu0 0
        %1934 = vmatpush1.bf16.msra.mxu0 %v1707
        %1935 = vmatprep.subr.bf16.mxu0 0
        %1936 = vmatpush1.bf16.msra.mxu0 %v1710
        %1937 = vmatprep.subr.bf16.mxu0 0
        %1938 = vmatpush1.bf16.msra.mxu0 %v1713
        %1939 = vmatprep.subr.bf16.mxu0 0
        %1940 = vmatpush1.bf16.msra.mxu0 %v1716
        %1941 = vmatprep.subr.bf16.mxu0 0
        %1942 = vmatpush1.bf16.msra.mxu0 %v1719
        %1943 = vmatprep.subr.bf16.mxu0 0
        %1944 = vmatpush1.bf16.msra.mxu0 %v1722
        %1945 = vmatprep.subr.bf16.mxu0 0
        %1946 = vmatpush1.bf16.msra.mxu0 %v1725
        %1947 = vmatprep.subr.bf16.mxu0 0
        %1948 = vmatpush1.bf16.msra.mxu0 %v1728
        %1949 = vmatprep.subr.bf16.mxu0 0
        %1950 = vmatpush1.bf16.msra.mxu0 %v1731
        %1951 = vmatprep.subr.bf16.mxu0 0
        %1952 = vmatpush1.bf16.msra.mxu0 %v1830
        %1953 = vmatprep.subr.bf16.mxu0 0
        %1954 = vmatpush1.bf16.msra.mxu0 0
        %1955 = vmatprep.subr.bf16.mxu0 0
        %1956 = vmatpush1.bf16.msra.mxu0 0
        %1957 = vmatprep.mubr.bf16.mxu0 %v1803
        %1958 = vmatmul.mubr.bf16.gmra.mrb[0].mxu0 %v1783
        %v1959 = vpop.f32.mrb[0].mxu0
        %v1960 = vadd.f32 0.0, %v1959
        %v1961 = vpop.f32.mrb[0].mxu0
        %v1962 = vpop.f32.mrb[0].mxu0
        %v1963 = vadd.f32 0.0, %v1962
        %v1964 = vpop.f32.mrb[0].mxu0
        %1965 = vmatprep.mubr.bf16.mxu0 %v1806
        %1966 = vmatmul.mubr.bf16.gmra.mrb[0].mxu0 %v1785
        %v1967 = vpop.f32.mrb[0].mxu0
        %v1968 = vadd.f32 0.0, %v1967
        %v1969 = vpop.f32.mrb[0].mxu0
        %v1970 = vpop.f32.mrb[0].mxu0
        %v1971 = vadd.f32 0.0, %v1970
        %v1972 = vpop.f32.mrb[0].mxu0
        %1973 = vmatprep.mubr.bf16.mxu0 %v1809
        %1974 = vmatmul.mubr.bf16.gmra.mrb[0].mxu0 %v1787
        %v1975 = vpop.f32.mrb[0].mxu0
        %v1976 = vadd.f32 0.0, %v1975
        %v1977 = vpop.f32.mrb[0].mxu0
        %v1978 = vpop.f32.mrb[0].mxu0
        %v1979 = vadd.f32 0.0, %v1978
        %v1980 = vpop.f32.mrb[0].mxu0
        %1981 = vmatprep.mubr.bf16.mxu0 %v1812
        %1982 = vmatmul.mubr.bf16.gmra.mrb[0].mxu0 %v1789
        %v1983 = vpop.f32.mrb[0].mxu0
        %v1984 = vadd.f32 0.0, %v1983
        %v1985 = vpop.f32.mrb[0].mxu0
        %v1986 = vpop.f32.mrb[0].mxu0
        %v1987 = vadd.f32 0.0, %v1986
        %v1988 = vpop.f32.mrb[0].mxu0
        %1989 = vmatprep.mubr.bf16.mxu0 %v1815
        %1990 = vmatmul.mubr.bf16.gmra.mrb[0].mxu0 %v1791
        %v1991 = vpop.f32.mrb[0].mxu0
        %v1992 = vadd.f32 0.0, %v1991
        %v1993 = vpop.f32.mrb[0].mxu0
        %v1994 = vpop.f32.mrb[0].mxu0
        %v1995 = vadd.f32 0.0, %v1994
        %v1996 = vpop.f32.mrb[0].mxu0
        %1997 = vmatprep.mubr.bf16.mxu0 %v1818
        %1998 = vmatmul.mubr.bf16.gmra.mrb[0].mxu0 %v1793
        %v1999 = vpop.f32.mrb[0].mxu0
        %v2000 = vadd.f32 0.0, %v1999
        %v2001 = vpop.f32.mrb[0].mxu0
        %v2002 = vpop.f32.mrb[0].mxu0
        %v2003 = vadd.f32 0.0, %v2002
        %v2004 = vpop.f32.mrb[0].mxu0
        %2005 = vdwg.mxu0
        %v2006 = vpack.c.bf16 %v1871, %v1867
        %v2007 = vpack.c.bf16 %v1873, %v1869
        %v2008 = vpack.c.bf16 %v1963, %v1960
        %v2009 = vpack.c.bf16 %v1881, %v1877
        %v2010 = vpack.c.bf16 %v1883, %v1879
        %v2011 = vpack.c.bf16 %v1971, %v1968
        %v2012 = vpack.c.bf16 %v1891, %v1887
        %v2013 = vpack.c.bf16 %v1893, %v1889
        %v2014 = vpack.c.bf16 %v1979, %v1976
        %v2015 = vpack.c.bf16 %v1901, %v1897
        %v2016 = vpack.c.bf16 %v1903, %v1899
        %v2017 = vpack.c.bf16 %v1987, %v1984
        %v2018 = vpack.c.bf16 %v1911, %v1907
        %v2019 = vpack.c.bf16 %v1913, %v1909
        %v2020 = vpack.c.bf16 %v1995, %v1992
        %v2021 = vpack.c.bf16 %v1921, %v1917
        %v2022 = vpack.c.bf16 %v1923, %v1919
        %v2023 = vpack.c.bf16 %v2003, %v2000
        %v2024 = vld [vmem:[%s4] sm:$0xff]
        %v2025 = vld [vmem:[%s4 + $0x8] sm:$0xff]
        %v2026 = vld [vmem:[%s4 + $0x10] sm:$0xff]
        %v2027 = vld [vmem:[%s4 + $0x18] sm:$0xff]
        %v2028 = vld [vmem:[%s4 + $0x20] sm:$0xff]
        %v2029 = vld [vmem:[%s4 + $0x28] sm:$0xff]
        %v2030 = vld [vmem:[%s4 + $0x30] sm:$0xff]
        %v2031 = vld [vmem:[%s4 + $0x38] sm:$0xff]
        %v2032 = vld [vmem:[%s4 + $0x40] sm:$0xff]
        %v2033 = vld [vmem:[%s4 + $0x48] sm:$0xff]
        %v2034 = vld [vmem:[%s4 + $0x50] sm:$0xff]
        %v2035 = vld [vmem:[%s4 + $0x58] sm:$0xff]
        %v2036 = vld [vmem:[%s4 + $0x60] sm:$0xff]
        %v2037 = vld [vmem:[%s4 + $0x68] sm:$0xff]
        %v2038 = vld [vmem:[%s4 + $0x70] sm:$0xff]
        %v2039 = vld [vmem:[%s4 + $0x78] sm:$0xff]
        %v2040 = vld [vmem:[%s4 + $0x80] sm:$0xff]
        %v2041 = vld [vmem:[%s4 + $0x88] sm:$0xff]
        %v2042 = vld [vmem:[%s4 + $0x90] sm:$0xff]
        %v2043 = vld [vmem:[%s4 + $0x98] sm:$0xff]
        %v2044 = vld [vmem:[%s4 + $0xa0] sm:$0xff]
        %v2045 = vld [vmem:[%s4 + $0xa8] sm:$0xff]
        %v2046 = vld [vmem:[%s4 + $0xb0] sm:$0xff]
        %v2047 = vld [vmem:[%s4 + $0xb8] sm:$0xff]
        %v2048 = vld [vmem:[%s4 + $0xc0] sm:$0xff]
        %v2049 = vld [vmem:[%s4 + $0xc8] sm:$0xff]
        %v2050 = vld [vmem:[%s4 + $0xd0] sm:$0xff]
        %v2051 = vld [vmem:[%s4 + $0xd8] sm:$0xff]
        %v2052 = vld [vmem:[%s4 + $0xe0] sm:$0xff]
        %v2053 = vld [vmem:[%s4 + $0xe8] sm:$0xff]
        %v2054 = vld [vmem:[%s4 + $0xf0] sm:$0xff]
        %v2055 = vld [vmem:[%s4 + $0xf8] sm:$0xff]
        %v2056 = vld [vmem:[%s4 + $0x100] sm:$0xff]
        %v2057 = vld [vmem:[%s4 + $0x108] sm:$0xff]
        %v2058 = vld [vmem:[%s4 + $0x110] sm:$0xff]
        %v2059 = vld [vmem:[%s4 + $0x118] sm:$0xff]
        %v2060 = vld [vmem:[%s4 + $0x120] sm:$0xff]
        %v2061 = vld [vmem:[%s4 + $0x128] sm:$0xff]
        %v2062 = vld [vmem:[%s4 + $0x130] sm:$0xff]
        %v2063 = vld [vmem:[%s4 + $0x138] sm:$0xff]
        %v2064 = vld [vmem:[%s4 + $0x140] sm:$0xff]
        %v2065 = vld [vmem:[%s4 + $0x148] sm:$0xff]
        %v2066 = vld [vmem:[%s4 + $0x150] sm:$0xff]
        %v2067 = vld [vmem:[%s4 + $0x158] sm:$0xff]
        %v2068 = vld [vmem:[%s4 + $0x160] sm:$0xff]
        %v2069 = vld [vmem:[%s4 + $0x168] sm:$0xff]
        %v2070 = vld [vmem:[%s4 + $0x170] sm:$0xff]
        %v2071 = vld [vmem:[%s4 + $0x178] sm:$0xff]
        %v2120 = vunpack.c.l.b16 %v2024
        %v2121 = vunpack.c.h.b16 %v2024
        %v2122 = vunpack.c.l.b16 %v2025
        %v2123 = vunpack.c.h.b16 %v2025
        %v2124 = vunpack.c.l.b16 %v2026
        %v2125 = vunpack.c.h.b16 %v2026
        %v2126 = vunpack.c.l.b16 %v2027
        %v2127 = vunpack.c.h.b16 %v2027
        %v2128 = vunpack.c.l.b16 %v2028
        %v2129 = vunpack.c.h.b16 %v2028
        %v2130 = vunpack.c.l.b16 %v2029
        %v2131 = vunpack.c.h.b16 %v2029
        %v2132 = vunpack.c.l.b16 %v2030
        %v2133 = vunpack.c.h.b16 %v2030
        %v2134 = vunpack.c.l.b16 %v2031
        %v2135 = vunpack.c.h.b16 %v2031
        %v2136 = vunpack.c.l.b16 %v2032
        %v2137 = vunpack.c.h.b16 %v2032
        %v2138 = vunpack.c.l.b16 %v2033
        %v2139 = vunpack.c.h.b16 %v2033
        %v2140 = vunpack.c.l.b16 %v2034
        %v2141 = vunpack.c.h.b16 %v2034
        %v2142 = vunpack.c.l.b16 %v2035
        %v2143 = vunpack.c.h.b16 %v2035
        %v2144 = vunpack.c.l.b16 %v2036
        %v2145 = vunpack.c.h.b16 %v2036
        %v2146 = vunpack.c.l.b16 %v2037
        %v2147 = vunpack.c.h.b16 %v2037
        %v2148 = vunpack.c.l.b16 %v2038
        %v2149 = vunpack.c.h.b16 %v2038
        %v2150 = vunpack.c.l.b16 %v2039
        %v2151 = vunpack.c.h.b16 %v2039
        %v2152 = vunpack.c.l.b16 %v2040
        %v2153 = vunpack.c.h.b16 %v2040
        %v2154 = vunpack.c.l.b16 %v2041
        %v2155 = vunpack.c.h.b16 %v2041
        %v2156 = vunpack.c.l.b16 %v2042
        %v2157 = vunpack.c.h.b16 %v2042
        %v2158 = vunpack.c.l.b16 %v2043
        %v2159 = vunpack.c.h.b16 %v2043
        %v2160 = vunpack.c.l.b16 %v2044
        %v2161 = vunpack.c.h.b16 %v2044
        %v2162 = vunpack.c.l.b16 %v2045
        %v2163 = vunpack.c.h.b16 %v2045
        %v2164 = vunpack.c.l.b16 %v2046
        %v2165 = vunpack.c.h.b16 %v2046
        %v2166 = vunpack.c.l.b16 %v2047
        %v2167 = vunpack.c.h.b16 %v2047
        %v2168 = vunpack.c.l.b16 %v2048
        %v2169 = vunpack.c.h.b16 %v2048
        %v2170 = vunpack.c.l.b16 %v2049
        %v2171 = vunpack.c.h.b16 %v2049
        %v2172 = vunpack.c.l.b16 %v2050
        %v2173 = vunpack.c.h.b16 %v2050
        %v2174 = vunpack.c.l.b16 %v2051
        %v2175 = vunpack.c.h.b16 %v2051
        %v2176 = vunpack.c.l.b16 %v2052
        %v2177 = vunpack.c.h.b16 %v2052
        %v2178 = vunpack.c.l.b16 %v2053
        %v2179 = vunpack.c.h.b16 %v2053
        %v2180 = vunpack.c.l.b16 %v2054
        %v2181 = vunpack.c.h.b16 %v2054
        %v2182 = vunpack.c.l.b16 %v2055
        %v2183 = vunpack.c.h.b16 %v2055
        %v2184 = vunpack.c.l.b16 %v2056
        %v2185 = vunpack.c.h.b16 %v2056
        %v2186 = vunpack.c.l.b16 %v2057
        %v2187 = vunpack.c.h.b16 %v2057
        %v2188 = vunpack.c.l.b16 %v2058
        %v2189 = vunpack.c.h.b16 %v2058
        %v2190 = vunpack.c.l.b16 %v2059
        %v2191 = vunpack.c.h.b16 %v2059
        %v2192 = vunpack.c.l.b16 %v2060
        %v2193 = vunpack.c.h.b16 %v2060
        %v2194 = vunpack.c.l.b16 %v2061
        %v2195 = vunpack.c.h.b16 %v2061
        %v2196 = vunpack.c.l.b16 %v2062
        %v2197 = vunpack.c.h.b16 %v2062
        %v2198 = vunpack.c.l.b16 %v2063
        %v2199 = vunpack.c.h.b16 %v2063
        %v2200 = vunpack.c.l.b16 %v2064
        %v2201 = vunpack.c.h.b16 %v2064
        %v2202 = vunpack.c.l.b16 %v2065
        %v2203 = vunpack.c.h.b16 %v2065
        %v2204 = vunpack.c.l.b16 %v2066
        %v2205 = vunpack.c.h.b16 %v2066
        %v2206 = vunpack.c.l.b16 %v2067
        %v2207 = vunpack.c.h.b16 %v2067
        %v2208 = vunpack.c.l.b16 %v2068
        %v2209 = vunpack.c.h.b16 %v2068
        %v2210 = vunpack.c.l.b16 %v2069
        %v2211 = vunpack.c.h.b16 %v2069
        %v2212 = vunpack.c.l.b16 %v2070
        %v2213 = vunpack.c.h.b16 %v2070
        %v2214 = vunpack.c.l.b16 %v2071
        %v2215 = vunpack.c.h.b16 %v2071
        %v2216 = vpack.c.b16 %v2122, %v2120
        %v2217 = vpack.c.b16 %v2123, %v2121
        %v2218 = vpack.c.b16 %v2126, %v2124
        %v2219 = vpack.c.b16 %v2127, %v2125
        %v2220 = vpack.c.b16 %v2130, %v2128
        %v2221 = vpack.c.b16 %v2131, %v2129
        %v2222 = vpack.c.b16 %v2134, %v2132
        %v2223 = vpack.c.b16 %v2135, %v2133
        %v2224 = vpack.c.b16 %v2138, %v2136
        %v2225 = vpack.c.b16 %v2139, %v2137
        %v2226 = vpack.c.b16 %v2142, %v2140
        %v2227 = vpack.c.b16 %v2143, %v2141
        %v2228 = vpack.c.b16 %v2146, %v2144
        %v2229 = vpack.c.b16 %v2147, %v2145
        %v2230 = vpack.c.b16 %v2150, %v2148
        %v2231 = vpack.c.b16 %v2151, %v2149
        %v2232 = vpack.c.b16 %v2154, %v2152
        %v2233 = vpack.c.b16 %v2155, %v2153
        %v2234 = vpack.c.b16 %v2158, %v2156
        %v2235 = vpack.c.b16 %v2159, %v2157
        %v2236 = vpack.c.b16 %v2162, %v2160
        %v2237 = vpack.c.b16 %v2163, %v2161
        %v2238 = vpack.c.b16 %v2166, %v2164
        %v2239 = vpack.c.b16 %v2167, %v2165
        %v2240 = vpack.c.b16 %v2170, %v2168
        %v2241 = vpack.c.b16 %v2171, %v2169
        %v2242 = vpack.c.b16 %v2174, %v2172
        %v2243 = vpack.c.b16 %v2175, %v2173
        %v2244 = vpack.c.b16 %v2178, %v2176
        %v2245 = vpack.c.b16 %v2179, %v2177
        %v2246 = vpack.c.b16 %v2182, %v2180
        %v2247 = vpack.c.b16 %v2183, %v2181
        %v2248 = vpack.c.b16 %v2186, %v2184
        %v2249 = vpack.c.b16 %v2187, %v2185
        %v2250 = vpack.c.b16 %v2190, %v2188
        %v2251 = vpack.c.b16 %v2191, %v2189
        %v2252 = vpack.c.b16 %v2194, %v2192
        %v2253 = vpack.c.b16 %v2195, %v2193
        %v2254 = vpack.c.b16 %v2198, %v2196
        %v2255 = vpack.c.b16 %v2199, %v2197
        %v2256 = vpack.c.b16 %v2202, %v2200
        %v2257 = vpack.c.b16 %v2203, %v2201
        %v2258 = vpack.c.b16 %v2206, %v2204
        %v2259 = vpack.c.b16 %v2207, %v2205
        %v2260 = vpack.c.b16 %v2210, %v2208
        %v2261 = vpack.c.b16 %v2211, %v2209
        %v2262 = vpack.c.b16 %v2214, %v2212
        %v2263 = vpack.c.b16 %v2215, %v2213
        %2312 = vmatprep.subr.bf16.mxu0 %v2217
        %2313 = vmatpush1.bf16.msra.mxu0 %v2216
        %2314 = vmatprep.subr.bf16.mxu0 %v2219
        %2315 = vmatpush1.bf16.msra.mxu0 %v2218
        %2316 = vmatprep.subr.bf16.mxu0 %v2221
        %2317 = vmatpush1.bf16.msra.mxu0 %v2220
        %2318 = vmatprep.subr.bf16.mxu0 %v2223
        %2319 = vmatpush1.bf16.msra.mxu0 %v2222
        %2320 = vmatprep.subr.bf16.mxu0 %v2225
        %2321 = vmatpush1.bf16.msra.mxu0 %v2224
        %2322 = vmatprep.subr.bf16.mxu0 %v2227
        %2323 = vmatpush1.bf16.msra.mxu0 %v2226
        %2324 = vmatprep.subr.bf16.mxu0 %v2229
        %2325 = vmatpush1.bf16.msra.mxu0 %v2228
        %2326 = vmatprep.subr.bf16.mxu0 %v2231
        %2327 = vmatpush1.bf16.msra.mxu0 %v2230
        %2328 = vmatprep.subr.bf16.mxu0 %v2233
        %2329 = vmatpush1.bf16.msra.mxu0 %v2232
        %2330 = vmatprep.subr.bf16.mxu0 %v2235
        %2331 = vmatpush1.bf16.msra.mxu0 %v2234
        %2332 = vmatprep.subr.bf16.mxu0 %v2237
        %2333 = vmatpush1.bf16.msra.mxu0 %v2236
        %2334 = vmatprep.subr.bf16.mxu0 %v2239
        %2335 = vmatpush1.bf16.msra.mxu0 %v2238
        %2336 = vmatprep.subr.bf16.mxu0 %v2241
        %2337 = vmatpush1.bf16.msra.mxu0 %v2240
        %2338 = vmatprep.subr.bf16.mxu0 %v2243
        %2339 = vmatpush1.bf16.msra.mxu0 %v2242
        %2340 = vmatprep.subr.bf16.mxu0 %v2245
        %2341 = vmatpush1.bf16.msra.mxu0 %v2244
        %2342 = vmatprep.subr.bf16.mxu0 %v2247
        %2343 = vmatpush1.bf16.msra.mxu0 %v2246
        %2344 = vmatprep.mubr.bf16.mxu0 %v2007
        %2345 = vmatmul.mubr.bf16.gmra.mrb[0].mxu0 %v2006
        %v2346 = vpop.f32.mrb[0].mxu0
        %v2347 = vadd.f32 0.0, %v2346
        %v2348 = vpop.f32.mrb[0].mxu0
        %v2349 = vadd.f32 0.0, %v2348
        %v2350 = vpop.f32.mrb[0].mxu0
        %v2351 = vadd.f32 0.0, %v2350
        %v2352 = vpop.f32.mrb[0].mxu0
        %v2353 = vadd.f32 0.0, %v2352
        %2354 = vmatprep.mubr.bf16.mxu0 %v2010
        %2355 = vmatmul.mubr.bf16.gmra.mrb[0].mxu0 %v2009
        %v2356 = vpop.f32.mrb[0].mxu0
        %v2357 = vadd.f32 0.0, %v2356
        %v2358 = vpop.f32.mrb[0].mxu0
        %v2359 = vadd.f32 0.0, %v2358
        %v2360 = vpop.f32.mrb[0].mxu0
        %v2361 = vadd.f32 0.0, %v2360
        %v2362 = vpop.f32.mrb[0].mxu0
        %v2363 = vadd.f32 0.0, %v2362
        %2364 = vmatprep.mubr.bf16.mxu0 %v2013
        %2365 = vmatmul.mubr.bf16.gmra.mrb[0].mxu0 %v2012
        %v2366 = vpop.f32.mrb[0].mxu0
        %v2367 = vadd.f32 0.0, %v2366
        %v2368 = vpop.f32.mrb[0].mxu0
        %v2369 = vadd.f32 0.0, %v2368
        %v2370 = vpop.f32.mrb[0].mxu0
        %v2371 = vadd.f32 0.0, %v2370
        %v2372 = vpop.f32.mrb[0].mxu0
        %v2373 = vadd.f32 0.0, %v2372
        %2374 = vmatprep.mubr.bf16.mxu0 %v2016
        %2375 = vmatmul.mubr.bf16.gmra.mrb[0].mxu0 %v2015
        %v2376 = vpop.f32.mrb[0].mxu0
        %v2377 = vadd.f32 0.0, %v2376
        %v2378 = vpop.f32.mrb[0].mxu0
        %v2379 = vadd.f32 0.0, %v2378
        %v2380 = vpop.f32.mrb[0].mxu0
        %v2381 = vadd.f32 0.0, %v2380
        %v2382 = vpop.f32.mrb[0].mxu0
        %v2383 = vadd.f32 0.0, %v2382
        %2384 = vmatprep.mubr.bf16.mxu0 %v2019
        %2385 = vmatmul.mubr.bf16.gmra.mrb[0].mxu0 %v2018
        %v2386 = vpop.f32.mrb[0].mxu0
        %v2387 = vadd.f32 0.0, %v2386
        %v2388 = vpop.f32.mrb[0].mxu0
        %v2389 = vadd.f32 0.0, %v2388
        %v2390 = vpop.f32.mrb[0].mxu0
        %v2391 = vadd.f32 0.0, %v2390
        %v2392 = vpop.f32.mrb[0].mxu0
        %v2393 = vadd.f32 0.0, %v2392
        %2394 = vmatprep.mubr.bf16.mxu0 %v2022
        %2395 = vmatmul.mubr.bf16.gmra.mrb[0].mxu0 %v2021
        %v2396 = vpop.f32.mrb[0].mxu0
        %v2397 = vadd.f32 0.0, %v2396
        %v2398 = vpop.f32.mrb[0].mxu0
        %v2399 = vadd.f32 0.0, %v2398
        %v2400 = vpop.f32.mrb[0].mxu0
        %v2401 = vadd.f32 0.0, %v2400
        %v2402 = vpop.f32.mrb[0].mxu0
        %v2403 = vadd.f32 0.0, %v2402
        %2404 = vdwg.mxu0
        %2405 = vmatprep.subr.bf16.mxu0 %v2249
        %2406 = vmatpush1.bf16.msra.mxu0 %v2248
        %2407 = vmatprep.subr.bf16.mxu0 %v2251
        %2408 = vmatpush1.bf16.msra.mxu0 %v2250
        %2409 = vmatprep.subr.bf16.mxu0 %v2253
        %2410 = vmatpush1.bf16.msra.mxu0 %v2252
        %2411 = vmatprep.subr.bf16.mxu0 %v2255
        %2412 = vmatpush1.bf16.msra.mxu0 %v2254
        %2413 = vmatprep.subr.bf16.mxu0 %v2257
        %2414 = vmatpush1.bf16.msra.mxu0 %v2256
        %2415 = vmatprep.subr.bf16.mxu0 %v2259
        %2416 = vmatpush1.bf16.msra.mxu0 %v2258
        %2417 = vmatprep.subr.bf16.mxu0 %v2261
        %2418 = vmatpush1.bf16.msra.mxu0 %v2260
        %2419 = vmatprep.subr.bf16.mxu0 %v2263
        %2420 = vmatpush1.bf16.msra.mxu0 %v2262
        %2421 = vmatprep.subr.bf16.mxu0 0
        %2422 = vmatpush1.bf16.msra.mxu0 0
        %2423 = vmatprep.subr.bf16.mxu0 0
        %2424 = vmatpush1.bf16.msra.mxu0 0
        %2425 = vmatprep.subr.bf16.mxu0 0
        %2426 = vmatpush1.bf16.msra.mxu0 0
        %2427 = vmatprep.subr.bf16.mxu0 0
        %2428 = vmatpush1.bf16.msra.mxu0 0
        %2429 = vmatprep.subr.bf16.mxu0 0
        %2430 = vmatpush1.bf16.msra.mxu0 0
        %2431 = vmatprep.subr.bf16.mxu0 0
        %2432 = vmatpush1.bf16.msra.mxu0 0
        %2433 = vmatprep.subr.bf16.mxu0 0
        %2434 = vmatpush1.bf16.msra.mxu0 0
        %2435 = vmatprep.subr.bf16.mxu0 0
        %2436 = vmatpush1.bf16.msra.mxu0 0
        %2437 = vmatprep.mubr.bf16.mxu0 0
        %2438 = vmatmul.mubr.bf16.gmra.mrb[0].mxu0 %v2008
        %v2439 = vpop.f32.mrb[0].mxu0
        %v2440 = vadd.f32 %v2347, %v2439
        %v2441 = vpop.f32.mrb[0].mxu0
        %v2442 = vadd.f32 %v2349, %v2441
        %v2443 = vpop.f32.mrb[0].mxu0
        %v2444 = vadd.f32 %v2351, %v2443
        %v2445 = vpop.f32.mrb[0].mxu0
        %v2446 = vadd.f32 %v2353, %v2445
        %2447 = vmatprep.mubr.bf16.mxu0 0
        %2448 = vmatmul.mubr.bf16.gmra.mrb[0].mxu0 %v2011
        %v2449 = vpop.f32.mrb[0].mxu0
        %v2450 = vadd.f32 %v2357, %v2449
        %v2451 = vpop.f32.mrb[0].mxu0
        %v2452 = vadd.f32 %v2359, %v2451
        %v2453 = vpop.f32.mrb[0].mxu0
        %v2454 = vadd.f32 %v2361, %v2453
        %v2455 = vpop.f32.mrb[0].mxu0
        %v2456 = vadd.f32 %v2363, %v2455
        %2457 = vmatprep.mubr.bf16.mxu0 0
        %2458 = vmatmul.mubr.bf16.gmra.mrb[0].mxu0 %v2014
        %v2459 = vpop.f32.mrb[0].mxu0
        %v2460 = vadd.f32 %v2367, %v2459
        %v2461 = vpop.f32.mrb[0].mxu0
        %v2462 = vadd.f32 %v2369, %v2461
        %v2463 = vpop.f32.mrb[0].mxu0
        %v2464 = vadd.f32 %v2371, %v2463
        %v2465 = vpop.f32.mrb[0].mxu0
        %v2466 = vadd.f32 %v2373, %v2465
        %2467 = vmatprep.mubr.bf16.mxu0 0
        %2468 = vmatmul.mubr.bf16.gmra.mrb[0].mxu0 %v2017
        %v2469 = vpop.f32.mrb[0].mxu0
        %v2470 = vadd.f32 %v2377, %v2469
        %v2471 = vpop.f32.mrb[0].mxu0
        %v2472 = vadd.f32 %v2379, %v2471
        %v2473 = vpop.f32.mrb[0].mxu0
        %v2474 = vadd.f32 %v2381, %v2473
        %v2475 = vpop.f32.mrb[0].mxu0
        %v2476 = vadd.f32 %v2383, %v2475
        %2477 = vmatprep.mubr.bf16.mxu0 0
        %2478 = vmatmul.mubr.bf16.gmra.mrb[0].mxu0 %v2020
        %v2479 = vpop.f32.mrb[0].mxu0
        %v2480 = vadd.f32 %v2387, %v2479
        %v2481 = vpop.f32.mrb[0].mxu0
        %v2482 = vadd.f32 %v2389, %v2481
        %v2483 = vpop.f32.mrb[0].mxu0
        %v2484 = vadd.f32 %v2391, %v2483
        %v2485 = vpop.f32.mrb[0].mxu0
        %v2486 = vadd.f32 %v2393, %v2485
        %2487 = vmatprep.mubr.bf16.mxu0 0
        %2488 = vmatmul.mubr.bf16.gmra.mrb[0].mxu0 %v2023
        %v2489 = vpop.f32.mrb[0].mxu0
        %v2490 = vadd.f32 %v2397, %v2489
        %v2491 = vpop.f32.mrb[0].mxu0
        %v2492 = vadd.f32 %v2399, %v2491
        %v2493 = vpop.f32.mrb[0].mxu0
        %v2494 = vadd.f32 %v2401, %v2493
        %v2495 = vpop.f32.mrb[0].mxu0
        %v2496 = vadd.f32 %v2403, %v2495
        %2497 = vdwg.mxu0
        %s2498 = scalar_lea.vmem %s4, 384
        %v2499 = vld [vmem:[%s2498] sm:$0xff]
        %v2500 = vld [vmem:[%s2498 + $0x8] sm:$0xff]
        %v2501 = vld [vmem:[%s2498 + $0x10] sm:$0xff]
        %v2502 = vld [vmem:[%s2498 + $0x18] sm:$0xff]
        %v2503 = vld [vmem:[%s2498 + $0x20] sm:$0xff]
        %v2504 = vld [vmem:[%s2498 + $0x28] sm:$0xff]
        %v2505 = vld [vmem:[%s2498 + $0x30] sm:$0xff]
        %v2506 = vld [vmem:[%s2498 + $0x38] sm:$0xff]
        %v2507 = vld [vmem:[%s2498 + $0x40] sm:$0xff]
        %v2508 = vld [vmem:[%s2498 + $0x48] sm:$0xff]
        %v2509 = vld [vmem:[%s2498 + $0x50] sm:$0xff]
        %v2510 = vld [vmem:[%s2498 + $0x58] sm:$0xff]
        %v2511 = vld [vmem:[%s2498 + $0x60] sm:$0xff]
        %v2512 = vld [vmem:[%s2498 + $0x68] sm:$0xff]
        %v2513 = vld [vmem:[%s2498 + $0x70] sm:$0xff]
        %v2514 = vld [vmem:[%s2498 + $0x78] sm:$0xff]
        %v2515 = vld [vmem:[%s2498 + $0x80] sm:$0xff]
        %v2516 = vld [vmem:[%s2498 + $0x88] sm:$0xff]
        %v2517 = vld [vmem:[%s2498 + $0x90] sm:$0xff]
        %v2518 = vld [vmem:[%s2498 + $0x98] sm:$0xff]
        %v2519 = vld [vmem:[%s2498 + $0xa0] sm:$0xff]
        %v2520 = vld [vmem:[%s2498 + $0xa8] sm:$0xff]
        %v2521 = vld [vmem:[%s2498 + $0xb0] sm:$0xff]
        %v2522 = vld [vmem:[%s2498 + $0xb8] sm:$0xff]
        %v2523 = vld [vmem:[%s2498 + $0xc0] sm:$0xff]
        %v2524 = vld [vmem:[%s2498 + $0xc8] sm:$0xff]
        %v2525 = vld [vmem:[%s2498 + $0xd0] sm:$0xff]
        %v2526 = vld [vmem:[%s2498 + $0xd8] sm:$0xff]
        %v2527 = vld [vmem:[%s2498 + $0xe0] sm:$0xff]
        %v2528 = vld [vmem:[%s2498 + $0xe8] sm:$0xff]
        %v2529 = vld [vmem:[%s2498 + $0xf0] sm:$0xff]
        %v2530 = vld [vmem:[%s2498 + $0xf8] sm:$0xff]
        %v2531 = vld [vmem:[%s2498 + $0x100] sm:$0xff]
        %v2532 = vld [vmem:[%s2498 + $0x108] sm:$0xff]
        %v2533 = vld [vmem:[%s2498 + $0x110] sm:$0xff]
        %v2534 = vld [vmem:[%s2498 + $0x118] sm:$0xff]
        %v2535 = vld [vmem:[%s2498 + $0x120] sm:$0xff]
        %v2536 = vld [vmem:[%s2498 + $0x128] sm:$0xff]
        %v2537 = vld [vmem:[%s2498 + $0x130] sm:$0xff]
        %v2538 = vld [vmem:[%s2498 + $0x138] sm:$0xff]
        %v2539 = vld [vmem:[%s2498 + $0x140] sm:$0xff]
        %v2540 = vld [vmem:[%s2498 + $0x148] sm:$0xff]
        %v2541 = vld [vmem:[%s2498 + $0x150] sm:$0xff]
        %v2542 = vld [vmem:[%s2498 + $0x158] sm:$0xff]
        %v2543 = vld [vmem:[%s2498 + $0x160] sm:$0xff]
        %v2544 = vld [vmem:[%s2498 + $0x168] sm:$0xff]
        %v2545 = vld [vmem:[%s2498 + $0x170] sm:$0xff]
        %v2546 = vld [vmem:[%s2498 + $0x178] sm:$0xff]
        %v2595 = vunpack.c.l.b16 %v2499
        %v2596 = vunpack.c.h.b16 %v2499
        %v2597 = vunpack.c.l.b16 %v2500
        %v2598 = vunpack.c.h.b16 %v2500
        %v2599 = vunpack.c.l.b16 %v2501
        %v2600 = vunpack.c.h.b16 %v2501
        %v2601 = vunpack.c.l.b16 %v2502
        %v2602 = vunpack.c.h.b16 %v2502
        %v2603 = vunpack.c.l.b16 %v2503
        %v2604 = vunpack.c.h.b16 %v2503
        %v2605 = vunpack.c.l.b16 %v2504
        %v2606 = vunpack.c.h.b16 %v2504
        %v2607 = vunpack.c.l.b16 %v2505
        %v2608 = vunpack.c.h.b16 %v2505
        %v2609 = vunpack.c.l.b16 %v2506
        %v2610 = vunpack.c.h.b16 %v2506
        %v2611 = vunpack.c.l.b16 %v2507
        %v2612 = vunpack.c.h.b16 %v2507
        %v2613 = vunpack.c.l.b16 %v2508
        %v2614 = vunpack.c.h.b16 %v2508
        %v2615 = vunpack.c.l.b16 %v2509
        %v2616 = vunpack.c.h.b16 %v2509
        %v2617 = vunpack.c.l.b16 %v2510
        %v2618 = vunpack.c.h.b16 %v2510
        %v2619 = vunpack.c.l.b16 %v2511
        %v2620 = vunpack.c.h.b16 %v2511
        %v2621 = vunpack.c.l.b16 %v2512
        %v2622 = vunpack.c.h.b16 %v2512
        %v2623 = vunpack.c.l.b16 %v2513
        %v2624 = vunpack.c.h.b16 %v2513
        %v2625 = vunpack.c.l.b16 %v2514
        %v2626 = vunpack.c.h.b16 %v2514
        %v2627 = vunpack.c.l.b16 %v2515
        %v2628 = vunpack.c.h.b16 %v2515
        %v2629 = vunpack.c.l.b16 %v2516
        %v2630 = vunpack.c.h.b16 %v2516
        %v2631 = vunpack.c.l.b16 %v2517
        %v2632 = vunpack.c.h.b16 %v2517
        %v2633 = vunpack.c.l.b16 %v2518
        %v2634 = vunpack.c.h.b16 %v2518
        %v2635 = vunpack.c.l.b16 %v2519
        %v2636 = vunpack.c.h.b16 %v2519
        %v2637 = vunpack.c.l.b16 %v2520
        %v2638 = vunpack.c.h.b16 %v2520
        %v2639 = vunpack.c.l.b16 %v2521
        %v2640 = vunpack.c.h.b16 %v2521
        %v2641 = vunpack.c.l.b16 %v2522
        %v2642 = vunpack.c.h.b16 %v2522
        %v2643 = vunpack.c.l.b16 %v2523
        %v2644 = vunpack.c.h.b16 %v2523
        %v2645 = vunpack.c.l.b16 %v2524
        %v2646 = vunpack.c.h.b16 %v2524
        %v2647 = vunpack.c.l.b16 %v2525
        %v2648 = vunpack.c.h.b16 %v2525
        %v2649 = vunpack.c.l.b16 %v2526
        %v2650 = vunpack.c.h.b16 %v2526
        %v2651 = vunpack.c.l.b16 %v2527
        %v2652 = vunpack.c.h.b16 %v2527
        %v2653 = vunpack.c.l.b16 %v2528
        %v2654 = vunpack.c.h.b16 %v2528
        %v2655 = vunpack.c.l.b16 %v2529
        %v2656 = vunpack.c.h.b16 %v2529
        %v2657 = vunpack.c.l.b16 %v2530
        %v2658 = vunpack.c.h.b16 %v2530
        %v2659 = vunpack.c.l.b16 %v2531
        %v2660 = vunpack.c.h.b16 %v2531
        %v2661 = vunpack.c.l.b16 %v2532
        %v2662 = vunpack.c.h.b16 %v2532
        %v2663 = vunpack.c.l.b16 %v2533
        %v2664 = vunpack.c.h.b16 %v2533
        %v2665 = vunpack.c.l.b16 %v2534
        %v2666 = vunpack.c.h.b16 %v2534
        %v2667 = vunpack.c.l.b16 %v2535
        %v2668 = vunpack.c.h.b16 %v2535
        %v2669 = vunpack.c.l.b16 %v2536
        %v2670 = vunpack.c.h.b16 %v2536
        %v2671 = vunpack.c.l.b16 %v2537
        %v2672 = vunpack.c.h.b16 %v2537
        %v2673 = vunpack.c.l.b16 %v2538
        %v2674 = vunpack.c.h.b16 %v2538
        %v2675 = vunpack.c.l.b16 %v2539
        %v2676 = vunpack.c.h.b16 %v2539
        %v2677 = vunpack.c.l.b16 %v2540
        %v2678 = vunpack.c.h.b16 %v2540
        %v2679 = vunpack.c.l.b16 %v2541
        %v2680 = vunpack.c.h.b16 %v2541
        %v2681 = vunpack.c.l.b16 %v2542
        %v2682 = vunpack.c.h.b16 %v2542
        %v2683 = vunpack.c.l.b16 %v2543
        %v2684 = vunpack.c.h.b16 %v2543
        %v2685 = vunpack.c.l.b16 %v2544
        %v2686 = vunpack.c.h.b16 %v2544
        %v2687 = vunpack.c.l.b16 %v2545
        %v2688 = vunpack.c.h.b16 %v2545
        %v2689 = vunpack.c.l.b16 %v2546
        %v2690 = vunpack.c.h.b16 %v2546
        %v2691 = vpack.c.b16 %v2597, %v2595
        %v2692 = vpack.c.b16 %v2598, %v2596
        %v2693 = vpack.c.b16 %v2601, %v2599
        %v2694 = vpack.c.b16 %v2602, %v2600
        %v2695 = vpack.c.b16 %v2605, %v2603
        %v2696 = vpack.c.b16 %v2606, %v2604
        %v2697 = vpack.c.b16 %v2609, %v2607
        %v2698 = vpack.c.b16 %v2610, %v2608
        %v2699 = vpack.c.b16 %v2613, %v2611
        %v2700 = vpack.c.b16 %v2614, %v2612
        %v2701 = vpack.c.b16 %v2617, %v2615
        %v2702 = vpack.c.b16 %v2618, %v2616
        %v2703 = vpack.c.b16 %v2621, %v2619
        %v2704 = vpack.c.b16 %v2622, %v2620
        %v2705 = vpack.c.b16 %v2625, %v2623
        %v2706 = vpack.c.b16 %v2626, %v2624
        %v2707 = vpack.c.b16 %v2629, %v2627
        %v2708 = vpack.c.b16 %v2630, %v2628
        %v2709 = vpack.c.b16 %v2633, %v2631
        %v2710 = vpack.c.b16 %v2634, %v2632
        %v2711 = vpack.c.b16 %v2637, %v2635
        %v2712 = vpack.c.b16 %v2638, %v2636
        %v2713 = vpack.c.b16 %v2641, %v2639
        %v2714 = vpack.c.b16 %v2642, %v2640
        %v2715 = vpack.c.b16 %v2645, %v2643
        %v2716 = vpack.c.b16 %v2646, %v2644
        %v2717 = vpack.c.b16 %v2649, %v2647
        %v2718 = vpack.c.b16 %v2650, %v2648
        %v2719 = vpack.c.b16 %v2653, %v2651
        %v2720 = vpack.c.b16 %v2654, %v2652
        %v2721 = vpack.c.b16 %v2657, %v2655
        %v2722 = vpack.c.b16 %v2658, %v2656
        %v2723 = vpack.c.b16 %v2661, %v2659
        %v2724 = vpack.c.b16 %v2662, %v2660
        %v2725 = vpack.c.b16 %v2665, %v2663
        %v2726 = vpack.c.b16 %v2666, %v2664
        %v2727 = vpack.c.b16 %v2669, %v2667
        %v2728 = vpack.c.b16 %v2670, %v2668
        %v2729 = vpack.c.b16 %v2673, %v2671
        %v2730 = vpack.c.b16 %v2674, %v2672
        %v2731 = vpack.c.b16 %v2677, %v2675
        %v2732 = vpack.c.b16 %v2678, %v2676
        %v2733 = vpack.c.b16 %v2681, %v2679
        %v2734 = vpack.c.b16 %v2682, %v2680
        %v2735 = vpack.c.b16 %v2685, %v2683
        %v2736 = vpack.c.b16 %v2686, %v2684
        %v2737 = vpack.c.b16 %v2689, %v2687
        %v2738 = vpack.c.b16 %v2690, %v2688
        %2787 = vmatprep.subr.bf16.mxu0 %v2692
        %2788 = vmatpush1.bf16.msra.mxu0 %v2691
        %2789 = vmatprep.subr.bf16.mxu0 %v2694
        %2790 = vmatpush1.bf16.msra.mxu0 %v2693
        %2791 = vmatprep.subr.bf16.mxu0 %v2696
        %2792 = vmatpush1.bf16.msra.mxu0 %v2695
        %2793 = vmatprep.subr.bf16.mxu0 %v2698
        %2794 = vmatpush1.bf16.msra.mxu0 %v2697
        %2795 = vmatprep.subr.bf16.mxu0 %v2700
        %2796 = vmatpush1.bf16.msra.mxu0 %v2699
        %2797 = vmatprep.subr.bf16.mxu0 %v2702
        %2798 = vmatpush1.bf16.msra.mxu0 %v2701
        %2799 = vmatprep.subr.bf16.mxu0 %v2704
        %2800 = vmatpush1.bf16.msra.mxu0 %v2703
        %2801 = vmatprep.subr.bf16.mxu0 %v2706
        %2802 = vmatpush1.bf16.msra.mxu0 %v2705
        %2803 = vmatprep.subr.bf16.mxu0 %v2708
        %2804 = vmatpush1.bf16.msra.mxu0 %v2707
        %2805 = vmatprep.subr.bf16.mxu0 %v2710
        %2806 = vmatpush1.bf16.msra.mxu0 %v2709
        %2807 = vmatprep.subr.bf16.mxu0 %v2712
        %2808 = vmatpush1.bf16.msra.mxu0 %v2711
        %2809 = vmatprep.subr.bf16.mxu0 %v2714
        %2810 = vmatpush1.bf16.msra.mxu0 %v2713
        %2811 = vmatprep.subr.bf16.mxu0 %v2716
        %2812 = vmatpush1.bf16.msra.mxu0 %v2715
        %2813 = vmatprep.subr.bf16.mxu0 %v2718
        %2814 = vmatpush1.bf16.msra.mxu0 %v2717
        %2815 = vmatprep.subr.bf16.mxu0 %v2720
        %2816 = vmatpush1.bf16.msra.mxu0 %v2719
        %2817 = vmatprep.subr.bf16.mxu0 %v2722
        %2818 = vmatpush1.bf16.msra.mxu0 %v2721
        %2819 = vmatprep.mubr.bf16.mxu0 %v2007
        %2820 = vmatmul.mubr.bf16.gmra.mrb[0].mxu0 %v2006
        %v2821 = vpop.f32.mrb[0].mxu0
        %v2822 = vadd.f32 0.0, %v2821
        %v2823 = vpop.f32.mrb[0].mxu0
        %v2824 = vadd.f32 0.0, %v2823
        %v2825 = vpop.f32.mrb[0].mxu0
        %v2826 = vadd.f32 0.0, %v2825
        %v2827 = vpop.f32.mrb[0].mxu0
        %v2828 = vadd.f32 0.0, %v2827
        %2829 = vmatprep.mubr.bf16.mxu0 %v2010
        %2830 = vmatmul.mubr.bf16.gmra.mrb[0].mxu0 %v2009
        %v2831 = vpop.f32.mrb[0].mxu0
        %v2832 = vadd.f32 0.0, %v2831
        %v2833 = vpop.f32.mrb[0].mxu0
        %v2834 = vadd.f32 0.0, %v2833
        %v2835 = vpop.f32.mrb[0].mxu0
        %v2836 = vadd.f32 0.0, %v2835
        %v2837 = vpop.f32.mrb[0].mxu0
        %v2838 = vadd.f32 0.0, %v2837
        %2839 = vmatprep.mubr.bf16.mxu0 %v2013
        %2840 = vmatmul.mubr.bf16.gmra.mrb[0].mxu0 %v2012
        %v2841 = vpop.f32.mrb[0].mxu0
        %v2842 = vadd.f32 0.0, %v2841
        %v2843 = vpop.f32.mrb[0].mxu0
        %v2844 = vadd.f32 0.0, %v2843
        %v2845 = vpop.f32.mrb[0].mxu0
        %v2846 = vadd.f32 0.0, %v2845
        %v2847 = vpop.f32.mrb[0].mxu0
        %v2848 = vadd.f32 0.0, %v2847
        %2849 = vmatprep.mubr.bf16.mxu0 %v2016
        %2850 = vmatmul.mubr.bf16.gmra.mrb[0].mxu0 %v2015
        %v2851 = vpop.f32.mrb[0].mxu0
        %v2852 = vadd.f32 0.0, %v2851
        %v2853 = vpop.f32.mrb[0].mxu0
        %v2854 = vadd.f32 0.0, %v2853
        %v2855 = vpop.f32.mrb[0].mxu0
        %v2856 = vadd.f32 0.0, %v2855
        %v2857 = vpop.f32.mrb[0].mxu0
        %v2858 = vadd.f32 0.0, %v2857
        %2859 = vmatprep.mubr.bf16.mxu0 %v2019
        %2860 = vmatmul.mubr.bf16.gmra.mrb[0].mxu0 %v2018
        %v2861 = vpop.f32.mrb[0].mxu0
        %v2862 = vadd.f32 0.0, %v2861
        %v2863 = vpop.f32.mrb[0].mxu0
        %v2864 = vadd.f32 0.0, %v2863
        %v2865 = vpop.f32.mrb[0].mxu0
        %v2866 = vadd.f32 0.0, %v2865
        %v2867 = vpop.f32.mrb[0].mxu0
        %v2868 = vadd.f32 0.0, %v2867
        %2869 = vmatprep.mubr.bf16.mxu0 %v2022
        %2870 = vmatmul.mubr.bf16.gmra.mrb[0].mxu0 %v2021
        %v2871 = vpop.f32.mrb[0].mxu0
        %v2872 = vadd.f32 0.0, %v2871
        %v2873 = vpop.f32.mrb[0].mxu0
        %v2874 = vadd.f32 0.0, %v2873
        %v2875 = vpop.f32.mrb[0].mxu0
        %v2876 = vadd.f32 0.0, %v2875
        %v2877 = vpop.f32.mrb[0].mxu0
        %v2878 = vadd.f32 0.0, %v2877
        %2879 = vdwg.mxu0
        %2880 = vmatprep.subr.bf16.mxu0 %v2724
        %2881 = vmatpush1.bf16.msra.mxu0 %v2723
        %2882 = vmatprep.subr.bf16.mxu0 %v2726
        %2883 = vmatpush1.bf16.msra.mxu0 %v2725
        %2884 = vmatprep.subr.bf16.mxu0 %v2728
        %2885 = vmatpush1.bf16.msra.mxu0 %v2727
        %2886 = vmatprep.subr.bf16.mxu0 %v2730
        %2887 = vmatpush1.bf16.msra.mxu0 %v2729
        %2888 = vmatprep.subr.bf16.mxu0 %v2732
        %2889 = vmatpush1.bf16.msra.mxu0 %v2731
        %2890 = vmatprep.subr.bf16.mxu0 %v2734
        %2891 = vmatpush1.bf16.msra.mxu0 %v2733
        %2892 = vmatprep.subr.bf16.mxu0 %v2736
        %2893 = vmatpush1.bf16.msra.mxu0 %v2735
        %2894 = vmatprep.subr.bf16.mxu0 %v2738
        %2895 = vmatpush1.bf16.msra.mxu0 %v2737
        %2896 = vmatprep.subr.bf16.mxu0 0
        %2897 = vmatpush1.bf16.msra.mxu0 0
        %2898 = vmatprep.subr.bf16.mxu0 0
        %2899 = vmatpush1.bf16.msra.mxu0 0
        %2900 = vmatprep.subr.bf16.mxu0 0
        %2901 = vmatpush1.bf16.msra.mxu0 0
        %2902 = vmatprep.subr.bf16.mxu0 0
        %2903 = vmatpush1.bf16.msra.mxu0 0
        %2904 = vmatprep.subr.bf16.mxu0 0
        %2905 = vmatpush1.bf16.msra.mxu0 0
        %2906 = vmatprep.subr.bf16.mxu0 0
        %2907 = vmatpush1.bf16.msra.mxu0 0
        %2908 = vmatprep.subr.bf16.mxu0 0
        %2909 = vmatpush1.bf16.msra.mxu0 0
        %2910 = vmatprep.subr.bf16.mxu0 0
        %2911 = vmatpush1.bf16.msra.mxu0 0
        %2912 = vmatprep.mubr.bf16.mxu0 0
        %2913 = vmatmul.mubr.bf16.gmra.mrb[0].mxu0 %v2008
        %v2914 = vpop.f32.mrb[0].mxu0
        %v2915 = vadd.f32 %v2822, %v2914
        %v2916 = vpop.f32.mrb[0].mxu0
        %v2917 = vadd.f32 %v2824, %v2916
        %v2918 = vpop.f32.mrb[0].mxu0
        %v2919 = vadd.f32 %v2826, %v2918
        %v2920 = vpop.f32.mrb[0].mxu0
        %v2921 = vadd.f32 %v2828, %v2920
        %2922 = vmatprep.mubr.bf16.mxu0 0
        %2923 = vmatmul.mubr.bf16.gmra.mrb[0].mxu0 %v2011
        %v2924 = vpop.f32.mrb[0].mxu0
        %v2925 = vadd.f32 %v2832, %v2924
        %v2926 = vpop.f32.mrb[0].mxu0
        %v2927 = vadd.f32 %v2834, %v2926
        %v2928 = vpop.f32.mrb[0].mxu0
        %v2929 = vadd.f32 %v2836, %v2928
        %v2930 = vpop.f32.mrb[0].mxu0
        %v2931 = vadd.f32 %v2838, %v2930
        %2932 = vmatprep.mubr.bf16.mxu0 0
        %2933 = vmatmul.mubr.bf16.gmra.mrb[0].mxu0 %v2014
        %v2934 = vpop.f32.mrb[0].mxu0
        %v2935 = vadd.f32 %v2842, %v2934
        %v2936 = vpop.f32.mrb[0].mxu0
        %v2937 = vadd.f32 %v2844, %v2936
        %v2938 = vpop.f32.mrb[0].mxu0
        %v2939 = vadd.f32 %v2846, %v2938
        %v2940 = vpop.f32.mrb[0].mxu0
        %v2941 = vadd.f32 %v2848, %v2940
        %2942 = vmatprep.mubr.bf16.mxu0 0
        %2943 = vmatmul.mubr.bf16.gmra.mrb[0].mxu0 %v2017
        %v2944 = vpop.f32.mrb[0].mxu0
        %v2945 = vadd.f32 %v2852, %v2944
        %v2946 = vpop.f32.mrb[0].mxu0
        %v2947 = vadd.f32 %v2854, %v2946
        %v2948 = vpop.f32.mrb[0].mxu0
        %v2949 = vadd.f32 %v2856, %v2948
        %v2950 = vpop.f32.mrb[0].mxu0
        %v2951 = vadd.f32 %v2858, %v2950
        %2952 = vmatprep.mubr.bf16.mxu0 0
        %2953 = vmatmul.mubr.bf16.gmra.mrb[0].mxu0 %v2020
        %v2954 = vpop.f32.mrb[0].mxu0
        %v2955 = vadd.f32 %v2862, %v2954
        %v2956 = vpop.f32.mrb[0].mxu0
        %v2957 = vadd.f32 %v2864, %v2956
        %v2958 = vpop.f32.mrb[0].mxu0
        %v2959 = vadd.f32 %v2866, %v2958
        %v2960 = vpop.f32.mrb[0].mxu0
        %v2961 = vadd.f32 %v2868, %v2960
        %2962 = vmatprep.mubr.bf16.mxu0 0
        %2963 = vmatmul.mubr.bf16.gmra.mrb[0].mxu0 %v2023
        %v2964 = vpop.f32.mrb[0].mxu0
        %v2965 = vadd.f32 %v2872, %v2964
        %v2966 = vpop.f32.mrb[0].mxu0
        %v2967 = vadd.f32 %v2874, %v2966
        %v2968 = vpop.f32.mrb[0].mxu0
        %v2969 = vadd.f32 %v2876, %v2968
        %v2970 = vpop.f32.mrb[0].mxu0
        %v2971 = vadd.f32 %v2878, %v2970
        %2972 = vdwg.mxu0
        %v2973 = vmax.f32 %v2440, %v2915
        %v2974 = vmax.f32 %v2442, %v2917
        %v2975 = vmax.f32 %v2444, %v2919
        %v2976 = vmax.f32 %v2446, %v2921
        %v2977 = vmax.f32 %v2450, %v2925
        %v2978 = vmax.f32 %v2452, %v2927
        %v2979 = vmax.f32 %v2454, %v2929
        %v2980 = vmax.f32 %v2456, %v2931
        %v2981 = vmax.f32 %v2460, %v2935
        %v2982 = vmax.f32 %v2462, %v2937
        %v2983 = vmax.f32 %v2464, %v2939
        %v2984 = vmax.f32 %v2466, %v2941
        %v2985 = vmax.f32 %v2470, %v2945
        %v2986 = vmax.f32 %v2472, %v2947
        %v2987 = vmax.f32 %v2474, %v2949
        %v2988 = vmax.f32 %v2476, %v2951
        %v2989 = vmax.f32 %v2480, %v2955
        %v2990 = vmax.f32 %v2482, %v2957
        %v2991 = vmax.f32 %v2484, %v2959
        %v2992 = vmax.f32 %v2486, %v2961
        %v2993 = vmax.f32 %v2490, %v2965
        %v2994 = vmax.f32 %v2492, %v2967
        %v2995 = vmax.f32 %v2494, %v2969
        %v2996 = vmax.f32 %v2496, %v2971
        %v2997 = vpack.c.bf16 %v2975, %v2973
        %v2998 = vpack.c.bf16 %v2976, %v2974
        %v2999 = vpack.c.bf16 %v2979, %v2977
        %v3000 = vpack.c.bf16 %v2980, %v2978
        %v3001 = vpack.c.bf16 %v2983, %v2981
        %v3002 = vpack.c.bf16 %v2984, %v2982
        %v3003 = vpack.c.bf16 %v2987, %v2985
        %v3004 = vpack.c.bf16 %v2988, %v2986
        %v3005 = vpack.c.bf16 %v2991, %v2989
        %v3006 = vpack.c.bf16 %v2992, %v2990
        %v3007 = vpack.c.bf16 %v2995, %v2993
        %v3008 = vpack.c.bf16 %v2996, %v2994
        %v3009 = vld [vmem:[%s5] sm:$0xff]
        %v3010 = vld [vmem:[%s5 + $0x8] sm:$0xff]
        %v3011 = vld [vmem:[%s5 + $0x10] sm:$0xff]
        %v3012 = vld [vmem:[%s5 + $0x18] sm:$0xff]
        %v3013 = vld [vmem:[%s5 + $0x20] sm:$0xff]
        %v3014 = vld [vmem:[%s5 + $0x28] sm:$0xff]
        %v3015 = vld [vmem:[%s5 + $0x30] sm:$0xff]
        %v3016 = vld [vmem:[%s5 + $0x38] sm:$0xff]
        %v3017 = vld [vmem:[%s5 + $0x40] sm:$0xff]
        %v3018 = vld [vmem:[%s5 + $0x48] sm:$0xff]
        %v3019 = vld [vmem:[%s5 + $0x50] sm:$0xff]
        %v3020 = vld [vmem:[%s5 + $0x58] sm:$0xff]
        %v3021 = vld [vmem:[%s5 + $0x60] sm:$0xff]
        %v3022 = vld [vmem:[%s5 + $0x68] sm:$0xff]
        %v3023 = vld [vmem:[%s5 + $0x70] sm:$0xff]
        %v3024 = vld [vmem:[%s5 + $0x78] sm:$0xff]
        %v3025 = vld [vmem:[%s5 + $0x80] sm:$0xff]
        %v3026 = vld [vmem:[%s5 + $0x88] sm:$0xff]
        %v3027 = vld [vmem:[%s5 + $0x90] sm:$0xff]
        %v3028 = vld [vmem:[%s5 + $0x98] sm:$0xff]
        %v3029 = vld [vmem:[%s5 + $0xa0] sm:$0xff]
        %v3030 = vld [vmem:[%s5 + $0xa8] sm:$0xff]
        %v3031 = vld [vmem:[%s5 + $0xb0] sm:$0xff]
        %v3032 = vld [vmem:[%s5 + $0xb8] sm:$0xff]
        %s3033 = scalar_lea.vmem %s5, 192
        %v3034 = vld [vmem:[%s3033] sm:$0xff]
        %v3035 = vld [vmem:[%s3033 + $0x8] sm:$0xff]
        %v3036 = vld [vmem:[%s3033 + $0x10] sm:$0xff]
        %v3037 = vld [vmem:[%s3033 + $0x18] sm:$0xff]
        %v3038 = vld [vmem:[%s3033 + $0x20] sm:$0xff]
        %v3039 = vld [vmem:[%s3033 + $0x28] sm:$0xff]
        %v3040 = vld [vmem:[%s3033 + $0x30] sm:$0xff]
        %v3041 = vld [vmem:[%s3033 + $0x38] sm:$0xff]
        %v3042 = vld [vmem:[%s3033 + $0x40] sm:$0xff]
        %v3043 = vld [vmem:[%s3033 + $0x48] sm:$0xff]
        %v3044 = vld [vmem:[%s3033 + $0x50] sm:$0xff]
        %v3045 = vld [vmem:[%s3033 + $0x58] sm:$0xff]
        %v3046 = vld [vmem:[%s3033 + $0x60] sm:$0xff]
        %v3047 = vld [vmem:[%s3033 + $0x68] sm:$0xff]
        %v3048 = vld [vmem:[%s3033 + $0x70] sm:$0xff]
        %v3049 = vld [vmem:[%s3033 + $0x78] sm:$0xff]
        %v3050 = vld [vmem:[%s3033 + $0x80] sm:$0xff]
        %v3051 = vld [vmem:[%s3033 + $0x88] sm:$0xff]
        %v3052 = vld [vmem:[%s3033 + $0x90] sm:$0xff]
        %v3053 = vld [vmem:[%s3033 + $0x98] sm:$0xff]
        %v3054 = vld [vmem:[%s3033 + $0xa0] sm:$0xff]
        %v3055 = vld [vmem:[%s3033 + $0xa8] sm:$0xff]
        %v3056 = vld [vmem:[%s3033 + $0xb0] sm:$0xff]
        %v3057 = vld [vmem:[%s3033 + $0xb8] sm:$0xff]
        %vm3058 = vsmask.f32 7424
        %v3060 = vshrl.u32 %v2997, 16
        %v3062 = vshll.u32 %v2997, 16
        %v3064 = vrot.slane %v3062, 1
        %v3065 = vor.u32 %v3060, %v3064
        %v3067 = vshll.u32 %v2999, 16
        %v3069 = vrot.slane %v3067, 1
        %v3070 = vsel %vm3058, %v3065, %v3069
        %v3072 = vshrl.u32 %v2998, 16
        %v3074 = vshll.u32 %v2998, 16
        %v3076 = vrot.slane %v3074, 1
        %v3077 = vor.u32 %v3072, %v3076
        %v3079 = vshll.u32 %v3000, 16
        %v3081 = vrot.slane %v3079, 1
        %v3082 = vsel %vm3058, %v3077, %v3081
        %v3083 = vshrl.u32 %v2999, 16
        %v3085 = vor.u32 %v3083, %v3069
        %v3087 = vshll.u32 %v3001, 16
        %v3089 = vrot.slane %v3087, 1
        %v3090 = vsel %vm3058, %v3085, %v3089
        %v3091 = vshrl.u32 %v3000, 16
        %v3093 = vor.u32 %v3091, %v3081
        %v3095 = vshll.u32 %v3002, 16
        %v3097 = vrot.slane %v3095, 1
        %v3098 = vsel %vm3058, %v3093, %v3097
        %v3099 = vshrl.u32 %v3001, 16
        %v3101 = vor.u32 %v3099, %v3089
        %v3103 = vshll.u32 %v3003, 16
        %v3105 = vrot.slane %v3103, 1
        %v3106 = vsel %vm3058, %v3101, %v3105
        %v3107 = vshrl.u32 %v3002, 16
        %v3109 = vor.u32 %v3107, %v3097
        %v3111 = vshll.u32 %v3004, 16
        %v3113 = vrot.slane %v3111, 1
        %v3114 = vsel %vm3058, %v3109, %v3113
        %v3115 = vshrl.u32 %v3003, 16
        %v3117 = vor.u32 %v3115, %v3105
        %v3119 = vshll.u32 %v3005, 16
        %v3121 = vrot.slane %v3119, 1
        %v3122 = vsel %vm3058, %v3117, %v3121
        %v3123 = vshrl.u32 %v3004, 16
        %v3125 = vor.u32 %v3123, %v3113
        %v3127 = vshll.u32 %v3006, 16
        %v3129 = vrot.slane %v3127, 1
        %v3130 = vsel %vm3058, %v3125, %v3129
        %v3131 = vshrl.u32 %v3005, 16
        %v3133 = vor.u32 %v3131, %v3121
        %v3135 = vshll.u32 %v3007, 16
        %v3137 = vrot.slane %v3135, 1
        %v3138 = vsel %vm3058, %v3133, %v3137
        %v3139 = vshrl.u32 %v3006, 16
        %v3141 = vor.u32 %v3139, %v3129
        %v3143 = vshll.u32 %v3008, 16
        %v3145 = vrot.slane %v3143, 1
        %v3146 = vsel %vm3058, %v3141, %v3145
        %v3147 = vshrl.u32 %v3007, 16
        %v3149 = vor.u32 %v3147, %v3137
        %v3150 = vshrl.u32 %v3008, 16
        %v3152 = vor.u32 %v3150, %v3145
        %v3183 = vunpack.c.l.b16 %v3034
        %v3184 = vunpack.c.h.b16 %v3034
        %v3185 = vunpack.c.l.b16 %v3035
        %v3186 = vunpack.c.h.b16 %v3035
        %v3187 = vunpack.c.l.b16 %v3036
        %v3188 = vunpack.c.h.b16 %v3036
        %v3189 = vunpack.c.l.b16 %v3037
        %v3190 = vunpack.c.h.b16 %v3037
        %v3191 = vunpack.c.l.b16 %v3038
        %v3192 = vunpack.c.h.b16 %v3038
        %v3193 = vunpack.c.l.b16 %v3039
        %v3194 = vunpack.c.h.b16 %v3039
        %v3195 = vunpack.c.l.b16 %v3040
        %v3196 = vunpack.c.h.b16 %v3040
        %v3197 = vunpack.c.l.b16 %v3041
        %v3198 = vunpack.c.h.b16 %v3041
        %v3199 = vunpack.c.l.b16 %v3042
        %v3200 = vunpack.c.h.b16 %v3042
        %v3201 = vunpack.c.l.b16 %v3043
        %v3202 = vunpack.c.h.b16 %v3043
        %v3203 = vunpack.c.l.b16 %v3044
        %v3204 = vunpack.c.h.b16 %v3044
        %v3205 = vunpack.c.l.b16 %v3045
        %v3206 = vunpack.c.h.b16 %v3045
        %v3207 = vunpack.c.l.b16 %v3046
        %v3208 = vunpack.c.h.b16 %v3046
        %v3209 = vunpack.c.l.b16 %v3047
        %v3210 = vunpack.c.h.b16 %v3047
        %v3211 = vunpack.c.l.b16 %v3048
        %v3212 = vunpack.c.h.b16 %v3048
        %v3213 = vunpack.c.l.b16 %v3049
        %v3214 = vunpack.c.h.b16 %v3049
        %v3215 = vunpack.c.l.b16 %v3050
        %v3216 = vunpack.c.h.b16 %v3050
        %v3217 = vunpack.c.l.b16 %v3051
        %v3218 = vunpack.c.h.b16 %v3051
        %v3219 = vunpack.c.l.b16 %v3052
        %v3220 = vunpack.c.h.b16 %v3052
        %v3221 = vunpack.c.l.b16 %v3053
        %v3222 = vunpack.c.h.b16 %v3053
        %v3223 = vunpack.c.l.b16 %v3054
        %v3224 = vunpack.c.h.b16 %v3054
        %v3225 = vunpack.c.l.b16 %v3055
        %v3226 = vunpack.c.h.b16 %v3055
        %v3227 = vunpack.c.l.b16 %v3056
        %v3228 = vunpack.c.h.b16 %v3056
        %v3229 = vunpack.c.l.b16 %v3057
        %v3230 = vunpack.c.h.b16 %v3057
        %v3231 = vpack.c.b16 %v3185, %v3183
        %v3232 = vpack.c.b16 %v3186, %v3184
        %v3233 = vpack.c.b16 %v3189, %v3187
        %v3234 = vpack.c.b16 %v3190, %v3188
        %v3235 = vpack.c.b16 %v3193, %v3191
        %v3236 = vpack.c.b16 %v3194, %v3192
        %v3237 = vpack.c.b16 %v3197, %v3195
        %v3238 = vpack.c.b16 %v3198, %v3196
        %v3239 = vpack.c.b16 %v3201, %v3199
        %v3240 = vpack.c.b16 %v3202, %v3200
        %v3241 = vpack.c.b16 %v3205, %v3203
        %v3242 = vpack.c.b16 %v3206, %v3204
        %v3243 = vpack.c.b16 %v3209, %v3207
        %v3244 = vpack.c.b16 %v3210, %v3208
        %v3245 = vpack.c.b16 %v3213, %v3211
        %v3246 = vpack.c.b16 %v3214, %v3212
        %v3247 = vpack.c.b16 %v3217, %v3215
        %v3248 = vpack.c.b16 %v3218, %v3216
        %v3249 = vpack.c.b16 %v3221, %v3219
        %v3250 = vpack.c.b16 %v3222, %v3220
        %v3251 = vpack.c.b16 %v3225, %v3223
        %v3252 = vpack.c.b16 %v3226, %v3224
        %v3253 = vpack.c.b16 %v3229, %v3227
        %v3254 = vpack.c.b16 %v3230, %v3228
        %vm3279 = vcmask 523264
        %v3281 = vsel %vm3279, %v3082, 0
        %v3284 = vsel %vm3279, %v3098, 0
        %v3287 = vsel %vm3279, %v3114, 0
        %v3290 = vsel %vm3279, %v3130, 0
        %v3293 = vsel %vm3279, %v3146, 0
        %v3296 = vsel %vm3279, %v3152, 0
        %3298 = vmatprep.subr.bf16.mxu0 %v3232
        %3299 = vmatpush1.bf16.msra.mxu0 %v3231
        %3300 = vmatprep.subr.bf16.mxu0 %v3234
        %3301 = vmatpush1.bf16.msra.mxu0 %v3233
        %3302 = vmatprep.subr.bf16.mxu0 %v3236
        %3303 = vmatpush1.bf16.msra.mxu0 %v3235
        %3304 = vmatprep.subr.bf16.mxu0 %v3238
        %3305 = vmatpush1.bf16.msra.mxu0 %v3237
        %3306 = vmatprep.subr.bf16.mxu0 %v3240
        %3307 = vmatpush1.bf16.msra.mxu0 %v3239
        %3308 = vmatprep.subr.bf16.mxu0 %v3242
        %3309 = vmatpush1.bf16.msra.mxu0 %v3241
        %3310 = vmatprep.subr.bf16.mxu0 %v3244
        %3311 = vmatpush1.bf16.msra.mxu0 %v3243
        %3312 = vmatprep.subr.bf16.mxu0 %v3246
        %3313 = vmatpush1.bf16.msra.mxu0 %v3245
        %3314 = vmatprep.subr.bf16.mxu0 %v3248
        %3315 = vmatpush1.bf16.msra.mxu0 %v3247
        %3316 = vmatprep.subr.bf16.mxu0 %v3250
        %3317 = vmatpush1.bf16.msra.mxu0 %v3249
        %3318 = vmatprep.subr.bf16.mxu0 %v3252
        %3319 = vmatpush1.bf16.msra.mxu0 %v3251
        %3320 = vmatprep.subr.bf16.mxu0 %v3254
        %3321 = vmatpush1.bf16.msra.mxu0 %v3253
        %3322 = vmatprep.subr.bf16.mxu0 0
        %3323 = vmatpush1.bf16.msra.mxu0 0
        %3324 = vmatprep.subr.bf16.mxu0 0
        %3325 = vmatpush1.bf16.msra.mxu0 0
        %3326 = vmatprep.subr.bf16.mxu0 0
        %3327 = vmatpush1.bf16.msra.mxu0 0
        %3328 = vmatprep.subr.bf16.mxu0 0
        %3329 = vmatpush1.bf16.msra.mxu0 0
        %3330 = vmatprep.mubr.bf16.mxu0 %v3281
        %3331 = vmatmul.mubr.bf16.gmra.mrb[0].mxu0 %v3070
        %v3332 = vpop.f32.mrb[0].mxu0
        %v3333 = vadd.f32 0.0, %v3332
        %v3334 = vpop.f32.mrb[0].mxu0
        %v3335 = vadd.f32 0.0, %v3334
        %v3336 = vpop.f32.mrb[0].mxu0
        %v3337 = vadd.f32 0.0, %v3336
        %v3338 = vpop.f32.mrb[0].mxu0
        %v3339 = vadd.f32 0.0, %v3338
        %3340 = vmatprep.mubr.bf16.mxu0 %v3284
        %3341 = vmatmul.mubr.bf16.gmra.mrb[0].mxu0 %v3090
        %v3342 = vpop.f32.mrb[0].mxu0
        %v3343 = vadd.f32 0.0, %v3342
        %v3344 = vpop.f32.mrb[0].mxu0
        %v3345 = vadd.f32 0.0, %v3344
        %v3346 = vpop.f32.mrb[0].mxu0
        %v3347 = vadd.f32 0.0, %v3346
        %v3348 = vpop.f32.mrb[0].mxu0
        %v3349 = vadd.f32 0.0, %v3348
        %3350 = vmatprep.mubr.bf16.mxu0 %v3287
        %3351 = vmatmul.mubr.bf16.gmra.mrb[0].mxu0 %v3106
        %v3352 = vpop.f32.mrb[0].mxu0
        %v3353 = vadd.f32 0.0, %v3352
        %v3354 = vpop.f32.mrb[0].mxu0
        %v3355 = vadd.f32 0.0, %v3354
        %v3356 = vpop.f32.mrb[0].mxu0
        %v3357 = vadd.f32 0.0, %v3356
        %v3358 = vpop.f32.mrb[0].mxu0
        %v3359 = vadd.f32 0.0, %v3358
        %3360 = vmatprep.mubr.bf16.mxu0 %v3290
        %3361 = vmatmul.mubr.bf16.gmra.mrb[0].mxu0 %v3122
        %v3362 = vpop.f32.mrb[0].mxu0
        %v3363 = vadd.f32 0.0, %v3362
        %v3364 = vpop.f32.mrb[0].mxu0
        %v3365 = vadd.f32 0.0, %v3364
        %v3366 = vpop.f32.mrb[0].mxu0
        %v3367 = vadd.f32 0.0, %v3366
        %v3368 = vpop.f32.mrb[0].mxu0
        %v3369 = vadd.f32 0.0, %v3368
        %3370 = vmatprep.mubr.bf16.mxu0 %v3293
        %3371 = vmatmul.mubr.bf16.gmra.mrb[0].mxu0 %v3138
        %v3372 = vpop.f32.mrb[0].mxu0
        %v3373 = vadd.f32 0.0, %v3372
        %v3374 = vpop.f32.mrb[0].mxu0
        %v3375 = vadd.f32 0.0, %v3374
        %v3376 = vpop.f32.mrb[0].mxu0
        %v3377 = vadd.f32 0.0, %v3376
        %v3378 = vpop.f32.mrb[0].mxu0
        %v3379 = vadd.f32 0.0, %v3378
        %3380 = vmatprep.mubr.bf16.mxu0 %v3296
        %3381 = vmatmul.mubr.bf16.gmra.mrb[0].mxu0 %v3149
        %v3382 = vpop.f32.mrb[0].mxu0
        %v3383 = vadd.f32 0.0, %v3382
        %v3384 = vpop.f32.mrb[0].mxu0
        %v3385 = vadd.f32 0.0, %v3384
        %v3386 = vpop.f32.mrb[0].mxu0
        %v3387 = vadd.f32 0.0, %v3386
        %v3388 = vpop.f32.mrb[0].mxu0
        %v3389 = vadd.f32 0.0, %v3388
        %3390 = vdwg.mxu0
        %v3415 = vunpack.c.l.b16 %v3009
        %v3416 = vunpack.c.h.b16 %v3009
        %v3417 = vunpack.c.l.b16 %v3010
        %v3418 = vunpack.c.h.b16 %v3010
        %v3419 = vunpack.c.l.b16 %v3011
        %v3420 = vunpack.c.h.b16 %v3011
        %v3421 = vunpack.c.l.b16 %v3012
        %v3422 = vunpack.c.h.b16 %v3012
        %v3423 = vunpack.c.l.b16 %v3013
        %v3424 = vunpack.c.h.b16 %v3013
        %v3425 = vunpack.c.l.b16 %v3014
        %v3426 = vunpack.c.h.b16 %v3014
        %v3427 = vunpack.c.l.b16 %v3015
        %v3428 = vunpack.c.h.b16 %v3015
        %v3429 = vunpack.c.l.b16 %v3016
        %v3430 = vunpack.c.h.b16 %v3016
        %v3431 = vunpack.c.l.b16 %v3017
        %v3432 = vunpack.c.h.b16 %v3017
        %v3433 = vunpack.c.l.b16 %v3018
        %v3434 = vunpack.c.h.b16 %v3018
        %v3435 = vunpack.c.l.b16 %v3019
        %v3436 = vunpack.c.h.b16 %v3019
        %v3437 = vunpack.c.l.b16 %v3020
        %v3438 = vunpack.c.h.b16 %v3020
        %v3439 = vunpack.c.l.b16 %v3021
        %v3440 = vunpack.c.h.b16 %v3021
        %v3441 = vunpack.c.l.b16 %v3022
        %v3442 = vunpack.c.h.b16 %v3022
        %v3443 = vunpack.c.l.b16 %v3023
        %v3444 = vunpack.c.h.b16 %v3023
        %v3445 = vunpack.c.l.b16 %v3024
        %v3446 = vunpack.c.h.b16 %v3024
        %v3447 = vunpack.c.l.b16 %v3025
        %v3448 = vunpack.c.h.b16 %v3025
        %v3449 = vunpack.c.l.b16 %v3026
        %v3450 = vunpack.c.h.b16 %v3026
        %v3451 = vunpack.c.l.b16 %v3027
        %v3452 = vunpack.c.h.b16 %v3027
        %v3453 = vunpack.c.l.b16 %v3028
        %v3454 = vunpack.c.h.b16 %v3028
        %v3455 = vunpack.c.l.b16 %v3029
        %v3456 = vunpack.c.h.b16 %v3029
        %v3457 = vunpack.c.l.b16 %v3030
        %v3458 = vunpack.c.h.b16 %v3030
        %v3459 = vunpack.c.l.b16 %v3031
        %v3460 = vunpack.c.h.b16 %v3031
        %v3461 = vunpack.c.l.b16 %v3032
        %v3462 = vunpack.c.h.b16 %v3032
        %v3463 = vpack.c.b16 %v3417, %v3415
        %v3464 = vpack.c.b16 %v3418, %v3416
        %v3465 = vpack.c.b16 %v3421, %v3419
        %v3466 = vpack.c.b16 %v3422, %v3420
        %v3467 = vpack.c.b16 %v3425, %v3423
        %v3468 = vpack.c.b16 %v3426, %v3424
        %v3469 = vpack.c.b16 %v3429, %v3427
        %v3470 = vpack.c.b16 %v3430, %v3428
        %v3471 = vpack.c.b16 %v3433, %v3431
        %v3472 = vpack.c.b16 %v3434, %v3432
        %v3473 = vpack.c.b16 %v3437, %v3435
        %v3474 = vpack.c.b16 %v3438, %v3436
        %v3475 = vpack.c.b16 %v3441, %v3439
        %v3476 = vpack.c.b16 %v3442, %v3440
        %v3477 = vpack.c.b16 %v3445, %v3443
        %v3478 = vpack.c.b16 %v3446, %v3444
        %v3479 = vpack.c.b16 %v3449, %v3447
        %v3480 = vpack.c.b16 %v3450, %v3448
        %v3481 = vpack.c.b16 %v3453, %v3451
        %v3482 = vpack.c.b16 %v3454, %v3452
        %v3483 = vpack.c.b16 %v3457, %v3455
        %v3484 = vpack.c.b16 %v3458, %v3456
        %v3485 = vpack.c.b16 %v3461, %v3459
        %v3486 = vpack.c.b16 %v3462, %v3460
        %v3511 = vsel %vm3279, %v2998, 0
        %v3513 = vsel %vm3279, %v3000, 0
        %v3515 = vsel %vm3279, %v3002, 0
        %v3517 = vsel %vm3279, %v3004, 0
        %v3519 = vsel %vm3279, %v3006, 0
        %v3521 = vsel %vm3279, %v3008, 0
        %3523 = vmatprep.subr.bf16.mxu0 %v3464
        %3524 = vmatpush1.bf16.msra.mxu0 %v3463
        %3525 = vmatprep.subr.bf16.mxu0 %v3466
        %3526 = vmatpush1.bf16.msra.mxu0 %v3465
        %3527 = vmatprep.subr.bf16.mxu0 %v3468
        %3528 = vmatpush1.bf16.msra.mxu0 %v3467
        %3529 = vmatprep.subr.bf16.mxu0 %v3470
        %3530 = vmatpush1.bf16.msra.mxu0 %v3469
        %3531 = vmatprep.subr.bf16.mxu0 %v3472
        %3532 = vmatpush1.bf16.msra.mxu0 %v3471
        %3533 = vmatprep.subr.bf16.mxu0 %v3474
        %3534 = vmatpush1.bf16.msra.mxu0 %v3473
        %3535 = vmatprep.subr.bf16.mxu0 %v3476
        %3536 = vmatpush1.bf16.msra.mxu0 %v3475
        %3537 = vmatprep.subr.bf16.mxu0 %v3478
        %3538 = vmatpush1.bf16.msra.mxu0 %v3477
        %3539 = vmatprep.subr.bf16.mxu0 %v3480
        %3540 = vmatpush1.bf16.msra.mxu0 %v3479
        %3541 = vmatprep.subr.bf16.mxu0 %v3482
        %3542 = vmatpush1.bf16.msra.mxu0 %v3481
        %3543 = vmatprep.subr.bf16.mxu0 %v3484
        %3544 = vmatpush1.bf16.msra.mxu0 %v3483
        %3545 = vmatprep.subr.bf16.mxu0 %v3486
        %3546 = vmatpush1.bf16.msra.mxu0 %v3485
        %3547 = vmatprep.subr.bf16.mxu0 0
        %3548 = vmatpush1.bf16.msra.mxu0 0
        %3549 = vmatprep.subr.bf16.mxu0 0
        %3550 = vmatpush1.bf16.msra.mxu0 0
        %3551 = vmatprep.subr.bf16.mxu0 0
        %3552 = vmatpush1.bf16.msra.mxu0 0
        %3553 = vmatprep.subr.bf16.mxu0 0
        %3554 = vmatpush1.bf16.msra.mxu0 0
        %3555 = vmatprep.mubr.bf16.mxu0 %v3511
        %3556 = vmatmul.mubr.bf16.gmra.mrb[0].mxu0 %v2997
        %v3557 = vpop.f32.mrb[0].mxu0
        %v3558 = vadd.f32 %v3333, %v3557
        %v3559 = vpop.f32.mrb[0].mxu0
        %v3560 = vadd.f32 %v3335, %v3559
        %v3561 = vpop.f32.mrb[0].mxu0
        %v3562 = vadd.f32 %v3337, %v3561
        %v3563 = vpop.f32.mrb[0].mxu0
        %v3564 = vadd.f32 %v3339, %v3563
        %3565 = vmatprep.mubr.bf16.mxu0 %v3513
        %3566 = vmatmul.mubr.bf16.gmra.mrb[0].mxu0 %v2999
        %v3567 = vpop.f32.mrb[0].mxu0
        %v3568 = vadd.f32 %v3343, %v3567
        %v3569 = vpop.f32.mrb[0].mxu0
        %v3570 = vadd.f32 %v3345, %v3569
        %v3571 = vpop.f32.mrb[0].mxu0
        %v3572 = vadd.f32 %v3347, %v3571
        %v3573 = vpop.f32.mrb[0].mxu0
        %v3574 = vadd.f32 %v3349, %v3573
        %3575 = vmatprep.mubr.bf16.mxu0 %v3515
        %3576 = vmatmul.mubr.bf16.gmra.mrb[0].mxu0 %v3001
        %v3577 = vpop.f32.mrb[0].mxu0
        %v3578 = vadd.f32 %v3353, %v3577
        %v3579 = vpop.f32.mrb[0].mxu0
        %v3580 = vadd.f32 %v3355, %v3579
        %v3581 = vpop.f32.mrb[0].mxu0
        %v3582 = vadd.f32 %v3357, %v3581
        %v3583 = vpop.f32.mrb[0].mxu0
        %v3584 = vadd.f32 %v3359, %v3583
        %3585 = vmatprep.mubr.bf16.mxu0 %v3517
        %3586 = vmatmul.mubr.bf16.gmra.mrb[0].mxu0 %v3003
        %v3587 = vpop.f32.mrb[0].mxu0
        %v3588 = vadd.f32 %v3363, %v3587
        %v3589 = vpop.f32.mrb[0].mxu0
        %v3590 = vadd.f32 %v3365, %v3589
        %v3591 = vpop.f32.mrb[0].mxu0
        %v3592 = vadd.f32 %v3367, %v3591
        %v3593 = vpop.f32.mrb[0].mxu0
        %v3594 = vadd.f32 %v3369, %v3593
        %3595 = vmatprep.mubr.bf16.mxu0 %v3519
        %3596 = vmatmul.mubr.bf16.gmra.mrb[0].mxu0 %v3005
        %v3597 = vpop.f32.mrb[0].mxu0
        %v3598 = vadd.f32 %v3373, %v3597
        %v3599 = vpop.f32.mrb[0].mxu0
        %v3600 = vadd.f32 %v3375, %v3599
        %v3601 = vpop.f32.mrb[0].mxu0
        %v3602 = vadd.f32 %v3377, %v3601
        %v3603 = vpop.f32.mrb[0].mxu0
        %v3604 = vadd.f32 %v3379, %v3603
        %3605 = vmatprep.mubr.bf16.mxu0 %v3521
        %3606 = vmatmul.mubr.bf16.gmra.mrb[0].mxu0 %v3007
        %v3607 = vpop.f32.mrb[0].mxu0
        %v3608 = vadd.f32 %v3383, %v3607
        %v3609 = vpop.f32.mrb[0].mxu0
        %v3610 = vadd.f32 %v3385, %v3609
        %v3611 = vpop.f32.mrb[0].mxu0
        %v3612 = vadd.f32 %v3387, %v3611
        %v3613 = vpop.f32.mrb[0].mxu0
        %v3614 = vadd.f32 %v3389, %v3613
        %3615 = vdwg.mxu0
        %s3616 = scalar_lea.vmem %s5, 384
        %v3617 = vld [vmem:[%s3616] sm:$0xff]
        %v3618 = vld [vmem:[%s3616 + $0x8] sm:$0xff]
        %v3619 = vld [vmem:[%s3616 + $0x10] sm:$0xff]
        %v3620 = vld [vmem:[%s3616 + $0x18] sm:$0xff]
        %v3621 = vld [vmem:[%s3616 + $0x20] sm:$0xff]
        %v3622 = vld [vmem:[%s3616 + $0x28] sm:$0xff]
        %v3623 = vld [vmem:[%s3616 + $0x30] sm:$0xff]
        %v3624 = vld [vmem:[%s3616 + $0x38] sm:$0xff]
        %v3625 = vld [vmem:[%s3616 + $0x40] sm:$0xff]
        %v3626 = vld [vmem:[%s3616 + $0x48] sm:$0xff]
        %v3627 = vld [vmem:[%s3616 + $0x50] sm:$0xff]
        %v3628 = vld [vmem:[%s3616 + $0x58] sm:$0xff]
        %v3629 = vld [vmem:[%s3616 + $0x60] sm:$0xff]
        %v3630 = vld [vmem:[%s3616 + $0x68] sm:$0xff]
        %v3631 = vld [vmem:[%s3616 + $0x70] sm:$0xff]
        %v3632 = vld [vmem:[%s3616 + $0x78] sm:$0xff]
        %v3633 = vld [vmem:[%s3616 + $0x80] sm:$0xff]
        %v3634 = vld [vmem:[%s3616 + $0x88] sm:$0xff]
        %v3635 = vld [vmem:[%s3616 + $0x90] sm:$0xff]
        %v3636 = vld [vmem:[%s3616 + $0x98] sm:$0xff]
        %v3637 = vld [vmem:[%s3616 + $0xa0] sm:$0xff]
        %v3638 = vld [vmem:[%s3616 + $0xa8] sm:$0xff]
        %v3639 = vld [vmem:[%s3616 + $0xb0] sm:$0xff]
        %v3640 = vld [vmem:[%s3616 + $0xb8] sm:$0xff]
        %vm3653 = vcmask 1046528
        %v3654 = vrot.slane %v2997, 1
        %v3655 = vrot.slane %v2999, 1
        %v3656 = vsel %vm3653, %v3654, %v3655
        %v3657 = vrot.slane %v2998, 1
        %v3658 = vrot.slane %v3000, 1
        %v3659 = vsel %vm3653, %v3657, %v3658
        %v3660 = vrot.slane %v3001, 1
        %v3661 = vsel %vm3653, %v3655, %v3660
        %v3662 = vrot.slane %v3002, 1
        %v3663 = vsel %vm3653, %v3658, %v3662
        %v3664 = vrot.slane %v3003, 1
        %v3665 = vsel %vm3653, %v3660, %v3664
        %v3666 = vrot.slane %v3004, 1
        %v3667 = vsel %vm3653, %v3662, %v3666
        %v3668 = vrot.slane %v3005, 1
        %v3669 = vsel %vm3653, %v3664, %v3668
        %v3670 = vrot.slane %v3006, 1
        %v3671 = vsel %vm3653, %v3666, %v3670
        %v3672 = vrot.slane %v3007, 1
        %v3673 = vsel %vm3653, %v3668, %v3672
        %v3674 = vrot.slane %v3008, 1
        %v3675 = vsel %vm3653, %v3670, %v3674
        %v3706 = vunpack.c.l.b16 %v3617
        %v3707 = vunpack.c.h.b16 %v3617
        %v3708 = vunpack.c.l.b16 %v3618
        %v3709 = vunpack.c.h.b16 %v3618
        %v3710 = vunpack.c.l.b16 %v3619
        %v3711 = vunpack.c.h.b16 %v3619
        %v3712 = vunpack.c.l.b16 %v3620
        %v3713 = vunpack.c.h.b16 %v3620
        %v3714 = vunpack.c.l.b16 %v3621
        %v3715 = vunpack.c.h.b16 %v3621
        %v3716 = vunpack.c.l.b16 %v3622
        %v3717 = vunpack.c.h.b16 %v3622
        %v3718 = vunpack.c.l.b16 %v3623
        %v3719 = vunpack.c.h.b16 %v3623
        %v3720 = vunpack.c.l.b16 %v3624
        %v3721 = vunpack.c.h.b16 %v3624
        %v3722 = vunpack.c.l.b16 %v3625
        %v3723 = vunpack.c.h.b16 %v3625
        %v3724 = vunpack.c.l.b16 %v3626
        %v3725 = vunpack.c.h.b16 %v3626
        %v3726 = vunpack.c.l.b16 %v3627
        %v3727 = vunpack.c.h.b16 %v3627
        %v3728 = vunpack.c.l.b16 %v3628
        %v3729 = vunpack.c.h.b16 %v3628
        %v3730 = vunpack.c.l.b16 %v3629
        %v3731 = vunpack.c.h.b16 %v3629
        %v3732 = vunpack.c.l.b16 %v3630
        %v3733 = vunpack.c.h.b16 %v3630
        %v3734 = vunpack.c.l.b16 %v3631
        %v3735 = vunpack.c.h.b16 %v3631
        %v3736 = vunpack.c.l.b16 %v3632
        %v3737 = vunpack.c.h.b16 %v3632
        %v3738 = vunpack.c.l.b16 %v3633
        %v3739 = vunpack.c.h.b16 %v3633
        %v3740 = vunpack.c.l.b16 %v3634
        %v3741 = vunpack.c.h.b16 %v3634
        %v3742 = vunpack.c.l.b16 %v3635
        %v3743 = vunpack.c.h.b16 %v3635
        %v3744 = vunpack.c.l.b16 %v3636
        %v3745 = vunpack.c.h.b16 %v3636
        %v3746 = vunpack.c.l.b16 %v3637
        %v3747 = vunpack.c.h.b16 %v3637
        %v3748 = vunpack.c.l.b16 %v3638
        %v3749 = vunpack.c.h.b16 %v3638
        %v3750 = vunpack.c.l.b16 %v3639
        %v3751 = vunpack.c.h.b16 %v3639
        %v3752 = vunpack.c.l.b16 %v3640
        %v3753 = vunpack.c.h.b16 %v3640
        %v3754 = vpack.c.b16 %v3708, %v3706
        %v3755 = vpack.c.b16 %v3709, %v3707
        %v3756 = vpack.c.b16 %v3712, %v3710
        %v3757 = vpack.c.b16 %v3713, %v3711
        %v3758 = vpack.c.b16 %v3716, %v3714
        %v3759 = vpack.c.b16 %v3717, %v3715
        %v3760 = vpack.c.b16 %v3720, %v3718
        %v3761 = vpack.c.b16 %v3721, %v3719
        %v3762 = vpack.c.b16 %v3724, %v3722
        %v3763 = vpack.c.b16 %v3725, %v3723
        %v3764 = vpack.c.b16 %v3728, %v3726
        %v3765 = vpack.c.b16 %v3729, %v3727
        %v3766 = vpack.c.b16 %v3732, %v3730
        %v3767 = vpack.c.b16 %v3733, %v3731
        %v3768 = vpack.c.b16 %v3736, %v3734
        %v3769 = vpack.c.b16 %v3737, %v3735
        %v3770 = vpack.c.b16 %v3740, %v3738
        %v3771 = vpack.c.b16 %v3741, %v3739
        %v3772 = vpack.c.b16 %v3744, %v3742
        %v3773 = vpack.c.b16 %v3745, %v3743
        %v3774 = vpack.c.b16 %v3748, %v3746
        %v3775 = vpack.c.b16 %v3749, %v3747
        %v3776 = vpack.c.b16 %v3752, %v3750
        %v3777 = vpack.c.b16 %v3753, %v3751
        %v3803 = vsel %vm3279, %v3659, 0
        %v3806 = vsel %vm3279, %v3663, 0
        %v3809 = vsel %vm3279, %v3667, 0
        %v3812 = vsel %vm3279, %v3671, 0
        %v3815 = vsel %vm3279, %v3675, 0
        %v3818 = vsel %vm3279, %v3674, 0
        %3820 = vmatprep.subr.bf16.mxu0 %v3755
        %3821 = vmatpush1.bf16.msra.mxu0 %v3754
        %3822 = vmatprep.subr.bf16.mxu0 %v3757
        %3823 = vmatpush1.bf16.msra.mxu0 %v3756
        %3824 = vmatprep.subr.bf16.mxu0 %v3759
        %3825 = vmatpush1.bf16.msra.mxu0 %v3758
        %3826 = vmatprep.subr.bf16.mxu0 %v3761
        %3827 = vmatpush1.bf16.msra.mxu0 %v3760
        %3828 = vmatprep.subr.bf16.mxu0 %v3763
        %3829 = vmatpush1.bf16.msra.mxu0 %v3762
        %3830 = vmatprep.subr.bf16.mxu0 %v3765
        %3831 = vmatpush1.bf16.msra.mxu0 %v3764
        %3832 = vmatprep.subr.bf16.mxu0 %v3767
        %3833 = vmatpush1.bf16.msra.mxu0 %v3766
        %3834 = vmatprep.subr.bf16.mxu0 %v3769
        %3835 = vmatpush1.bf16.msra.mxu0 %v3768
        %3836 = vmatprep.subr.bf16.mxu0 %v3771
        %3837 = vmatpush1.bf16.msra.mxu0 %v3770
        %3838 = vmatprep.subr.bf16.mxu0 %v3773
        %3839 = vmatpush1.bf16.msra.mxu0 %v3772
        %3840 = vmatprep.subr.bf16.mxu0 %v3775
        %3841 = vmatpush1.bf16.msra.mxu0 %v3774
        %3842 = vmatprep.subr.bf16.mxu0 %v3777
        %3843 = vmatpush1.bf16.msra.mxu0 %v3776
        %3844 = vmatprep.subr.bf16.mxu0 0
        %3845 = vmatpush1.bf16.msra.mxu0 0
        %3846 = vmatprep.subr.bf16.mxu0 0
        %3847 = vmatpush1.bf16.msra.mxu0 0
        %3848 = vmatprep.subr.bf16.mxu0 0
        %3849 = vmatpush1.bf16.msra.mxu0 0
        %3850 = vmatprep.subr.bf16.mxu0 0
        %3851 = vmatpush1.bf16.msra.mxu0 0
        %3852 = vmatprep.mubr.bf16.mxu0 %v3803
        %3853 = vmatmul.mubr.bf16.gmra.mrb[0].mxu0 %v3656
        %v3854 = vpop.f32.mrb[0].mxu0
        %v3855 = vadd.f32 0.0, %v3854
        %v3856 = vpop.f32.mrb[0].mxu0
        %v3857 = vadd.f32 0.0, %v3856
        %v3858 = vpop.f32.mrb[0].mxu0
        %v3859 = vadd.f32 0.0, %v3858
        %v3860 = vpop.f32.mrb[0].mxu0
        %v3861 = vadd.f32 0.0, %v3860
        %3862 = vmatprep.mubr.bf16.mxu0 %v3806
        %3863 = vmatmul.mubr.bf16.gmra.mrb[0].mxu0 %v3661
        %v3864 = vpop.f32.mrb[0].mxu0
        %v3865 = vadd.f32 0.0, %v3864
        %v3866 = vpop.f32.mrb[0].mxu0
        %v3867 = vadd.f32 0.0, %v3866
        %v3868 = vpop.f32.mrb[0].mxu0
        %v3869 = vadd.f32 0.0, %v3868
        %v3870 = vpop.f32.mrb[0].mxu0
        %v3871 = vadd.f32 0.0, %v3870
        %3872 = vmatprep.mubr.bf16.mxu0 %v3809
        %3873 = vmatmul.mubr.bf16.gmra.mrb[0].mxu0 %v3665
        %v3874 = vpop.f32.mrb[0].mxu0
        %v3875 = vadd.f32 0.0, %v3874
        %v3876 = vpop.f32.mrb[0].mxu0
        %v3877 = vadd.f32 0.0, %v3876
        %v3878 = vpop.f32.mrb[0].mxu0
        %v3879 = vadd.f32 0.0, %v3878
        %v3880 = vpop.f32.mrb[0].mxu0
        %v3881 = vadd.f32 0.0, %v3880
        %3882 = vmatprep.mubr.bf16.mxu0 %v3812
        %3883 = vmatmul.mubr.bf16.gmra.mrb[0].mxu0 %v3669
        %v3884 = vpop.f32.mrb[0].mxu0
        %v3885 = vadd.f32 0.0, %v3884
        %v3886 = vpop.f32.mrb[0].mxu0
        %v3887 = vadd.f32 0.0, %v3886
        %v3888 = vpop.f32.mrb[0].mxu0
        %v3889 = vadd.f32 0.0, %v3888
        %v3890 = vpop.f32.mrb[0].mxu0
        %v3891 = vadd.f32 0.0, %v3890
        %3892 = vmatprep.mubr.bf16.mxu0 %v3815
        %3893 = vmatmul.mubr.bf16.gmra.mrb[0].mxu0 %v3673
        %v3894 = vpop.f32.mrb[0].mxu0
        %v3895 = vadd.f32 0.0, %v3894
        %v3896 = vpop.f32.mrb[0].mxu0
        %v3897 = vadd.f32 0.0, %v3896
        %v3898 = vpop.f32.mrb[0].mxu0
        %v3899 = vadd.f32 0.0, %v3898
        %v3900 = vpop.f32.mrb[0].mxu0
        %v3901 = vadd.f32 0.0, %v3900
        %3902 = vmatprep.mubr.bf16.mxu0 %v3818
        %3903 = vmatmul.mubr.bf16.gmra.mrb[0].mxu0 %v3672
        %v3904 = vpop.f32.mrb[0].mxu0
        %v3905 = vadd.f32 0.0, %v3904
        %v3906 = vpop.f32.mrb[0].mxu0
        %v3907 = vadd.f32 0.0, %v3906
        %v3908 = vpop.f32.mrb[0].mxu0
        %v3909 = vadd.f32 0.0, %v3908
        %v3910 = vpop.f32.mrb[0].mxu0
        %v3911 = vadd.f32 0.0, %v3910
        %3912 = vdwg.mxu0
        %v3913 = vadd.f32 %v3558, %v3855
        %v3914 = vadd.f32 %v3560, %v3857
        %v3915 = vadd.f32 %v3562, %v3859
        %v3916 = vadd.f32 %v3564, %v3861
        %v3917 = vadd.f32 %v3568, %v3865
        %v3918 = vadd.f32 %v3570, %v3867
        %v3919 = vadd.f32 %v3572, %v3869
        %v3920 = vadd.f32 %v3574, %v3871
        %v3921 = vadd.f32 %v3578, %v3875
        %v3922 = vadd.f32 %v3580, %v3877
        %v3923 = vadd.f32 %v3582, %v3879
        %v3924 = vadd.f32 %v3584, %v3881
        %v3925 = vadd.f32 %v3588, %v3885
        %v3926 = vadd.f32 %v3590, %v3887
        %v3927 = vadd.f32 %v3592, %v3889
        %v3928 = vadd.f32 %v3594, %v3891
        %v3929 = vadd.f32 %v3598, %v3895
        %v3930 = vadd.f32 %v3600, %v3897
        %v3931 = vadd.f32 %v3602, %v3899
        %v3932 = vadd.f32 %v3604, %v3901
        %v3933 = vadd.f32 %v3608, %v3905
        %v3934 = vadd.f32 %v3610, %v3907
        %v3935 = vadd.f32 %v3612, %v3909
        %v3936 = vadd.f32 %v3614, %v3911
        %s3937 = scalar_lea.vmem %s5, 576
        %v3938 = vld [vmem:[%s3937] sm:$0xff]
        %v3939 = vld [vmem:[%s3937 + $0x8] sm:$0xff]
        %v3940 = vld [vmem:[%s3937 + $0x10] sm:$0xff]
        %v3941 = vld [vmem:[%s3937 + $0x18] sm:$0xff]
        %v3942 = vld [vmem:[%s3937 + $0x20] sm:$0xff]
        %v3943 = vld [vmem:[%s3937 + $0x28] sm:$0xff]
        %v3944 = vld [vmem:[%s3937 + $0x30] sm:$0xff]
        %v3945 = vld [vmem:[%s3937 + $0x38] sm:$0xff]
        %v3946 = vld [vmem:[%s3937 + $0x40] sm:$0xff]
        %v3947 = vld [vmem:[%s3937 + $0x48] sm:$0xff]
        %v3948 = vld [vmem:[%s3937 + $0x50] sm:$0xff]
        %v3949 = vld [vmem:[%s3937 + $0x58] sm:$0xff]
        %v3950 = vld [vmem:[%s3937 + $0x60] sm:$0xff]
        %v3951 = vld [vmem:[%s3937 + $0x68] sm:$0xff]
        %v3952 = vld [vmem:[%s3937 + $0x70] sm:$0xff]
        %v3953 = vld [vmem:[%s3937 + $0x78] sm:$0xff]
        %v3954 = vld [vmem:[%s3937 + $0x80] sm:$0xff]
        %v3955 = vld [vmem:[%s3937 + $0x88] sm:$0xff]
        %v3956 = vld [vmem:[%s3937 + $0x90] sm:$0xff]
        %v3957 = vld [vmem:[%s3937 + $0x98] sm:$0xff]
        %v3958 = vld [vmem:[%s3937 + $0xa0] sm:$0xff]
        %v3959 = vld [vmem:[%s3937 + $0xa8] sm:$0xff]
        %v3960 = vld [vmem:[%s3937 + $0xb0] sm:$0xff]
        %v3961 = vld [vmem:[%s3937 + $0xb8] sm:$0xff]
        %vm3962 = vsmask.f32 6400
        %v3963 = vrot.slane %v3060, 1
        %v3964 = vrot.slane %v3062, 2
        %v3965 = vor.u32 %v3963, %v3964
        %v3966 = vrot.slane %v3083, 1
        %v3967 = vrot.slane %v3067, 2
        %v3968 = vor.u32 %v3966, %v3967
        %v3969 = vsel %vm3962, %v3965, %v3968
        %v3970 = vrot.slane %v3072, 1
        %v3971 = vrot.slane %v3074, 2
        %v3972 = vor.u32 %v3970, %v3971
        %v3973 = vrot.slane %v3091, 1
        %v3974 = vrot.slane %v3079, 2
        %v3975 = vor.u32 %v3973, %v3974
        %v3976 = vsel %vm3962, %v3972, %v3975
        %v3977 = vrot.slane %v3099, 1
        %v3978 = vrot.slane %v3087, 2
        %v3979 = vor.u32 %v3977, %v3978
        %v3980 = vsel %vm3962, %v3968, %v3979
        %v3981 = vrot.slane %v3107, 1
        %v3982 = vrot.slane %v3095, 2
        %v3983 = vor.u32 %v3981, %v3982
        %v3984 = vsel %vm3962, %v3975, %v3983
        %v3985 = vrot.slane %v3115, 1
        %v3986 = vrot.slane %v3103, 2
        %v3987 = vor.u32 %v3985, %v3986
        %v3988 = vsel %vm3962, %v3979, %v3987
        %v3989 = vrot.slane %v3123, 1
        %v3990 = vrot.slane %v3111, 2
        %v3991 = vor.u32 %v3989, %v3990
        %v3992 = vsel %vm3962, %v3983, %v3991
        %v3993 = vrot.slane %v3131, 1
        %v3994 = vrot.slane %v3119, 2
        %v3995 = vor.u32 %v3993, %v3994
        %v3996 = vsel %vm3962, %v3987, %v3995
        %v3997 = vrot.slane %v3139, 1
        %v3998 = vrot.slane %v3127, 2
        %v3999 = vor.u32 %v3997, %v3998
        %v4000 = vsel %vm3962, %v3991, %v3999
        %v4001 = vrot.slane %v3147, 1
        %v4002 = vrot.slane %v3135, 2
        %v4003 = vor.u32 %v4001, %v4002
        %v4004 = vsel %vm3962, %v3995, %v4003
        %v4005 = vrot.slane %v3150, 1
        %v4006 = vrot.slane %v3143, 2
        %v4007 = vor.u32 %v4005, %v4006
        %v4008 = vsel %vm3962, %v3999, %v4007
        %v4039 = vunpack.c.l.b16 %v3938
        %v4040 = vunpack.c.h.b16 %v3938
        %v4041 = vunpack.c.l.b16 %v3939
        %v4042 = vunpack.c.h.b16 %v3939
        %v4043 = vunpack.c.l.b16 %v3940
        %v4044 = vunpack.c.h.b16 %v3940
        %v4045 = vunpack.c.l.b16 %v3941
        %v4046 = vunpack.c.h.b16 %v3941
        %v4047 = vunpack.c.l.b16 %v3942
        %v4048 = vunpack.c.h.b16 %v3942
        %v4049 = vunpack.c.l.b16 %v3943
        %v4050 = vunpack.c.h.b16 %v3943
        %v4051 = vunpack.c.l.b16 %v3944
        %v4052 = vunpack.c.h.b16 %v3944
        %v4053 = vunpack.c.l.b16 %v3945
        %v4054 = vunpack.c.h.b16 %v3945
        %v4055 = vunpack.c.l.b16 %v3946
        %v4056 = vunpack.c.h.b16 %v3946
        %v4057 = vunpack.c.l.b16 %v3947
        %v4058 = vunpack.c.h.b16 %v3947
        %v4059 = vunpack.c.l.b16 %v3948
        %v4060 = vunpack.c.h.b16 %v3948
        %v4061 = vunpack.c.l.b16 %v3949
        %v4062 = vunpack.c.h.b16 %v3949
        %v4063 = vunpack.c.l.b16 %v3950
        %v4064 = vunpack.c.h.b16 %v3950
        %v4065 = vunpack.c.l.b16 %v3951
        %v4066 = vunpack.c.h.b16 %v3951
        %v4067 = vunpack.c.l.b16 %v3952
        %v4068 = vunpack.c.h.b16 %v3952
        %v4069 = vunpack.c.l.b16 %v3953
        %v4070 = vunpack.c.h.b16 %v3953
        %v4071 = vunpack.c.l.b16 %v3954
        %v4072 = vunpack.c.h.b16 %v3954
        %v4073 = vunpack.c.l.b16 %v3955
        %v4074 = vunpack.c.h.b16 %v3955
        %v4075 = vunpack.c.l.b16 %v3956
        %v4076 = vunpack.c.h.b16 %v3956
        %v4077 = vunpack.c.l.b16 %v3957
        %v4078 = vunpack.c.h.b16 %v3957
        %v4079 = vunpack.c.l.b16 %v3958
        %v4080 = vunpack.c.h.b16 %v3958
        %v4081 = vunpack.c.l.b16 %v3959
        %v4082 = vunpack.c.h.b16 %v3959
        %v4083 = vunpack.c.l.b16 %v3960
        %v4084 = vunpack.c.h.b16 %v3960
        %v4085 = vunpack.c.l.b16 %v3961
        %v4086 = vunpack.c.h.b16 %v3961
        %v4087 = vpack.c.b16 %v4041, %v4039
        %v4088 = vpack.c.b16 %v4042, %v4040
        %v4089 = vpack.c.b16 %v4045, %v4043
        %v4090 = vpack.c.b16 %v4046, %v4044
        %v4091 = vpack.c.b16 %v4049, %v4047
        %v4092 = vpack.c.b16 %v4050, %v4048
        %v4093 = vpack.c.b16 %v4053, %v4051
        %v4094 = vpack.c.b16 %v4054, %v4052
        %v4095 = vpack.c.b16 %v4057, %v4055
        %v4096 = vpack.c.b16 %v4058, %v4056
        %v4097 = vpack.c.b16 %v4061, %v4059
        %v4098 = vpack.c.b16 %v4062, %v4060
        %v4099 = vpack.c.b16 %v4065, %v4063
        %v4100 = vpack.c.b16 %v4066, %v4064
        %v4101 = vpack.c.b16 %v4069, %v4067
        %v4102 = vpack.c.b16 %v4070, %v4068
        %v4103 = vpack.c.b16 %v4073, %v4071
        %v4104 = vpack.c.b16 %v4074, %v4072
        %v4105 = vpack.c.b16 %v4077, %v4075
        %v4106 = vpack.c.b16 %v4078, %v4076
        %v4107 = vpack.c.b16 %v4081, %v4079
        %v4108 = vpack.c.b16 %v4082, %v4080
        %v4109 = vpack.c.b16 %v4085, %v4083
        %v4110 = vpack.c.b16 %v4086, %v4084
        %v4136 = vsel %vm3279, %v3976, 0
        %v4139 = vsel %vm3279, %v3984, 0
        %v4142 = vsel %vm3279, %v3992, 0
        %v4145 = vsel %vm3279, %v4000, 0
        %v4148 = vsel %vm3279, %v4008, 0
        %v4151 = vsel %vm3279, %v4007, 0
        %4153 = vmatprep.subr.bf16.mxu0 %v4088
        %4154 = vmatpush1.bf16.msra.mxu0 %v4087
        %4155 = vmatprep.subr.bf16.mxu0 %v4090
        %4156 = vmatpush1.bf16.msra.mxu0 %v4089
        %4157 = vmatprep.subr.bf16.mxu0 %v4092
        %4158 = vmatpush1.bf16.msra.mxu0 %v4091
        %4159 = vmatprep.subr.bf16.mxu0 %v4094
        %4160 = vmatpush1.bf16.msra.mxu0 %v4093
        %4161 = vmatprep.subr.bf16.mxu0 %v4096
        %4162 = vmatpush1.bf16.msra.mxu0 %v4095
        %4163 = vmatprep.subr.bf16.mxu0 %v4098
        %4164 = vmatpush1.bf16.msra.mxu0 %v4097
        %4165 = vmatprep.subr.bf16.mxu0 %v4100
        %4166 = vmatpush1.bf16.msra.mxu0 %v4099
        %4167 = vmatprep.subr.bf16.mxu0 %v4102
        %4168 = vmatpush1.bf16.msra.mxu0 %v4101
        %4169 = vmatprep.subr.bf16.mxu0 %v4104
        %4170 = vmatpush1.bf16.msra.mxu0 %v4103
        %4171 = vmatprep.subr.bf16.mxu0 %v4106
        %4172 = vmatpush1.bf16.msra.mxu0 %v4105
        %4173 = vmatprep.subr.bf16.mxu0 %v4108
        %4174 = vmatpush1.bf16.msra.mxu0 %v4107
        %4175 = vmatprep.subr.bf16.mxu0 %v4110
        %4176 = vmatpush1.bf16.msra.mxu0 %v4109
        %4177 = vmatprep.subr.bf16.mxu0 0
        %4178 = vmatpush1.bf16.msra.mxu0 0
        %4179 = vmatprep.subr.bf16.mxu0 0
        %4180 = vmatpush1.bf16.msra.mxu0 0
        %4181 = vmatprep.subr.bf16.mxu0 0
        %4182 = vmatpush1.bf16.msra.mxu0 0
        %4183 = vmatprep.subr.bf16.mxu0 0
        %4184 = vmatpush1.bf16.msra.mxu0 0
        %4185 = vmatprep.mubr.bf16.mxu0 %v4136
        %4186 = vmatmul.mubr.bf16.gmra.mrb[0].mxu0 %v3969
        %v4187 = vpop.f32.mrb[0].mxu0
        %v4188 = vadd.f32 0.0, %v4187
        %v4189 = vpop.f32.mrb[0].mxu0
        %v4190 = vadd.f32 0.0, %v4189
        %v4191 = vpop.f32.mrb[0].mxu0
        %v4192 = vadd.f32 0.0, %v4191
        %v4193 = vpop.f32.mrb[0].mxu0
        %v4194 = vadd.f32 0.0, %v4193
        %4195 = vmatprep.mubr.bf16.mxu0 %v4139
        %4196 = vmatmul.mubr.bf16.gmra.mrb[0].mxu0 %v3980
        %v4197 = vpop.f32.mrb[0].mxu0
        %v4198 = vadd.f32 0.0, %v4197
        %v4199 = vpop.f32.mrb[0].mxu0
        %v4200 = vadd.f32 0.0, %v4199
        %v4201 = vpop.f32.mrb[0].mxu0
        %v4202 = vadd.f32 0.0, %v4201
        %v4203 = vpop.f32.mrb[0].mxu0
        %v4204 = vadd.f32 0.0, %v4203
        %4205 = vmatprep.mubr.bf16.mxu0 %v4142
        %4206 = vmatmul.mubr.bf16.gmra.mrb[0].mxu0 %v3988
        %v4207 = vpop.f32.mrb[0].mxu0
        %v4208 = vadd.f32 0.0, %v4207
        %v4209 = vpop.f32.mrb[0].mxu0
        %v4210 = vadd.f32 0.0, %v4209
        %v4211 = vpop.f32.mrb[0].mxu0
        %v4212 = vadd.f32 0.0, %v4211
        %v4213 = vpop.f32.mrb[0].mxu0
        %v4214 = vadd.f32 0.0, %v4213
        %4215 = vmatprep.mubr.bf16.mxu0 %v4145
        %4216 = vmatmul.mubr.bf16.gmra.mrb[0].mxu0 %v3996
        %v4217 = vpop.f32.mrb[0].mxu0
        %v4218 = vadd.f32 0.0, %v4217
        %v4219 = vpop.f32.mrb[0].mxu0
        %v4220 = vadd.f32 0.0, %v4219
        %v4221 = vpop.f32.mrb[0].mxu0
        %v4222 = vadd.f32 0.0, %v4221
        %v4223 = vpop.f32.mrb[0].mxu0
        %v4224 = vadd.f32 0.0, %v4223
        %4225 = vmatprep.mubr.bf16.mxu0 %v4148
        %4226 = vmatmul.mubr.bf16.gmra.mrb[0].mxu0 %v4004
        %v4227 = vpop.f32.mrb[0].mxu0
        %v4228 = vadd.f32 0.0, %v4227
        %v4229 = vpop.f32.mrb[0].mxu0
        %v4230 = vadd.f32 0.0, %v4229
        %v4231 = vpop.f32.mrb[0].mxu0
        %v4232 = vadd.f32 0.0, %v4231
        %v4233 = vpop.f32.mrb[0].mxu0
        %v4234 = vadd.f32 0.0, %v4233
        %4235 = vmatprep.mubr.bf16.mxu0 %v4151
        %4236 = vmatmul.mubr.bf16.gmra.mrb[0].mxu0 %v4003
        %v4237 = vpop.f32.mrb[0].mxu0
        %v4238 = vadd.f32 0.0, %v4237
        %v4239 = vpop.f32.mrb[0].mxu0
        %v4240 = vadd.f32 0.0, %v4239
        %v4241 = vpop.f32.mrb[0].mxu0
        %v4242 = vadd.f32 0.0, %v4241
        %v4243 = vpop.f32.mrb[0].mxu0
        %v4244 = vadd.f32 0.0, %v4243
        %4245 = vdwg.mxu0
        %v4246 = vadd.f32 %v3913, %v4188
        %v4247 = vadd.f32 %v3914, %v4190
        %v4248 = vadd.f32 %v3915, %v4192
        %v4249 = vadd.f32 %v3916, %v4194
        %v4250 = vadd.f32 %v3917, %v4198
        %v4251 = vadd.f32 %v3918, %v4200
        %v4252 = vadd.f32 %v3919, %v4202
        %v4253 = vadd.f32 %v3920, %v4204
        %v4254 = vadd.f32 %v3921, %v4208
        %v4255 = vadd.f32 %v3922, %v4210
        %v4256 = vadd.f32 %v3923, %v4212
        %v4257 = vadd.f32 %v3924, %v4214
        %v4258 = vadd.f32 %v3925, %v4218
        %v4259 = vadd.f32 %v3926, %v4220
        %v4260 = vadd.f32 %v3927, %v4222
        %v4261 = vadd.f32 %v3928, %v4224
        %v4262 = vadd.f32 %v3929, %v4228
        %v4263 = vadd.f32 %v3930, %v4230
        %v4264 = vadd.f32 %v3931, %v4232
        %v4265 = vadd.f32 %v3932, %v4234
        %v4266 = vadd.f32 %v3933, %v4238
        %v4267 = vadd.f32 %v3934, %v4240
        %v4268 = vadd.f32 %v3935, %v4242
        %v4269 = vadd.f32 %v3936, %v4244
        %s4270 = scalar_lea.vmem %s5, 768
        %v4271 = vld [vmem:[%s4270] sm:$0xff]
        %v4272 = vld [vmem:[%s4270 + $0x8] sm:$0xff]
        %v4273 = vld [vmem:[%s4270 + $0x10] sm:$0xff]
        %v4274 = vld [vmem:[%s4270 + $0x18] sm:$0xff]
        %v4275 = vld [vmem:[%s4270 + $0x20] sm:$0xff]
        %v4276 = vld [vmem:[%s4270 + $0x28] sm:$0xff]
        %v4277 = vld [vmem:[%s4270 + $0x30] sm:$0xff]
        %v4278 = vld [vmem:[%s4270 + $0x38] sm:$0xff]
        %v4279 = vld [vmem:[%s4270 + $0x40] sm:$0xff]
        %v4280 = vld [vmem:[%s4270 + $0x48] sm:$0xff]
        %v4281 = vld [vmem:[%s4270 + $0x50] sm:$0xff]
        %v4282 = vld [vmem:[%s4270 + $0x58] sm:$0xff]
        %v4283 = vld [vmem:[%s4270 + $0x60] sm:$0xff]
        %v4284 = vld [vmem:[%s4270 + $0x68] sm:$0xff]
        %v4285 = vld [vmem:[%s4270 + $0x70] sm:$0xff]
        %v4286 = vld [vmem:[%s4270 + $0x78] sm:$0xff]
        %v4287 = vld [vmem:[%s4270 + $0x80] sm:$0xff]
        %v4288 = vld [vmem:[%s4270 + $0x88] sm:$0xff]
        %v4289 = vld [vmem:[%s4270 + $0x90] sm:$0xff]
        %v4290 = vld [vmem:[%s4270 + $0x98] sm:$0xff]
        %v4291 = vld [vmem:[%s4270 + $0xa0] sm:$0xff]
        %v4292 = vld [vmem:[%s4270 + $0xa8] sm:$0xff]
        %v4293 = vld [vmem:[%s4270 + $0xb0] sm:$0xff]
        %v4294 = vld [vmem:[%s4270 + $0xb8] sm:$0xff]
        %vm4295 = vcmask 1045504
        %v4296 = vrot.slane %v2997, 2
        %v4297 = vrot.slane %v2999, 2
        %v4298 = vsel %vm4295, %v4296, %v4297
        %v4299 = vrot.slane %v2998, 2
        %v4300 = vrot.slane %v3000, 2
        %v4301 = vsel %vm4295, %v4299, %v4300
        %v4302 = vrot.slane %v3001, 2
        %v4303 = vsel %vm4295, %v4297, %v4302
        %v4304 = vrot.slane %v3002, 2
        %v4305 = vsel %vm4295, %v4300, %v4304
        %v4306 = vrot.slane %v3003, 2
        %v4307 = vsel %vm4295, %v4302, %v4306
        %v4308 = vrot.slane %v3004, 2
        %v4309 = vsel %vm4295, %v4304, %v4308
        %v4310 = vrot.slane %v3005, 2
        %v4311 = vsel %vm4295, %v4306, %v4310
        %v4312 = vrot.slane %v3006, 2
        %v4313 = vsel %vm4295, %v4308, %v4312
        %v4314 = vrot.slane %v3007, 2
        %v4315 = vsel %vm4295, %v4310, %v4314
        %v4316 = vrot.slane %v3008, 2
        %v4317 = vsel %vm4295, %v4312, %v4316
        %v4348 = vunpack.c.l.b16 %v4271
        %v4349 = vunpack.c.h.b16 %v4271
        %v4350 = vunpack.c.l.b16 %v4272
        %v4351 = vunpack.c.h.b16 %v4272
        %v4352 = vunpack.c.l.b16 %v4273
        %v4353 = vunpack.c.h.b16 %v4273
        %v4354 = vunpack.c.l.b16 %v4274
        %v4355 = vunpack.c.h.b16 %v4274
        %v4356 = vunpack.c.l.b16 %v4275
        %v4357 = vunpack.c.h.b16 %v4275
        %v4358 = vunpack.c.l.b16 %v4276
        %v4359 = vunpack.c.h.b16 %v4276
        %v4360 = vunpack.c.l.b16 %v4277
        %v4361 = vunpack.c.h.b16 %v4277
        %v4362 = vunpack.c.l.b16 %v4278
        %v4363 = vunpack.c.h.b16 %v4278
        %v4364 = vunpack.c.l.b16 %v4279
        %v4365 = vunpack.c.h.b16 %v4279
        %v4366 = vunpack.c.l.b16 %v4280
        %v4367 = vunpack.c.h.b16 %v4280
        %v4368 = vunpack.c.l.b16 %v4281
        %v4369 = vunpack.c.h.b16 %v4281
        %v4370 = vunpack.c.l.b16 %v4282
        %v4371 = vunpack.c.h.b16 %v4282
        %v4372 = vunpack.c.l.b16 %v4283
        %v4373 = vunpack.c.h.b16 %v4283
        %v4374 = vunpack.c.l.b16 %v4284
        %v4375 = vunpack.c.h.b16 %v4284
        %v4376 = vunpack.c.l.b16 %v4285
        %v4377 = vunpack.c.h.b16 %v4285
        %v4378 = vunpack.c.l.b16 %v4286
        %v4379 = vunpack.c.h.b16 %v4286
        %v4380 = vunpack.c.l.b16 %v4287
        %v4381 = vunpack.c.h.b16 %v4287
        %v4382 = vunpack.c.l.b16 %v4288
        %v4383 = vunpack.c.h.b16 %v4288
        %v4384 = vunpack.c.l.b16 %v4289
        %v4385 = vunpack.c.h.b16 %v4289
        %v4386 = vunpack.c.l.b16 %v4290
        %v4387 = vunpack.c.h.b16 %v4290
        %v4388 = vunpack.c.l.b16 %v4291
        %v4389 = vunpack.c.h.b16 %v4291
        %v4390 = vunpack.c.l.b16 %v4292
        %v4391 = vunpack.c.h.b16 %v4292
        %v4392 = vunpack.c.l.b16 %v4293
        %v4393 = vunpack.c.h.b16 %v4293
        %v4394 = vunpack.c.l.b16 %v4294
        %v4395 = vunpack.c.h.b16 %v4294
        %v4396 = vpack.c.b16 %v4350, %v4348
        %v4397 = vpack.c.b16 %v4351, %v4349
        %v4398 = vpack.c.b16 %v4354, %v4352
        %v4399 = vpack.c.b16 %v4355, %v4353
        %v4400 = vpack.c.b16 %v4358, %v4356
        %v4401 = vpack.c.b16 %v4359, %v4357
        %v4402 = vpack.c.b16 %v4362, %v4360
        %v4403 = vpack.c.b16 %v4363, %v4361
        %v4404 = vpack.c.b16 %v4366, %v4364
        %v4405 = vpack.c.b16 %v4367, %v4365
        %v4406 = vpack.c.b16 %v4370, %v4368
        %v4407 = vpack.c.b16 %v4371, %v4369
        %v4408 = vpack.c.b16 %v4374, %v4372
        %v4409 = vpack.c.b16 %v4375, %v4373
        %v4410 = vpack.c.b16 %v4378, %v4376
        %v4411 = vpack.c.b16 %v4379, %v4377
        %v4412 = vpack.c.b16 %v4382, %v4380
        %v4413 = vpack.c.b16 %v4383, %v4381
        %v4414 = vpack.c.b16 %v4386, %v4384
        %v4415 = vpack.c.b16 %v4387, %v4385
        %v4416 = vpack.c.b16 %v4390, %v4388
        %v4417 = vpack.c.b16 %v4391, %v4389
        %v4418 = vpack.c.b16 %v4394, %v4392
        %v4419 = vpack.c.b16 %v4395, %v4393
        %v4445 = vsel %vm3279, %v4301, 0
        %v4448 = vsel %vm3279, %v4305, 0
        %v4451 = vsel %vm3279, %v4309, 0
        %v4454 = vsel %vm3279, %v4313, 0
        %v4457 = vsel %vm3279, %v4317, 0
        %v4460 = vsel %vm3279, %v4316, 0
        %4462 = vmatprep.subr.bf16.mxu0 %v4397
        %4463 = vmatpush1.bf16.msra.mxu0 %v4396
        %4464 = vmatprep.subr.bf16.mxu0 %v4399
        %4465 = vmatpush1.bf16.msra.mxu0 %v4398
        %4466 = vmatprep.subr.bf16.mxu0 %v4401
        %4467 = vmatpush1.bf16.msra.mxu0 %v4400
        %4468 = vmatprep.subr.bf16.mxu0 %v4403
        %4469 = vmatpush1.bf16.msra.mxu0 %v4402
        %4470 = vmatprep.subr.bf16.mxu0 %v4405
        %4471 = vmatpush1.bf16.msra.mxu0 %v4404
        %4472 = vmatprep.subr.bf16.mxu0 %v4407
        %4473 = vmatpush1.bf16.msra.mxu0 %v4406
        %4474 = vmatprep.subr.bf16.mxu0 %v4409
        %4475 = vmatpush1.bf16.msra.mxu0 %v4408
        %4476 = vmatprep.subr.bf16.mxu0 %v4411
        %4477 = vmatpush1.bf16.msra.mxu0 %v4410
        %4478 = vmatprep.subr.bf16.mxu0 %v4413
        %4479 = vmatpush1.bf16.msra.mxu0 %v4412
        %4480 = vmatprep.subr.bf16.mxu0 %v4415
        %4481 = vmatpush1.bf16.msra.mxu0 %v4414
        %4482 = vmatprep.subr.bf16.mxu0 %v4417
        %4483 = vmatpush1.bf16.msra.mxu0 %v4416
        %4484 = vmatprep.subr.bf16.mxu0 %v4419
        %4485 = vmatpush1.bf16.msra.mxu0 %v4418
        %4486 = vmatprep.subr.bf16.mxu0 0
        %4487 = vmatpush1.bf16.msra.mxu0 0
        %4488 = vmatprep.subr.bf16.mxu0 0
        %4489 = vmatpush1.bf16.msra.mxu0 0
        %4490 = vmatprep.subr.bf16.mxu0 0
        %4491 = vmatpush1.bf16.msra.mxu0 0
        %4492 = vmatprep.subr.bf16.mxu0 0
        %4493 = vmatpush1.bf16.msra.mxu0 0
        %4494 = vmatprep.mubr.bf16.mxu0 %v4445
        %4495 = vmatmul.mubr.bf16.gmra.mrb[0].mxu0 %v4298
        %v4496 = vpop.f32.mrb[0].mxu0
        %v4497 = vadd.f32 0.0, %v4496
        %v4498 = vpop.f32.mrb[0].mxu0
        %v4499 = vadd.f32 0.0, %v4498
        %v4500 = vpop.f32.mrb[0].mxu0
        %v4501 = vadd.f32 0.0, %v4500
        %v4502 = vpop.f32.mrb[0].mxu0
        %v4503 = vadd.f32 0.0, %v4502
        %4504 = vmatprep.mubr.bf16.mxu0 %v4448
        %4505 = vmatmul.mubr.bf16.gmra.mrb[0].mxu0 %v4303
        %v4506 = vpop.f32.mrb[0].mxu0
        %v4507 = vadd.f32 0.0, %v4506
        %v4508 = vpop.f32.mrb[0].mxu0
        %v4509 = vadd.f32 0.0, %v4508
        %v4510 = vpop.f32.mrb[0].mxu0
        %v4511 = vadd.f32 0.0, %v4510
        %v4512 = vpop.f32.mrb[0].mxu0
        %v4513 = vadd.f32 0.0, %v4512
        %4514 = vmatprep.mubr.bf16.mxu0 %v4451
        %4515 = vmatmul.mubr.bf16.gmra.mrb[0].mxu0 %v4307
        %v4516 = vpop.f32.mrb[0].mxu0
        %v4517 = vadd.f32 0.0, %v4516
        %v4518 = vpop.f32.mrb[0].mxu0
        %v4519 = vadd.f32 0.0, %v4518
        %v4520 = vpop.f32.mrb[0].mxu0
        %v4521 = vadd.f32 0.0, %v4520
        %v4522 = vpop.f32.mrb[0].mxu0
        %v4523 = vadd.f32 0.0, %v4522
        %4524 = vmatprep.mubr.bf16.mxu0 %v4454
        %4525 = vmatmul.mubr.bf16.gmra.mrb[0].mxu0 %v4311
        %v4526 = vpop.f32.mrb[0].mxu0
        %v4527 = vadd.f32 0.0, %v4526
        %v4528 = vpop.f32.mrb[0].mxu0
        %v4529 = vadd.f32 0.0, %v4528
        %v4530 = vpop.f32.mrb[0].mxu0
        %v4531 = vadd.f32 0.0, %v4530
        %v4532 = vpop.f32.mrb[0].mxu0
        %v4533 = vadd.f32 0.0, %v4532
        %4534 = vmatprep.mubr.bf16.mxu0 %v4457
        %4535 = vmatmul.mubr.bf16.gmra.mrb[0].mxu0 %v4315
        %v4536 = vpop.f32.mrb[0].mxu0
        %v4537 = vadd.f32 0.0, %v4536
        %v4538 = vpop.f32.mrb[0].mxu0
        %v4539 = vadd.f32 0.0, %v4538
        %v4540 = vpop.f32.mrb[0].mxu0
        %v4541 = vadd.f32 0.0, %v4540
        %v4542 = vpop.f32.mrb[0].mxu0
        %v4543 = vadd.f32 0.0, %v4542
        %4544 = vmatprep.mubr.bf16.mxu0 %v4460
        %4545 = vmatmul.mubr.bf16.gmra.mrb[0].mxu0 %v4314
        %v4546 = vpop.f32.mrb[0].mxu0
        %v4547 = vadd.f32 0.0, %v4546
        %v4548 = vpop.f32.mrb[0].mxu0
        %v4549 = vadd.f32 0.0, %v4548
        %v4550 = vpop.f32.mrb[0].mxu0
        %v4551 = vadd.f32 0.0, %v4550
        %v4552 = vpop.f32.mrb[0].mxu0
        %v4553 = vadd.f32 0.0, %v4552
        %4554 = vdwg.mxu0
        %v4555 = vadd.f32 %v4246, %v4497
        %v4556 = vadd.f32 %v4247, %v4499
        %v4557 = vadd.f32 %v4248, %v4501
        %v4558 = vadd.f32 %v4249, %v4503
        %v4559 = vadd.f32 %v4250, %v4507
        %v4560 = vadd.f32 %v4251, %v4509
        %v4561 = vadd.f32 %v4252, %v4511
        %v4562 = vadd.f32 %v4253, %v4513
        %v4563 = vadd.f32 %v4254, %v4517
        %v4564 = vadd.f32 %v4255, %v4519
        %v4565 = vadd.f32 %v4256, %v4521
        %v4566 = vadd.f32 %v4257, %v4523
        %v4567 = vadd.f32 %v4258, %v4527
        %v4568 = vadd.f32 %v4259, %v4529
        %v4569 = vadd.f32 %v4260, %v4531
        %v4570 = vadd.f32 %v4261, %v4533
        %v4571 = vadd.f32 %v4262, %v4537
        %v4572 = vadd.f32 %v4263, %v4539
        %v4573 = vadd.f32 %v4264, %v4541
        %v4574 = vadd.f32 %v4265, %v4543
        %v4575 = vadd.f32 %v4266, %v4547
        %v4576 = vadd.f32 %v4267, %v4549
        %v4577 = vadd.f32 %v4268, %v4551
        %v4578 = vadd.f32 %v4269, %v4553
        %v4579 = vld [vmem:[%s6] sm:$0x3]
        %v4581 = vlaneseq
        %v4582 = vshrl.u32 %v4581, 7
        %v4583 = vsub.s32 0, %v4582
        %v4584 = vrot.slane %v4579, %v4583
        %v4585 = vlaneseq
        %v4586 = vshrl.u32 %v4585, 7
        %v4587 = vsub.s32 1, %v4586
        %v4588 = vrot.slane %v4579, %v4587
        %v4591 = vadd.f32 %v4555, %v4584
        %v4592 = vadd.f32 %v4556, %v4588
        %v4593 = vadd.f32 %v4557, %v4584
        %v4594 = vadd.f32 %v4558, %v4588
        %v4595 = vadd.f32 %v4559, %v4584
        %v4596 = vadd.f32 %v4560, %v4588
        %v4597 = vadd.f32 %v4561, %v4584
        %v4598 = vadd.f32 %v4562, %v4588
        %v4599 = vadd.f32 %v4563, %v4584
        %v4600 = vadd.f32 %v4564, %v4588
        %v4601 = vadd.f32 %v4565, %v4584
        %v4602 = vadd.f32 %v4566, %v4588
        %v4603 = vadd.f32 %v4567, %v4584
        %v4604 = vadd.f32 %v4568, %v4588
        %v4605 = vadd.f32 %v4569, %v4584
        %v4606 = vadd.f32 %v4570, %v4588
        %v4607 = vadd.f32 %v4571, %v4584
        %v4608 = vadd.f32 %v4572, %v4588
        %v4609 = vadd.f32 %v4573, %v4584
        %v4610 = vadd.f32 %v4574, %v4588
        %v4611 = vadd.f32 %v4575, %v4584
        %v4612 = vadd.f32 %v4576, %v4588
        %v4613 = vadd.f32 %v4577, %v4584
        %v4614 = vadd.f32 %v4578, %v4588
        %v4615 = vmax.f32 %v4591, 0.0
        %v4616 = vmax.f32 %v4592, 0.0
        %v4617 = vmax.f32 %v4593, 0.0
        %v4618 = vmax.f32 %v4594, 0.0
        %v4619 = vmax.f32 %v4595, 0.0
        %v4620 = vmax.f32 %v4596, 0.0
        %v4621 = vmax.f32 %v4597, 0.0
        %v4622 = vmax.f32 %v4598, 0.0
        %v4623 = vmax.f32 %v4599, 0.0
        %v4624 = vmax.f32 %v4600, 0.0
        %v4625 = vmax.f32 %v4601, 0.0
        %v4626 = vmax.f32 %v4602, 0.0
        %v4627 = vmax.f32 %v4603, 0.0
        %v4628 = vmax.f32 %v4604, 0.0
        %v4629 = vmax.f32 %v4605, 0.0
        %v4630 = vmax.f32 %v4606, 0.0
        %v4631 = vmax.f32 %v4607, 0.0
        %v4632 = vmax.f32 %v4608, 0.0
        %v4633 = vmax.f32 %v4609, 0.0
        %v4634 = vmax.f32 %v4610, 0.0
        %v4635 = vmax.f32 %v4611, 0.0
        %v4636 = vmax.f32 %v4612, 0.0
        %v4637 = vmax.f32 %v4613, 0.0
        %v4638 = vmax.f32 %v4614, 0.0
        %v4663 = vrot.slane %v4615, 1
        %v4664 = vrot.slane %v4617, 1
        %v4665 = vsel %vm1359, %v4663, %v4664
        %v4666 = vrot.slane %v4616, 1
        %v4667 = vrot.slane %v4618, 1
        %v4668 = vsel %vm1359, %v4666, %v4667
        %v4669 = vrot.slane %v4619, 1
        %v4670 = vsel %vm1359, %v4664, %v4669
        %v4671 = vrot.slane %v4620, 1
        %v4672 = vsel %vm1359, %v4667, %v4671
        %v4673 = vrot.slane %v4621, 1
        %v4674 = vsel %vm1359, %v4669, %v4673
        %v4675 = vrot.slane %v4622, 1
        %v4676 = vsel %vm1359, %v4671, %v4675
        %v4677 = vrot.slane %v4623, 1
        %v4678 = vsel %vm1359, %v4673, %v4677
        %v4679 = vrot.slane %v4624, 1
        %v4680 = vsel %vm1359, %v4675, %v4679
        %v4681 = vrot.slane %v4625, 1
        %v4682 = vsel %vm1359, %v4677, %v4681
        %v4683 = vrot.slane %v4626, 1
        %v4684 = vsel %vm1359, %v4679, %v4683
        %v4685 = vrot.slane %v4627, 1
        %v4686 = vsel %vm1359, %v4681, %v4685
        %v4687 = vrot.slane %v4628, 1
        %v4688 = vsel %vm1359, %v4683, %v4687
        %v4689 = vrot.slane %v4629, 1
        %v4690 = vsel %vm1359, %v4685, %v4689
        %v4691 = vrot.slane %v4630, 1
        %v4692 = vsel %vm1359, %v4687, %v4691
        %v4693 = vrot.slane %v4631, 1
        %v4694 = vsel %vm1359, %v4689, %v4693
        %v4695 = vrot.slane %v4632, 1
        %v4696 = vsel %vm1359, %v4691, %v4695
        %v4697 = vrot.slane %v4633, 1
        %v4698 = vsel %vm1359, %v4693, %v4697
        %v4699 = vrot.slane %v4634, 1
        %v4700 = vsel %vm1359, %v4695, %v4699
        %v4701 = vrot.slane %v4635, 1
        %v4702 = vsel %vm1359, %v4697, %v4701
        %v4703 = vrot.slane %v4636, 1
        %v4704 = vsel %vm1359, %v4699, %v4703
        %v4705 = vrot.slane %v4637, 1
        %v4706 = vsel %vm1359, %v4701, %v4705
        %v4707 = vrot.slane %v4638, 1
        %v4708 = vsel %vm1359, %v4703, %v4707
        %v4733 = vmax.f32 %v4615, %v4665
        %v4734 = vmax.f32 %v4616, %v4668
        %v4735 = vmax.f32 %v4617, %v4670
        %v4736 = vmax.f32 %v4618, %v4672
        %v4737 = vmax.f32 %v4619, %v4674
        %v4738 = vmax.f32 %v4620, %v4676
        %v4739 = vmax.f32 %v4621, %v4678
        %v4740 = vmax.f32 %v4622, %v4680
        %v4741 = vmax.f32 %v4623, %v4682
        %v4742 = vmax.f32 %v4624, %v4684
        %v4743 = vmax.f32 %v4625, %v4686
        %v4744 = vmax.f32 %v4626, %v4688
        %v4745 = vmax.f32 %v4627, %v4690
        %v4746 = vmax.f32 %v4628, %v4692
        %v4747 = vmax.f32 %v4629, %v4694
        %v4748 = vmax.f32 %v4630, %v4696
        %v4749 = vmax.f32 %v4631, %v4698
        %v4750 = vmax.f32 %v4632, %v4700
        %v4751 = vmax.f32 %v4633, %v4702
        %v4752 = vmax.f32 %v4634, %v4704
        %v4753 = vmax.f32 %v4635, %v4706
        %v4754 = vmax.f32 %v4636, %v4708
        %v4755 = vmax.f32 %v4637, %v4705
        %v4756 = vmax.f32 %v4638, %v4707
        %v4757 = vpack.c.bf16 %v4735, %v4733
        %v4758 = vpack.c.bf16 %v4736, %v4734
        %v4759 = vpack.c.bf16 %v4739, %v4737
        %v4760 = vpack.c.bf16 %v4740, %v4738
        %v4761 = vpack.c.bf16 %v4743, %v4741
        %v4762 = vpack.c.bf16 %v4744, %v4742
        %v4763 = vpack.c.bf16 %v4747, %v4745
        %v4764 = vpack.c.bf16 %v4748, %v4746
        %v4765 = vpack.c.bf16 %v4751, %v4749
        %v4766 = vpack.c.bf16 %v4752, %v4750
        %v4767 = vpack.c.bf16 %v4755, %v4753
        %v4768 = vpack.c.bf16 %v4756, %v4754
        %v4769 = vld [vmem:[%s7] sm:$0xf]
        %v4770 = vld [vmem:[%s7 + $0x4] sm:$0xf]
        %v4771 = vld [vmem:[%s7 + $0x8] sm:$0xf]
        %v4772 = vld [vmem:[%s7 + $0xc] sm:$0xf]
        %v4777 = vunpack.c.l.b16 %v4769
        %v4778 = vunpack.c.l.b16 %v4770
        %v4779 = vunpack.c.l.b16 %v4771
        %v4780 = vunpack.c.l.b16 %v4772
        %v4781 = vpack.c.b16 %v4778, %v4777
        %v4782 = vpack.c.b16 %v4780, %v4779
        %vm4783 = vcmask 744448
        %v4785 = vsel %vm4783, %v4781, 0
        %v4788 = vsel %vm4783, %v4782, 0
        %vm4790 = vcmask 1044480
        %v4791 = vsel %vm4790, 4294967295, 65535
        %v4792 = vsel %vm863, %v4791, 0
        %v4794 = vand.u32 %v4767, %v4792
        %v4797 = vand.u32 %v4768, %v4792
        %4799 = vmatprep.subr.bf16.mxu0 %v4758
        %4800 = vmatpush1.bf16.msra.mxu0 %v4757
        %4801 = vmatprep.subr.bf16.mxu0 %v4760
        %4802 = vmatpush1.bf16.msra.mxu0 %v4759
        %4803 = vmatprep.subr.bf16.mxu0 %v4762
        %4804 = vmatpush1.bf16.msra.mxu0 %v4761
        %4805 = vmatprep.subr.bf16.mxu0 %v4764
        %4806 = vmatpush1.bf16.msra.mxu0 %v4763
        %4807 = vmatprep.subr.bf16.mxu0 %v4766
        %4808 = vmatpush1.bf16.msra.mxu0 %v4765
        %4809 = vmatprep.subr.bf16.mxu0 %v4797
        %4810 = vmatpush1.bf16.msra.mxu0 %v4794
        %4811 = vmatprep.subr.bf16.mxu0 0
        %4812 = vmatpush1.bf16.msra.mxu0 0
        %4813 = vmatprep.subr.bf16.mxu0 0
        %4814 = vmatpush1.bf16.msra.mxu0 0
        %4815 = vmatprep.subr.bf16.mxu0 0
        %4816 = vmatpush1.bf16.msra.mxu0 0
        %4817 = vmatprep.subr.bf16.mxu0 0
        %4818 = vmatpush1.bf16.msra.mxu0 0
        %4819 = vmatprep.subr.bf16.mxu0 0
        %4820 = vmatpush1.bf16.msra.mxu0 0
        %4821 = vmatprep.subr.bf16.mxu0 0
        %4822 = vmatpush1.bf16.msra.mxu0 0
        %4823 = vmatprep.subr.bf16.mxu0 0
        %4824 = vmatpush1.bf16.msra.mxu0 0
        %4825 = vmatprep.subr.bf16.mxu0 0
        %4826 = vmatpush1.bf16.msra.mxu0 0
        %4827 = vmatprep.subr.bf16.mxu0 0
        %4828 = vmatpush1.bf16.msra.mxu0 0
        %4829 = vmatprep.subr.bf16.mxu0 0
        %4830 = vmatpush1.bf16.msra.mxu0 0
        %4831 = vmatprep.mubr.bf16.mxu0 0
        %4832 = vmatmul.mubr.bf16.gmra.mrb[0].mxu0 %v4785
        %v4833 = vpop.f32.mrb[0].mxu0
        %v4834 = vadd.f32 0.0, %v4833
        %v4835 = vpop.f32.mrb[0].mxu0
        %v4836 = vadd.f32 0.0, %v4835
        %v4837 = vpop.f32.mrb[0].mxu0
        %v4838 = vadd.f32 0.0, %v4837
        %v4839 = vpop.f32.mrb[0].mxu0
        %v4840 = vadd.f32 0.0, %v4839
        %4841 = vmatprep.mubr.bf16.mxu0 0
        %4842 = vmatmul.mubr.bf16.gmra.mrb[0].mxu0 %v4788
        %v4843 = vpop.f32.mrb[0].mxu0
        %v4844 = vadd.f32 0.0, %v4843
        %v4845 = vpop.f32.mrb[0].mxu0
        %v4846 = vadd.f32 0.0, %v4845
        %v4847 = vpop.f32.mrb[0].mxu0
        %v4848 = vadd.f32 0.0, %v4847
        %v4849 = vpop.f32.mrb[0].mxu0
        %v4850 = vadd.f32 0.0, %v4849
        %4851 = vdwg.mxu0
        %v4852 = vpack.c.bf16 %v4838, %v4834
        %v4853 = vpack.c.bf16 %v4840, %v4836
        %v4854 = vpack.c.bf16 %v4848, %v4844
        %v4855 = vpack.c.bf16 %v4850, %v4846
        %v4856 = vld [vmem:[%s8] sm:$0xf]
        %v4857 = vld [vmem:[%s8 + $0x4] sm:$0xf]
        %v4858 = vld [vmem:[%s8 + $0x8] sm:$0xf]
        %v4859 = vld [vmem:[%s8 + $0xc] sm:$0xf]
        %v4860 = vld [vmem:[%s8 + $0x10] sm:$0xf]
        %v4861 = vld [vmem:[%s8 + $0x14] sm:$0xf]
        %v4862 = vld [vmem:[%s8 + $0x18] sm:$0xf]
        %v4863 = vld [vmem:[%s8 + $0x1c] sm:$0xf]
        %v4864 = vld [vmem:[%s8 + $0x20] sm:$0xf]
        %v4865 = vld [vmem:[%s8 + $0x24] sm:$0xf]
        %v4866 = vld [vmem:[%s8 + $0x28] sm:$0xf]
        %v4867 = vld [vmem:[%s8 + $0x2c] sm:$0xf]
        %v4868 = vld [vmem:[%s8 + $0x30] sm:$0xf]
        %v4869 = vld [vmem:[%s8 + $0x34] sm:$0xf]
        %v4870 = vld [vmem:[%s8 + $0x38] sm:$0xf]
        %v4871 = vld [vmem:[%s8 + $0x3c] sm:$0xf]
        %v4872 = vld [vmem:[%s8 + $0x40] sm:$0xf]
        %v4873 = vld [vmem:[%s8 + $0x44] sm:$0xf]
        %v4874 = vld [vmem:[%s8 + $0x48] sm:$0xf]
        %v4875 = vld [vmem:[%s8 + $0x4c] sm:$0xf]
        %v4876 = vld [vmem:[%s8 + $0x50] sm:$0xf]
        %v4877 = vld [vmem:[%s8 + $0x54] sm:$0xf]
        %v4878 = vld [vmem:[%s8 + $0x58] sm:$0xf]
        %v4879 = vld [vmem:[%s8 + $0x5c] sm:$0xf]
        %v4880 = vld [vmem:[%s8 + $0x60] sm:$0xf]
        %v4881 = vld [vmem:[%s8 + $0x64] sm:$0xf]
        %v4882 = vld [vmem:[%s8 + $0x68] sm:$0xf]
        %v4883 = vld [vmem:[%s8 + $0x6c] sm:$0xf]
        %v4884 = vld [vmem:[%s8 + $0x70] sm:$0xf]
        %v4885 = vld [vmem:[%s8 + $0x74] sm:$0xf]
        %v4886 = vld [vmem:[%s8 + $0x78] sm:$0xf]
        %v4887 = vld [vmem:[%s8 + $0x7c] sm:$0xf]
        %v4920 = vunpack.c.l.b16 %v4856
        %v4921 = vunpack.c.l.b16 %v4857
        %v4922 = vunpack.c.l.b16 %v4858
        %v4923 = vunpack.c.l.b16 %v4859
        %v4924 = vunpack.c.l.b16 %v4860
        %v4925 = vunpack.c.l.b16 %v4861
        %v4926 = vunpack.c.l.b16 %v4862
        %v4927 = vunpack.c.l.b16 %v4863
        %v4928 = vunpack.c.l.b16 %v4864
        %v4929 = vunpack.c.l.b16 %v4865
        %v4930 = vunpack.c.l.b16 %v4866
        %v4931 = vunpack.c.l.b16 %v4867
        %v4932 = vunpack.c.l.b16 %v4868
        %v4933 = vunpack.c.l.b16 %v4869
        %v4934 = vunpack.c.l.b16 %v4870
        %v4935 = vunpack.c.l.b16 %v4871
        %v4936 = vunpack.c.l.b16 %v4872
        %v4937 = vunpack.c.l.b16 %v4873
        %v4938 = vunpack.c.l.b16 %v4874
        %v4939 = vunpack.c.l.b16 %v4875
        %v4940 = vunpack.c.l.b16 %v4876
        %v4941 = vunpack.c.l.b16 %v4877
        %v4942 = vunpack.c.l.b16 %v4878
        %v4943 = vunpack.c.l.b16 %v4879
        %v4944 = vunpack.c.l.b16 %v4880
        %v4945 = vunpack.c.l.b16 %v4881
        %v4946 = vunpack.c.l.b16 %v4882
        %v4947 = vunpack.c.l.b16 %v4883
        %v4948 = vunpack.c.l.b16 %v4884
        %v4949 = vunpack.c.l.b16 %v4885
        %v4950 = vunpack.c.l.b16 %v4886
        %v4951 = vunpack.c.l.b16 %v4887
        %v4952 = vpack.c.b16 %v4921, %v4920
        %v4953 = vpack.c.b16 %v4923, %v4922
        %v4954 = vpack.c.b16 %v4925, %v4924
        %v4955 = vpack.c.b16 %v4927, %v4926
        %v4956 = vpack.c.b16 %v4929, %v4928
        %v4957 = vpack.c.b16 %v4931, %v4930
        %v4958 = vpack.c.b16 %v4933, %v4932
        %v4959 = vpack.c.b16 %v4935, %v4934
        %v4960 = vpack.c.b16 %v4937, %v4936
        %v4961 = vpack.c.b16 %v4939, %v4938
        %v4962 = vpack.c.b16 %v4941, %v4940
        %v4963 = vpack.c.b16 %v4943, %v4942
        %v4964 = vpack.c.b16 %v4945, %v4944
        %v4965 = vpack.c.b16 %v4947, %v4946
        %v4966 = vpack.c.b16 %v4949, %v4948
        %v4967 = vpack.c.b16 %v4951, %v4950
        %4984 = vmatprep.subr.bf16.mxu0 0
        %4985 = vmatpush1.bf16.msra.mxu0 %v4952
        %4986 = vmatprep.subr.bf16.mxu0 0
        %4987 = vmatpush1.bf16.msra.mxu0 %v4953
        %4988 = vmatprep.subr.bf16.mxu0 0
        %4989 = vmatpush1.bf16.msra.mxu0 %v4954
        %4990 = vmatprep.subr.bf16.mxu0 0
        %4991 = vmatpush1.bf16.msra.mxu0 %v4955
        %4992 = vmatprep.subr.bf16.mxu0 0
        %4993 = vmatpush1.bf16.msra.mxu0 %v4956
        %4994 = vmatprep.subr.bf16.mxu0 0
        %4995 = vmatpush1.bf16.msra.mxu0 %v4957
        %4996 = vmatprep.subr.bf16.mxu0 0
        %4997 = vmatpush1.bf16.msra.mxu0 %v4958
        %4998 = vmatprep.subr.bf16.mxu0 0
        %4999 = vmatpush1.bf16.msra.mxu0 %v4959
        %5000 = vmatprep.subr.bf16.mxu0 0
        %5001 = vmatpush1.bf16.msra.mxu0 %v4960
        %5002 = vmatprep.subr.bf16.mxu0 0
        %5003 = vmatpush1.bf16.msra.mxu0 %v4961
        %5004 = vmatprep.subr.bf16.mxu0 0
        %5005 = vmatpush1.bf16.msra.mxu0 %v4962
        %5006 = vmatprep.subr.bf16.mxu0 0
        %5007 = vmatpush1.bf16.msra.mxu0 %v4963
        %5008 = vmatprep.subr.bf16.mxu0 0
        %5009 = vmatpush1.bf16.msra.mxu0 %v4964
        %5010 = vmatprep.subr.bf16.mxu0 0
        %5011 = vmatpush1.bf16.msra.mxu0 %v4965
        %5012 = vmatprep.subr.bf16.mxu0 0
        %5013 = vmatpush1.bf16.msra.mxu0 %v4966
        %5014 = vmatprep.subr.bf16.mxu0 0
        %5015 = vmatpush1.bf16.msra.mxu0 %v4967
        %5016 = vmatprep.mubr.bf16.mxu0 %v4853
        %5017 = vmatmul.mubr.bf16.gmra.mrb[0].mxu0 %v4852
        %v5018 = vpop.f32.mrb[0].mxu0
        %v5019 = vadd.f32 0.0, %v5018
        %v5020 = vpop.f32.mrb[0].mxu0
        %v5021 = vpop.f32.mrb[0].mxu0
        %v5022 = vadd.f32 0.0, %v5021
        %v5023 = vpop.f32.mrb[0].mxu0
        %5024 = vmatprep.mubr.bf16.mxu0 %v4855
        %5025 = vmatmul.mubr.bf16.gmra.mrb[0].mxu0 %v4854
        %v5026 = vpop.f32.mrb[0].mxu0
        %v5027 = vadd.f32 0.0, %v5026
        %v5028 = vpop.f32.mrb[0].mxu0
        %v5029 = vpop.f32.mrb[0].mxu0
        %v5030 = vadd.f32 0.0, %v5029
        %v5031 = vpop.f32.mrb[0].mxu0
        %5032 = vdwg.mxu0
        %s5033 = scalar_lea.vmem %s8, 128
        %v5034 = vld [vmem:[%s5033] sm:$0xf]
        %v5035 = vld [vmem:[%s5033 + $0x4] sm:$0xf]
        %v5036 = vld [vmem:[%s5033 + $0x8] sm:$0xf]
        %v5037 = vld [vmem:[%s5033 + $0xc] sm:$0xf]
        %v5038 = vld [vmem:[%s5033 + $0x10] sm:$0xf]
        %v5039 = vld [vmem:[%s5033 + $0x14] sm:$0xf]
        %v5040 = vld [vmem:[%s5033 + $0x18] sm:$0xf]
        %v5041 = vld [vmem:[%s5033 + $0x1c] sm:$0xf]
        %v5042 = vld [vmem:[%s5033 + $0x20] sm:$0xf]
        %v5043 = vld [vmem:[%s5033 + $0x24] sm:$0xf]
        %v5044 = vld [vmem:[%s5033 + $0x28] sm:$0xf]
        %v5045 = vld [vmem:[%s5033 + $0x2c] sm:$0xf]
        %v5046 = vld [vmem:[%s5033 + $0x30] sm:$0xf]
        %v5047 = vld [vmem:[%s5033 + $0x34] sm:$0xf]
        %v5048 = vld [vmem:[%s5033 + $0x38] sm:$0xf]
        %v5049 = vld [vmem:[%s5033 + $0x3c] sm:$0xf]
        %v5050 = vld [vmem:[%s5033 + $0x40] sm:$0xf]
        %v5051 = vld [vmem:[%s5033 + $0x44] sm:$0xf]
        %v5052 = vld [vmem:[%s5033 + $0x48] sm:$0xf]
        %v5053 = vld [vmem:[%s5033 + $0x4c] sm:$0xf]
        %v5054 = vld [vmem:[%s5033 + $0x50] sm:$0xf]
        %v5055 = vld [vmem:[%s5033 + $0x54] sm:$0xf]
        %v5056 = vld [vmem:[%s5033 + $0x58] sm:$0xf]
        %v5057 = vld [vmem:[%s5033 + $0x5c] sm:$0xf]
        %v5058 = vld [vmem:[%s5033 + $0x60] sm:$0xf]
        %v5059 = vld [vmem:[%s5033 + $0x64] sm:$0xf]
        %v5060 = vld [vmem:[%s5033 + $0x68] sm:$0xf]
        %v5061 = vld [vmem:[%s5033 + $0x6c] sm:$0xf]
        %v5062 = vld [vmem:[%s5033 + $0x70] sm:$0xf]
        %v5063 = vld [vmem:[%s5033 + $0x74] sm:$0xf]
        %v5064 = vld [vmem:[%s5033 + $0x78] sm:$0xf]
        %v5065 = vld [vmem:[%s5033 + $0x7c] sm:$0xf]
        %v5098 = vunpack.c.l.b16 %v5034
        %v5099 = vunpack.c.l.b16 %v5035
        %v5100 = vunpack.c.l.b16 %v5036
        %v5101 = vunpack.c.l.b16 %v5037
        %v5102 = vunpack.c.l.b16 %v5038
        %v5103 = vunpack.c.l.b16 %v5039
        %v5104 = vunpack.c.l.b16 %v5040
        %v5105 = vunpack.c.l.b16 %v5041
        %v5106 = vunpack.c.l.b16 %v5042
        %v5107 = vunpack.c.l.b16 %v5043
        %v5108 = vunpack.c.l.b16 %v5044
        %v5109 = vunpack.c.l.b16 %v5045
        %v5110 = vunpack.c.l.b16 %v5046
        %v5111 = vunpack.c.l.b16 %v5047
        %v5112 = vunpack.c.l.b16 %v5048
        %v5113 = vunpack.c.l.b16 %v5049
        %v5114 = vunpack.c.l.b16 %v5050
        %v5115 = vunpack.c.l.b16 %v5051
        %v5116 = vunpack.c.l.b16 %v5052
        %v5117 = vunpack.c.l.b16 %v5053
        %v5118 = vunpack.c.l.b16 %v5054
        %v5119 = vunpack.c.l.b16 %v5055
        %v5120 = vunpack.c.l.b16 %v5056
        %v5121 = vunpack.c.l.b16 %v5057
        %v5122 = vunpack.c.l.b16 %v5058
        %v5123 = vunpack.c.l.b16 %v5059
        %v5124 = vunpack.c.l.b16 %v5060
        %v5125 = vunpack.c.l.b16 %v5061
        %v5126 = vunpack.c.l.b16 %v5062
        %v5127 = vunpack.c.l.b16 %v5063
        %v5128 = vunpack.c.l.b16 %v5064
        %v5129 = vunpack.c.l.b16 %v5065
        %v5130 = vpack.c.b16 %v5099, %v5098
        %v5131 = vpack.c.b16 %v5101, %v5100
        %v5132 = vpack.c.b16 %v5103, %v5102
        %v5133 = vpack.c.b16 %v5105, %v5104
        %v5134 = vpack.c.b16 %v5107, %v5106
        %v5135 = vpack.c.b16 %v5109, %v5108
        %v5136 = vpack.c.b16 %v5111, %v5110
        %v5137 = vpack.c.b16 %v5113, %v5112
        %v5138 = vpack.c.b16 %v5115, %v5114
        %v5139 = vpack.c.b16 %v5117, %v5116
        %v5140 = vpack.c.b16 %v5119, %v5118
        %v5141 = vpack.c.b16 %v5121, %v5120
        %v5142 = vpack.c.b16 %v5123, %v5122
        %v5143 = vpack.c.b16 %v5125, %v5124
        %v5144 = vpack.c.b16 %v5127, %v5126
        %v5145 = vpack.c.b16 %v5129, %v5128
        %5162 = vmatprep.subr.bf16.mxu0 0
        %5163 = vmatpush1.bf16.msra.mxu0 %v5130
        %5164 = vmatprep.subr.bf16.mxu0 0
        %5165 = vmatpush1.bf16.msra.mxu0 %v5131
        %5166 = vmatprep.subr.bf16.mxu0 0
        %5167 = vmatpush1.bf16.msra.mxu0 %v5132
        %5168 = vmatprep.subr.bf16.mxu0 0
        %5169 = vmatpush1.bf16.msra.mxu0 %v5133
        %5170 = vmatprep.subr.bf16.mxu0 0
        %5171 = vmatpush1.bf16.msra.mxu0 %v5134
        %5172 = vmatprep.subr.bf16.mxu0 0
        %5173 = vmatpush1.bf16.msra.mxu0 %v5135
        %5174 = vmatprep.subr.bf16.mxu0 0
        %5175 = vmatpush1.bf16.msra.mxu0 %v5136
        %5176 = vmatprep.subr.bf16.mxu0 0
        %5177 = vmatpush1.bf16.msra.mxu0 %v5137
        %5178 = vmatprep.subr.bf16.mxu0 0
        %5179 = vmatpush1.bf16.msra.mxu0 %v5138
        %5180 = vmatprep.subr.bf16.mxu0 0
        %5181 = vmatpush1.bf16.msra.mxu0 %v5139
        %5182 = vmatprep.subr.bf16.mxu0 0
        %5183 = vmatpush1.bf16.msra.mxu0 %v5140
        %5184 = vmatprep.subr.bf16.mxu0 0
        %5185 = vmatpush1.bf16.msra.mxu0 %v5141
        %5186 = vmatprep.subr.bf16.mxu0 0
        %5187 = vmatpush1.bf16.msra.mxu0 %v5142
        %5188 = vmatprep.subr.bf16.mxu0 0
        %5189 = vmatpush1.bf16.msra.mxu0 %v5143
        %5190 = vmatprep.subr.bf16.mxu0 0
        %5191 = vmatpush1.bf16.msra.mxu0 %v5144
        %5192 = vmatprep.subr.bf16.mxu0 0
        %5193 = vmatpush1.bf16.msra.mxu0 %v5145
        %5194 = vmatprep.mubr.bf16.mxu0 %v4853
        %5195 = vmatmul.mubr.bf16.gmra.mrb[0].mxu0 %v4852
        %v5196 = vpop.f32.mrb[0].mxu0
        %v5197 = vadd.f32 0.0, %v5196
        %v5198 = vpop.f32.mrb[0].mxu0
        %v5199 = vpop.f32.mrb[0].mxu0
        %v5200 = vadd.f32 0.0, %v5199
        %v5201 = vpop.f32.mrb[0].mxu0
        %5202 = vmatprep.mubr.bf16.mxu0 %v4855
        %5203 = vmatmul.mubr.bf16.gmra.mrb[0].mxu0 %v4854
        %v5204 = vpop.f32.mrb[0].mxu0
        %v5205 = vadd.f32 0.0, %v5204
        %v5206 = vpop.f32.mrb[0].mxu0
        %v5207 = vpop.f32.mrb[0].mxu0
        %v5208 = vadd.f32 0.0, %v5207
        %v5209 = vpop.f32.mrb[0].mxu0
        %5210 = vdwg.mxu0
        %v5211 = vmax.f32 %v5019, %v5197
        %v5212 = vmax.f32 %v5022, %v5200
        %v5213 = vmax.f32 %v5027, %v5205
        %v5214 = vmax.f32 %v5030, %v5208
        %v5215 = vpack.c.bf16 %v5212, %v5211
        %v5216 = vpack.c.bf16 %v5214, %v5213
        %v5217 = vld [vmem:[%s9] sm:$0xf]
        %v5218 = vld [vmem:[%s9 + $0x4] sm:$0xf]
        %v5219 = vld [vmem:[%s9 + $0x8] sm:$0xf]
        %v5220 = vld [vmem:[%s9 + $0xc] sm:$0xf]
        %v5221 = vld [vmem:[%s9 + $0x10] sm:$0xf]
        %v5222 = vld [vmem:[%s9 + $0x14] sm:$0xf]
        %v5223 = vld [vmem:[%s9 + $0x18] sm:$0xf]
        %v5224 = vld [vmem:[%s9 + $0x1c] sm:$0xf]
        %v5225 = vld [vmem:[%s9 + $0x20] sm:$0xf]
        %v5226 = vld [vmem:[%s9 + $0x24] sm:$0xf]
        %v5227 = vld [vmem:[%s9 + $0x28] sm:$0xf]
        %v5228 = vld [vmem:[%s9 + $0x2c] sm:$0xf]
        %v5229 = vld [vmem:[%s9 + $0x30] sm:$0xf]
        %v5230 = vld [vmem:[%s9 + $0x34] sm:$0xf]
        %v5231 = vld [vmem:[%s9 + $0x38] sm:$0xf]
        %v5232 = vld [vmem:[%s9 + $0x3c] sm:$0xf]
        %s5233 = scalar_lea.vmem %s9, 64
        %v5234 = vld [vmem:[%s5233] sm:$0xf]
        %v5235 = vld [vmem:[%s5233 + $0x4] sm:$0xf]
        %v5236 = vld [vmem:[%s5233 + $0x8] sm:$0xf]
        %v5237 = vld [vmem:[%s5233 + $0xc] sm:$0xf]
        %v5238 = vld [vmem:[%s5233 + $0x10] sm:$0xf]
        %v5239 = vld [vmem:[%s5233 + $0x14] sm:$0xf]
        %v5240 = vld [vmem:[%s5233 + $0x18] sm:$0xf]
        %v5241 = vld [vmem:[%s5233 + $0x1c] sm:$0xf]
        %v5242 = vld [vmem:[%s5233 + $0x20] sm:$0xf]
        %v5243 = vld [vmem:[%s5233 + $0x24] sm:$0xf]
        %v5244 = vld [vmem:[%s5233 + $0x28] sm:$0xf]
        %v5245 = vld [vmem:[%s5233 + $0x2c] sm:$0xf]
        %v5246 = vld [vmem:[%s5233 + $0x30] sm:$0xf]
        %v5247 = vld [vmem:[%s5233 + $0x34] sm:$0xf]
        %v5248 = vld [vmem:[%s5233 + $0x38] sm:$0xf]
        %v5249 = vld [vmem:[%s5233 + $0x3c] sm:$0xf]
        %v5251 = vshrl.u32 %v5215, 16
        %v5253 = vshll.u32 %v5215, 16
        %v5255 = vrot.slane %v5253, 1
        %v5256 = vor.u32 %v5251, %v5255
        %v5258 = vshll.u32 %v5216, 16
        %v5260 = vrot.slane %v5258, 1
        %v5261 = vsel %vm3058, %v5256, %v5260
        %v5262 = vshrl.u32 %v5216, 16
        %v5264 = vor.u32 %v5262, %v5260
        %v5283 = vunpack.c.l.b16 %v5234
        %v5284 = vunpack.c.l.b16 %v5235
        %v5285 = vunpack.c.l.b16 %v5236
        %v5286 = vunpack.c.l.b16 %v5237
        %v5287 = vunpack.c.l.b16 %v5238
        %v5288 = vunpack.c.l.b16 %v5239
        %v5289 = vunpack.c.l.b16 %v5240
        %v5290 = vunpack.c.l.b16 %v5241
        %v5291 = vunpack.c.l.b16 %v5242
        %v5292 = vunpack.c.l.b16 %v5243
        %v5293 = vunpack.c.l.b16 %v5244
        %v5294 = vunpack.c.l.b16 %v5245
        %v5295 = vunpack.c.l.b16 %v5246
        %v5296 = vunpack.c.l.b16 %v5247
        %v5297 = vunpack.c.l.b16 %v5248
        %v5298 = vunpack.c.l.b16 %v5249
        %v5299 = vpack.c.b16 %v5284, %v5283
        %v5300 = vpack.c.b16 %v5286, %v5285
        %v5301 = vpack.c.b16 %v5288, %v5287
        %v5302 = vpack.c.b16 %v5290, %v5289
        %v5303 = vpack.c.b16 %v5292, %v5291
        %v5304 = vpack.c.b16 %v5294, %v5293
        %v5305 = vpack.c.b16 %v5296, %v5295
        %v5306 = vpack.c.b16 %v5298, %v5297
        %5315 = vmatprep.subr.bf16.mxu0 0
        %5316 = vmatpush1.bf16.msra.mxu0 %v5299
        %5317 = vmatprep.subr.bf16.mxu0 0
        %5318 = vmatpush1.bf16.msra.mxu0 %v5300
        %5319 = vmatprep.subr.bf16.mxu0 0
        %5320 = vmatpush1.bf16.msra.mxu0 %v5301
        %5321 = vmatprep.subr.bf16.mxu0 0
        %5322 = vmatpush1.bf16.msra.mxu0 %v5302
        %5323 = vmatprep.subr.bf16.mxu0 0
        %5324 = vmatpush1.bf16.msra.mxu0 %v5303
        %5325 = vmatprep.subr.bf16.mxu0 0
        %5326 = vmatpush1.bf16.msra.mxu0 %v5304
        %5327 = vmatprep.subr.bf16.mxu0 0
        %5328 = vmatpush1.bf16.msra.mxu0 %v5305
        %5329 = vmatprep.subr.bf16.mxu0 0
        %5330 = vmatpush1.bf16.msra.mxu0 %v5306
        %5331 = vmatprep.subr.bf16.mxu0 0
        %5332 = vmatpush1.bf16.msra.mxu0 0
        %5333 = vmatprep.subr.bf16.mxu0 0
        %5334 = vmatpush1.bf16.msra.mxu0 0
        %5335 = vmatprep.subr.bf16.mxu0 0
        %5336 = vmatpush1.bf16.msra.mxu0 0
        %5337 = vmatprep.subr.bf16.mxu0 0
        %5338 = vmatpush1.bf16.msra.mxu0 0
        %5339 = vmatprep.subr.bf16.mxu0 0
        %5340 = vmatpush1.bf16.msra.mxu0 0
        %5341 = vmatprep.subr.bf16.mxu0 0
        %5342 = vmatpush1.bf16.msra.mxu0 0
        %5343 = vmatprep.subr.bf16.mxu0 0
        %5344 = vmatpush1.bf16.msra.mxu0 0
        %5345 = vmatprep.subr.bf16.mxu0 0
        %5346 = vmatpush1.bf16.msra.mxu0 0
        %5347 = vmatprep.mubr.bf16.mxu0 0
        %5348 = vmatmul.mubr.bf16.gmra.mrb[0].mxu0 %v5261
        %v5349 = vpop.f32.mrb[0].mxu0
        %v5350 = vadd.f32 0.0, %v5349
        %v5351 = vpop.f32.mrb[0].mxu0
        %v5352 = vpop.f32.mrb[0].mxu0
        %v5353 = vadd.f32 0.0, %v5352
        %v5354 = vpop.f32.mrb[0].mxu0
        %5355 = vmatprep.mubr.bf16.mxu0 0
        %5356 = vmatmul.mubr.bf16.gmra.mrb[0].mxu0 %v5264
        %v5357 = vpop.f32.mrb[0].mxu0
        %v5358 = vadd.f32 0.0, %v5357
        %v5359 = vpop.f32.mrb[0].mxu0
        %v5360 = vpop.f32.mrb[0].mxu0
        %v5361 = vadd.f32 0.0, %v5360
        %v5362 = vpop.f32.mrb[0].mxu0
        %5363 = vdwg.mxu0
        %v5380 = vunpack.c.l.b16 %v5217
        %v5381 = vunpack.c.l.b16 %v5218
        %v5382 = vunpack.c.l.b16 %v5219
        %v5383 = vunpack.c.l.b16 %v5220
        %v5384 = vunpack.c.l.b16 %v5221
        %v5385 = vunpack.c.l.b16 %v5222
        %v5386 = vunpack.c.l.b16 %v5223
        %v5387 = vunpack.c.l.b16 %v5224
        %v5388 = vunpack.c.l.b16 %v5225
        %v5389 = vunpack.c.l.b16 %v5226
        %v5390 = vunpack.c.l.b16 %v5227
        %v5391 = vunpack.c.l.b16 %v5228
        %v5392 = vunpack.c.l.b16 %v5229
        %v5393 = vunpack.c.l.b16 %v5230
        %v5394 = vunpack.c.l.b16 %v5231
        %v5395 = vunpack.c.l.b16 %v5232
        %v5396 = vpack.c.b16 %v5381, %v5380
        %v5397 = vpack.c.b16 %v5383, %v5382
        %v5398 = vpack.c.b16 %v5385, %v5384
        %v5399 = vpack.c.b16 %v5387, %v5386
        %v5400 = vpack.c.b16 %v5389, %v5388
        %v5401 = vpack.c.b16 %v5391, %v5390
        %v5402 = vpack.c.b16 %v5393, %v5392
        %v5403 = vpack.c.b16 %v5395, %v5394
        %5412 = vmatprep.subr.bf16.mxu0 0
        %5413 = vmatpush1.bf16.msra.mxu0 %v5396
        %5414 = vmatprep.subr.bf16.mxu0 0
        %5415 = vmatpush1.bf16.msra.mxu0 %v5397
        %5416 = vmatprep.subr.bf16.mxu0 0
        %5417 = vmatpush1.bf16.msra.mxu0 %v5398
        %5418 = vmatprep.subr.bf16.mxu0 0
        %5419 = vmatpush1.bf16.msra.mxu0 %v5399
        %5420 = vmatprep.subr.bf16.mxu0 0
        %5421 = vmatpush1.bf16.msra.mxu0 %v5400
        %5422 = vmatprep.subr.bf16.mxu0 0
        %5423 = vmatpush1.bf16.msra.mxu0 %v5401
        %5424 = vmatprep.subr.bf16.mxu0 0
        %5425 = vmatpush1.bf16.msra.mxu0 %v5402
        %5426 = vmatprep.subr.bf16.mxu0 0
        %5427 = vmatpush1.bf16.msra.mxu0 %v5403
        %5428 = vmatprep.subr.bf16.mxu0 0
        %5429 = vmatpush1.bf16.msra.mxu0 0
        %5430 = vmatprep.subr.bf16.mxu0 0
        %5431 = vmatpush1.bf16.msra.mxu0 0
        %5432 = vmatprep.subr.bf16.mxu0 0
        %5433 = vmatpush1.bf16.msra.mxu0 0
        %5434 = vmatprep.subr.bf16.mxu0 0
        %5435 = vmatpush1.bf16.msra.mxu0 0
        %5436 = vmatprep.subr.bf16.mxu0 0
        %5437 = vmatpush1.bf16.msra.mxu0 0
        %5438 = vmatprep.subr.bf16.mxu0 0
        %5439 = vmatpush1.bf16.msra.mxu0 0
        %5440 = vmatprep.subr.bf16.mxu0 0
        %5441 = vmatpush1.bf16.msra.mxu0 0
        %5442 = vmatprep.subr.bf16.mxu0 0
        %5443 = vmatpush1.bf16.msra.mxu0 0
        %5444 = vmatprep.mubr.bf16.mxu0 0
        %5445 = vmatmul.mubr.bf16.gmra.mrb[0].mxu0 %v5215
        %v5446 = vpop.f32.mrb[0].mxu0
        %v5447 = vadd.f32 %v5350, %v5446
        %v5448 = vpop.f32.mrb[0].mxu0
        %v5449 = vpop.f32.mrb[0].mxu0
        %v5450 = vadd.f32 %v5353, %v5449
        %v5451 = vpop.f32.mrb[0].mxu0
        %5452 = vmatprep.mubr.bf16.mxu0 0
        %5453 = vmatmul.mubr.bf16.gmra.mrb[0].mxu0 %v5216
        %v5454 = vpop.f32.mrb[0].mxu0
        %v5455 = vadd.f32 %v5358, %v5454
        %v5456 = vpop.f32.mrb[0].mxu0
        %v5457 = vpop.f32.mrb[0].mxu0
        %v5458 = vadd.f32 %v5361, %v5457
        %v5459 = vpop.f32.mrb[0].mxu0
        %5460 = vdwg.mxu0
        %s5461 = scalar_lea.vmem %s9, 128
        %v5462 = vld [vmem:[%s5461] sm:$0xf]
        %v5463 = vld [vmem:[%s5461 + $0x4] sm:$0xf]
        %v5464 = vld [vmem:[%s5461 + $0x8] sm:$0xf]
        %v5465 = vld [vmem:[%s5461 + $0xc] sm:$0xf]
        %v5466 = vld [vmem:[%s5461 + $0x10] sm:$0xf]
        %v5467 = vld [vmem:[%s5461 + $0x14] sm:$0xf]
        %v5468 = vld [vmem:[%s5461 + $0x18] sm:$0xf]
        %v5469 = vld [vmem:[%s5461 + $0x1c] sm:$0xf]
        %v5470 = vld [vmem:[%s5461 + $0x20] sm:$0xf]
        %v5471 = vld [vmem:[%s5461 + $0x24] sm:$0xf]
        %v5472 = vld [vmem:[%s5461 + $0x28] sm:$0xf]
        %v5473 = vld [vmem:[%s5461 + $0x2c] sm:$0xf]
        %v5474 = vld [vmem:[%s5461 + $0x30] sm:$0xf]
        %v5475 = vld [vmem:[%s5461 + $0x34] sm:$0xf]
        %v5476 = vld [vmem:[%s5461 + $0x38] sm:$0xf]
        %v5477 = vld [vmem:[%s5461 + $0x3c] sm:$0xf]
        %v5480 = vrot.slane %v5215, 1
        %v5481 = vrot.slane %v5216, 1
        %v5482 = vsel %vm3653, %v5480, %v5481
        %v5501 = vunpack.c.l.b16 %v5462
        %v5502 = vunpack.c.l.b16 %v5463
        %v5503 = vunpack.c.l.b16 %v5464
        %v5504 = vunpack.c.l.b16 %v5465
        %v5505 = vunpack.c.l.b16 %v5466
        %v5506 = vunpack.c.l.b16 %v5467
        %v5507 = vunpack.c.l.b16 %v5468
        %v5508 = vunpack.c.l.b16 %v5469
        %v5509 = vunpack.c.l.b16 %v5470
        %v5510 = vunpack.c.l.b16 %v5471
        %v5511 = vunpack.c.l.b16 %v5472
        %v5512 = vunpack.c.l.b16 %v5473
        %v5513 = vunpack.c.l.b16 %v5474
        %v5514 = vunpack.c.l.b16 %v5475
        %v5515 = vunpack.c.l.b16 %v5476
        %v5516 = vunpack.c.l.b16 %v5477
        %v5517 = vpack.c.b16 %v5502, %v5501
        %v5518 = vpack.c.b16 %v5504, %v5503
        %v5519 = vpack.c.b16 %v5506, %v5505
        %v5520 = vpack.c.b16 %v5508, %v5507
        %v5521 = vpack.c.b16 %v5510, %v5509
        %v5522 = vpack.c.b16 %v5512, %v5511
        %v5523 = vpack.c.b16 %v5514, %v5513
        %v5524 = vpack.c.b16 %v5516, %v5515
        %5533 = vmatprep.subr.bf16.mxu0 0
        %5534 = vmatpush1.bf16.msra.mxu0 %v5517
        %5535 = vmatprep.subr.bf16.mxu0 0
        %5536 = vmatpush1.bf16.msra.mxu0 %v5518
        %5537 = vmatprep.subr.bf16.mxu0 0
        %5538 = vmatpush1.bf16.msra.mxu0 %v5519
        %5539 = vmatprep.subr.bf16.mxu0 0
        %5540 = vmatpush1.bf16.msra.mxu0 %v5520
        %5541 = vmatprep.subr.bf16.mxu0 0
        %5542 = vmatpush1.bf16.msra.mxu0 %v5521
        %5543 = vmatprep.subr.bf16.mxu0 0
        %5544 = vmatpush1.bf16.msra.mxu0 %v5522
        %5545 = vmatprep.subr.bf16.mxu0 0
        %5546 = vmatpush1.bf16.msra.mxu0 %v5523
        %5547 = vmatprep.subr.bf16.mxu0 0
        %5548 = vmatpush1.bf16.msra.mxu0 %v5524
        %5549 = vmatprep.subr.bf16.mxu0 0
        %5550 = vmatpush1.bf16.msra.mxu0 0
        %5551 = vmatprep.subr.bf16.mxu0 0
        %5552 = vmatpush1.bf16.msra.mxu0 0
        %5553 = vmatprep.subr.bf16.mxu0 0
        %5554 = vmatpush1.bf16.msra.mxu0 0
        %5555 = vmatprep.subr.bf16.mxu0 0
        %5556 = vmatpush1.bf16.msra.mxu0 0
        %5557 = vmatprep.subr.bf16.mxu0 0
        %5558 = vmatpush1.bf16.msra.mxu0 0
        %5559 = vmatprep.subr.bf16.mxu0 0
        %5560 = vmatpush1.bf16.msra.mxu0 0
        %5561 = vmatprep.subr.bf16.mxu0 0
        %5562 = vmatpush1.bf16.msra.mxu0 0
        %5563 = vmatprep.subr.bf16.mxu0 0
        %5564 = vmatpush1.bf16.msra.mxu0 0
        %5565 = vmatprep.mubr.bf16.mxu0 0
        %5566 = vmatmul.mubr.bf16.gmra.mrb[0].mxu0 %v5482
        %v5567 = vpop.f32.mrb[0].mxu0
        %v5568 = vadd.f32 0.0, %v5567
        %v5569 = vpop.f32.mrb[0].mxu0
        %v5570 = vpop.f32.mrb[0].mxu0
        %v5571 = vadd.f32 0.0, %v5570
        %v5572 = vpop.f32.mrb[0].mxu0
        %5573 = vmatprep.mubr.bf16.mxu0 0
        %5574 = vmatmul.mubr.bf16.gmra.mrb[0].mxu0 %v5481
        %v5575 = vpop.f32.mrb[0].mxu0
        %v5576 = vadd.f32 0.0, %v5575
        %v5577 = vpop.f32.mrb[0].mxu0
        %v5578 = vpop.f32.mrb[0].mxu0
        %v5579 = vadd.f32 0.0, %v5578
        %v5580 = vpop.f32.mrb[0].mxu0
        %5581 = vdwg.mxu0
        %v5582 = vadd.f32 %v5447, %v5568
        %v5583 = vadd.f32 %v5450, %v5571
        %v5584 = vadd.f32 %v5455, %v5576
        %v5585 = vadd.f32 %v5458, %v5579
        %s5586 = scalar_lea.vmem %s9, 192
        %v5587 = vld [vmem:[%s5586] sm:$0xf]
        %v5588 = vld [vmem:[%s5586 + $0x4] sm:$0xf]
        %v5589 = vld [vmem:[%s5586 + $0x8] sm:$0xf]
        %v5590 = vld [vmem:[%s5586 + $0xc] sm:$0xf]
        %v5591 = vld [vmem:[%s5586 + $0x10] sm:$0xf]
        %v5592 = vld [vmem:[%s5586 + $0x14] sm:$0xf]
        %v5593 = vld [vmem:[%s5586 + $0x18] sm:$0xf]
        %v5594 = vld [vmem:[%s5586 + $0x1c] sm:$0xf]
        %v5595 = vld [vmem:[%s5586 + $0x20] sm:$0xf]
        %v5596 = vld [vmem:[%s5586 + $0x24] sm:$0xf]
        %v5597 = vld [vmem:[%s5586 + $0x28] sm:$0xf]
        %v5598 = vld [vmem:[%s5586 + $0x2c] sm:$0xf]
        %v5599 = vld [vmem:[%s5586 + $0x30] sm:$0xf]
        %v5600 = vld [vmem:[%s5586 + $0x34] sm:$0xf]
        %v5601 = vld [vmem:[%s5586 + $0x38] sm:$0xf]
        %v5602 = vld [vmem:[%s5586 + $0x3c] sm:$0xf]
        %v5603 = vrot.slane %v5251, 1
        %v5604 = vrot.slane %v5253, 2
        %v5605 = vor.u32 %v5603, %v5604
        %v5606 = vrot.slane %v5262, 1
        %v5607 = vrot.slane %v5258, 2
        %v5608 = vor.u32 %v5606, %v5607
        %v5609 = vsel %vm3962, %v5605, %v5608
        %v5628 = vunpack.c.l.b16 %v5587
        %v5629 = vunpack.c.l.b16 %v5588
        %v5630 = vunpack.c.l.b16 %v5589
        %v5631 = vunpack.c.l.b16 %v5590
        %v5632 = vunpack.c.l.b16 %v5591
        %v5633 = vunpack.c.l.b16 %v5592
        %v5634 = vunpack.c.l.b16 %v5593
        %v5635 = vunpack.c.l.b16 %v5594
        %v5636 = vunpack.c.l.b16 %v5595
        %v5637 = vunpack.c.l.b16 %v5596
        %v5638 = vunpack.c.l.b16 %v5597
        %v5639 = vunpack.c.l.b16 %v5598
        %v5640 = vunpack.c.l.b16 %v5599
        %v5641 = vunpack.c.l.b16 %v5600
        %v5642 = vunpack.c.l.b16 %v5601
        %v5643 = vunpack.c.l.b16 %v5602
        %v5644 = vpack.c.b16 %v5629, %v5628
        %v5645 = vpack.c.b16 %v5631, %v5630
        %v5646 = vpack.c.b16 %v5633, %v5632
        %v5647 = vpack.c.b16 %v5635, %v5634
        %v5648 = vpack.c.b16 %v5637, %v5636
        %v5649 = vpack.c.b16 %v5639, %v5638
        %v5650 = vpack.c.b16 %v5641, %v5640
        %v5651 = vpack.c.b16 %v5643, %v5642
        %5660 = vmatprep.subr.bf16.mxu0 0
        %5661 = vmatpush1.bf16.msra.mxu0 %v5644
        %5662 = vmatprep.subr.bf16.mxu0 0
        %5663 = vmatpush1.bf16.msra.mxu0 %v5645
        %5664 = vmatprep.subr.bf16.mxu0 0
        %5665 = vmatpush1.bf16.msra.mxu0 %v5646
        %5666 = vmatprep.subr.bf16.mxu0 0
        %5667 = vmatpush1.bf16.msra.mxu0 %v5647
        %5668 = vmatprep.subr.bf16.mxu0 0
        %5669 = vmatpush1.bf16.msra.mxu0 %v5648
        %5670 = vmatprep.subr.bf16.mxu0 0
        %5671 = vmatpush1.bf16.msra.mxu0 %v5649
        %5672 = vmatprep.subr.bf16.mxu0 0
        %5673 = vmatpush1.bf16.msra.mxu0 %v5650
        %5674 = vmatprep.subr.bf16.mxu0 0
        %5675 = vmatpush1.bf16.msra.mxu0 %v5651
        %5676 = vmatprep.subr.bf16.mxu0 0
        %5677 = vmatpush1.bf16.msra.mxu0 0
        %5678 = vmatprep.subr.bf16.mxu0 0
        %5679 = vmatpush1.bf16.msra.mxu0 0
        %5680 = vmatprep.subr.bf16.mxu0 0
        %5681 = vmatpush1.bf16.msra.mxu0 0
        %5682 = vmatprep.subr.bf16.mxu0 0
        %5683 = vmatpush1.bf16.msra.mxu0 0
        %5684 = vmatprep.subr.bf16.mxu0 0
        %5685 = vmatpush1.bf16.msra.mxu0 0
        %5686 = vmatprep.subr.bf16.mxu0 0
        %5687 = vmatpush1.bf16.msra.mxu0 0
        %5688 = vmatprep.subr.bf16.mxu0 0
        %5689 = vmatpush1.bf16.msra.mxu0 0
        %5690 = vmatprep.subr.bf16.mxu0 0
        %5691 = vmatpush1.bf16.msra.mxu0 0
        %5692 = vmatprep.mubr.bf16.mxu0 0
        %5693 = vmatmul.mubr.bf16.gmra.mrb[0].mxu0 %v5609
        %v5694 = vpop.f32.mrb[0].mxu0
        %v5695 = vadd.f32 0.0, %v5694
        %v5696 = vpop.f32.mrb[0].mxu0
        %v5697 = vpop.f32.mrb[0].mxu0
        %v5698 = vadd.f32 0.0, %v5697
        %v5699 = vpop.f32.mrb[0].mxu0
        %5700 = vmatprep.mubr.bf16.mxu0 0
        %5701 = vmatmul.mubr.bf16.gmra.mrb[0].mxu0 %v5608
        %v5702 = vpop.f32.mrb[0].mxu0
        %v5703 = vadd.f32 0.0, %v5702
        %v5704 = vpop.f32.mrb[0].mxu0
        %v5705 = vpop.f32.mrb[0].mxu0
        %v5706 = vadd.f32 0.0, %v5705
        %v5707 = vpop.f32.mrb[0].mxu0
        %5708 = vdwg.mxu0
        %v5709 = vadd.f32 %v5582, %v5695
        %v5710 = vadd.f32 %v5583, %v5698
        %v5711 = vadd.f32 %v5584, %v5703
        %v5712 = vadd.f32 %v5585, %v5706
        %v5713 = vld [vmem:[%s10] sm:$0x1]
        %v5715 = vlaneseq
        %v5716 = vshrl.u32 %v5715, 7
        %v5717 = vsub.s32 0, %v5716
        %v5718 = vrot.slane %v5713, %v5717
        %v5720 = vadd.f32 %v5709, %v5718
        %v5721 = vadd.f32 %v5710, %v5718
        %v5722 = vadd.f32 %v5711, %v5718
        %v5723 = vadd.f32 %v5712, %v5718
        %v5724 = vmax.f32 %v5720, 0.0
        %v5725 = vmax.f32 %v5721, 0.0
        %v5726 = vmax.f32 %v5722, 0.0
        %v5727 = vmax.f32 %v5723, 0.0
        %v5728 = vld [vmem:[%s11] sm:$0xf]
        %v5729 = vpack.c.bf16 %v5725, %v5724
        %v5730 = vpack.c.bf16 %v5727, %v5726
        %vm5731 = vcmask 236544
        %v5733 = vsel %vm5731, %v5728, 0
        %v5735 = vsel %vm863, 4294967295, 65535
        %v5736 = vsel %vm1359, %v5735, 0
        %v5738 = vand.u32 %v5730, %v5736
        %5740 = vmatprep.subr.bf16.mxu0 0
        %5741 = vmatpush1.bf16.msra.mxu0 %v5729
        %5742 = vmatprep.subr.bf16.mxu0 0
        %5743 = vmatpush1.bf16.msra.mxu0 %v5738
        %5744 = vmatprep.subr.bf16.mxu0 0
        %5745 = vmatpush1.bf16.msra.mxu0 0
        %5746 = vmatprep.subr.bf16.mxu0 0
        %5747 = vmatpush1.bf16.msra.mxu0 0
        %5748 = vmatprep.subr.bf16.mxu0 0
        %5749 = vmatpush1.bf16.msra.mxu0 0
        %5750 = vmatprep.subr.bf16.mxu0 0
        %5751 = vmatpush1.bf16.msra.mxu0 0
        %5752 = vmatprep.subr.bf16.mxu0 0
        %5753 = vmatpush1.bf16.msra.mxu0 0
        %5754 = vmatprep.subr.bf16.mxu0 0
        %5755 = vmatpush1.bf16.msra.mxu0 0
        %5756 = vmatprep.subr.bf16.mxu0 0
        %5757 = vmatpush1.bf16.msra.mxu0 0
        %5758 = vmatprep.subr.bf16.mxu0 0
        %5759 = vmatpush1.bf16.msra.mxu0 0
        %5760 = vmatprep.subr.bf16.mxu0 0
        %5761 = vmatpush1.bf16.msra.mxu0 0
        %5762 = vmatprep.subr.bf16.mxu0 0
        %5763 = vmatpush1.bf16.msra.mxu0 0
        %5764 = vmatprep.subr.bf16.mxu0 0
        %5765 = vmatpush1.bf16.msra.mxu0 0
        %5766 = vmatprep.subr.bf16.mxu0 0
        %5767 = vmatpush1.bf16.msra.mxu0 0
        %5768 = vmatprep.subr.bf16.mxu0 0
        %5769 = vmatpush1.bf16.msra.mxu0 0
        %5770 = vmatprep.subr.bf16.mxu0 0
        %5771 = vmatpush1.bf16.msra.mxu0 0
        %5772 = vmatprep.mubr.bf16.mxu0 0
        %5773 = vmatmul.mubr.bf16.gmra.mrb[0].mxu0 %v5733
        %v5774 = vpop.f32.mrb[0].mxu0
        %v5775 = vadd.f32 0.0, %v5774
        %v5776 = vpop.f32.mrb[0].mxu0
        %v5777 = vpop.f32.mrb[0].mxu0
        %v5778 = vpop.f32.mrb[0].mxu0
        %5779 = vdwg.mxu0
        %v5780 = vpack.c.bf16 %v5775, %v5775
        %v5781 = vld [vmem:[%s12] sm:$0xf]
        %v5782 = vld [vmem:[%s12 + $0x4] sm:$0xf]
        %v5783 = vld [vmem:[%s12 + $0x8] sm:$0xf]
        %v5784 = vld [vmem:[%s12 + $0xc] sm:$0xf]
        %v5785 = vld [vmem:[%s12 + $0x10] sm:$0xf]
        %v5786 = vld [vmem:[%s12 + $0x14] sm:$0xf]
        %v5787 = vld [vmem:[%s12 + $0x18] sm:$0xf]
        %v5788 = vld [vmem:[%s12 + $0x1c] sm:$0xf]
        %v5789 = vld [vmem:[%s13] sm:$0x1]
        %v5791 = vlaneseq
        %v5792 = vshrl.u32 %v5791, 7
        %v5793 = vsub.s32 0, %v5792
        %v5794 = vrot.slane %v5789, %v5793
        %v5804 = vunpack.c.l.b16 %v5781
        %v5805 = vunpack.c.l.b16 %v5782
        %v5806 = vunpack.c.l.b16 %v5783
        %v5807 = vunpack.c.l.b16 %v5784
        %v5808 = vunpack.c.l.b16 %v5785
        %v5809 = vunpack.c.l.b16 %v5786
        %v5810 = vunpack.c.l.b16 %v5787
        %v5811 = vunpack.c.l.b16 %v5788
        %v5812 = vpack.c.b16 %v5805, %v5804
        %v5813 = vpack.c.b16 %v5807, %v5806
        %v5814 = vpack.c.b16 %v5809, %v5808
        %v5815 = vpack.c.b16 %v5811, %v5810
        %v5821 = vsel %vm3279, %v5780, 0
        %5823 = vmatprep.subr.bf16.mxu0 0
        %5824 = vmatpush1.bf16.msra.mxu0 %v5812
        %5825 = vmatprep.subr.bf16.mxu0 0
        %5826 = vmatpush1.bf16.msra.mxu0 %v5813
        %5827 = vmatprep.subr.bf16.mxu0 0
        %5828 = vmatpush1.bf16.msra.mxu0 %v5814
        %5829 = vmatprep.subr.bf16.mxu0 0
        %5830 = vmatpush1.bf16.msra.mxu0 %v5815
        %5831 = vmatprep.subr.bf16.mxu0 0
        %5832 = vmatpush1.bf16.msra.mxu0 0
        %5833 = vmatprep.subr.bf16.mxu0 0
        %5834 = vmatpush1.bf16.msra.mxu0 0
        %5835 = vmatprep.subr.bf16.mxu0 0
        %5836 = vmatpush1.bf16.msra.mxu0 0
        %5837 = vmatprep.subr.bf16.mxu0 0
        %5838 = vmatpush1.bf16.msra.mxu0 0
        %5839 = vmatprep.subr.bf16.mxu0 0
        %5840 = vmatpush1.bf16.msra.mxu0 0
        %5841 = vmatprep.subr.bf16.mxu0 0
        %5842 = vmatpush1.bf16.msra.mxu0 0
        %5843 = vmatprep.subr.bf16.mxu0 0
        %5844 = vmatpush1.bf16.msra.mxu0 0
        %5845 = vmatprep.subr.bf16.mxu0 0
        %5846 = vmatpush1.bf16.msra.mxu0 0
        %5847 = vmatprep.subr.bf16.mxu0 0
        %5848 = vmatpush1.bf16.msra.mxu0 0
        %5849 = vmatprep.subr.bf16.mxu0 0
        %5850 = vmatpush1.bf16.msra.mxu0 0
        %5851 = vmatprep.subr.bf16.mxu0 0
        %5852 = vmatpush1.bf16.msra.mxu0 0
        %5853 = vmatprep.subr.bf16.mxu0 0
        %5854 = vmatpush1.bf16.msra.mxu0 0
        %5855 = vmatprep.mubr.bf16.mxu0 0
        %5856 = vmatmul.mubr.bf16.gmra.mrb[0].mxu0 %v5821
        %v5857 = vpop.f32.mrb[0].mxu0
        %v5858 = vadd.f32 %v5794, %v5857
        %v5859 = vpop.f32.mrb[0].mxu0
        %v5860 = vpop.f32.mrb[0].mxu0
        %v5861 = vpop.f32.mrb[0].mxu0
        %5862 = vdwg.mxu0
        %v5863 = vmax.f32 %v5858, 0.0
        %v5864 = vlaneseq
        %v5865 = vand.u32 %v5864, 127
        %vm5866 = vcmp.lt.s32.totalorder %v5865, 10
        %v5867 = vsel %vm5866, %v5863, -1e+30
        %5868 = vmax.xlane.f32.xlu0 %v5867
        %v5869 = vpop.xlane.xlu0 %5868
        %v5870 = vsub.f32 %v5867, %v5869
        %v5871 = vmul.f32 %v5870, 1.442695
        %v5872 = vpow.pop %v5871
        %5873 = vadd.xlane.f32.xlu0 %v5872
        %v5874 = vpop.xlane.xlu0 %5873
        %v5875 = vlog2.pop %v5874
        %v5876 = vmul.f32 %v5875, 0.6931472
        %v5877 = vsub.f32 %v5870, %v5876
        %5878 = vst [vmem:[%s463] sm:$0xff] %v5877
        %s5879 = sand.u32 %s335, 1
        %s5880 = scalar_lea.sflag [#allocation3], %s5879
        %s5881 = sand.u32 %s335, 1
        %s5882 = smul.addr %s5881, 8
        %s5883 = scalar_lea.vmem [#allocation2], %s5882
        // Predicated region
        $region77: #{net_forward.1} parent=75 // pred_check
          %p5884 = pneg %p345
        $region78: #{net_forward.1} parent=75 // pred_check_branch
          %5886 = sbr.rel (%p5884) target = $region80
        $region79: #{net_forward.1} parent=75 // pred_region
          %s5888 = ssub.s32 128, 128
          %5889 = vsyncadd %s5880, %s5888
          %s5890 = smul.addr %s28, 128
          %s5891 = scalar_lea.hbm %s14, %s5890
          %s5893 = sshll.u32 %s5883, 4
          %s5894 = int_to_ptr.vmem [resolvable:$true] %s5893
          %5896 = dma.vmem_to_hbm [thread:$0]  %s5894, 128, %s5891, %s5880
        $region80: #{net_forward.1} parent=75 // pred_fallthru
          _
      $region76: #{net_forward.1} parent=5 // pred_fallthru
        _
      %p5897 = scmp.le.s32.totalorder 2, %s23
      // Predicated region
      $region81: #{net_forward.1} parent=5 // pred_check
        %p5898 = pneg %p5897
      $region82: #{net_forward.1} parent=5 // pred_check_branch
        %5900 = sbr.rel (%p5898) target = $region84
      $region83: #{net_forward.1} parent=5 // pred_region
        %s5901 = ssub.s32 %s23, 2
        // Predicated region
        $region85: #{net_forward.1} parent=83 // pred_check
          %p5902 = pneg %p351
        $region86: #{net_forward.1} parent=83 // pred_check_branch
          %5904 = sbr.rel (%p5902) target = $region88
        $region87: #{net_forward.1} parent=83 // pred_region
          %s5905 = sand.u32 %s336, 1
          %s5906 = scalar_lea.sflag [#allocation3], %s5905
          %s5907 = sand.u32 %s336, 1
          %s5908 = smul.addr %s5907, 8
          %s5909 = scalar_lea.vmem [#allocation2], %s5908
          %5910 = dma.done %s5906, 128
        $region88: #{net_forward.1} parent=83 // pred_fallthru
          _
      $region84: #{net_forward.1} parent=5 // pred_fallthru
        _
    $region6: #{net_forward.1} parent=1 // loop_footer
      %s27 = sadd.s32 1, %s23
    $region7: #{net_forward.1} parent=1 // loop_footer_branch
      %22 = sbr.rel target = $region3
    $region8: #{net_forward.1} parent=1 // loop_exit
      _
    %5911 = vsyncpa [#allocation3], 1
    %s5912 = scalar_lea.sflag [#allocation3], 1
    %5913 = vsyncpa %s5912, 1

</llo_original>
